<compile_context>
chip_gen: v7x
topology: tpu7x:2x2x1
jax: 0.10.0
libtpu: 0.0.40
codegen_flags: <defaults>
</compile_context>

<pallas_src>
import jax
import jax.numpy as jnp
from jax.experimental import pallas as pl
from jax.experimental.pallas import tpu as pltpu


# ---------------------------------------------------------------------------
# Kernel body
# ---------------------------------------------------------------------------
def _make_kernel(tj, m1, num_hidden, compute_dtype):
    """One (target-block ji, batch-block ni) tile: tj targets x tn samples."""

    def kernel(xT_ref, w1T_ref, *rest):
        hid_refs = rest[: 2 * num_hidden]
        wf_ref = rest[-3]     # (tj, 1, q)     fused last-LC + fc3 weights
        bf_ref = rest[-2]     # (tj, 1, 1)     fused bias
        out_ref = rest[-1]    # (tj, 1, tn)

        tn = xT_ref.shape[-1]

        # fc1 (fc1_pos - fc1_neg) for all tj targets at once; the per-target
        # input-column mask and the bias (extra ones row) are folded into w1T:
        #   [tj*m1, d+1] @ [d+1, tn] -> [tj*m1, tn], f32 accumulation.
        h2 = jnp.dot(w1T_ref[...], xT_ref[...],
                     preferred_element_type=jnp.float32)

        # Hidden LocallyConnected layers: per-target batched MXU matmuls
        # against target-independent (block-diag over K) weights.
        q_in = m1
        for l in range(num_hidden):
            wl = hid_refs[2 * l][...]            # (tj, p, q_in) compute_dtype
            bl = hid_refs[2 * l + 1][...]        # (tj*p, 1)     float32
            p = wl.shape[1]
            a = jax.nn.sigmoid(h2).astype(compute_dtype).reshape(tj, q_in, tn)
            h3 = jnp.einsum("tpq,tqn->tpn", wl, a,
                            preferred_element_type=jnp.float32)
            h2 = h3.reshape(tj * p, tn) + bl
            q_in = p

        # Last LocallyConnected layer fused with fc3:
        #   out[t, n] = w_eff[t, :] . sigmoid(h[t, :, n]) + b_eff[t]
        a = jax.nn.sigmoid(h2).astype(compute_dtype).reshape(tj, q_in, tn)
        o = jnp.einsum("tpq,tqn->tpn", wf_ref[...], a,
                       preferred_element_type=jnp.float32)       # (tj, 1, tn)
        out_ref[...] = o + bf_ref[...]

    return kernel


# ---------------------------------------------------------------------------
# Tile / VMEM helpers
# ---------------------------------------------------------------------------
def _pad_up(v, m):
    return -(-int(v) // m) * m


def _block_vmem_bytes(shape, itemsize):
    shape = tuple(int(s) for s in shape)
    if len(shape) == 1:
        shape = (1,) + shape
    lead = 1
    for s in shape[:-2]:
        lead *= s
    return lead * _pad_up(shape[-2], 8) * _pad_up(shape[-1], 128) * itemsize


def _estimate_vmem(d, m1, tj, tn, hidden_pq, q_final, w_itemsize):
    tot = 0
    tot += 2 * _block_vmem_bytes((d + 1, tn), w_itemsize)        # x^T block
    tot += 2 * _block_vmem_bytes((tj * m1, d + 1), w_itemsize)   # fc1 weights
    for p, qi in hidden_pq:
        tot += 2 * _block_vmem_bytes((tj, p, qi), w_itemsize)    # LC weights
        tot += 2 * _block_vmem_bytes((tj * p, 1), 4)             # LC bias
    tot += 2 * _block_vmem_bytes((tj, 1, q_final), w_itemsize)   # fused weights
    tot += 2 * _block_vmem_bytes((tj, 1, 1), 4)                  # fused bias
    tot += 2 * _block_vmem_bytes((tj, 1, tn), 4)                 # output block
    widths = [m1] + [p for p, _ in hidden_pq] + [q_final]
    tot += 3 * tj * max(widths) * _pad_up(tn, 128) * 4           # live intermediates
    tot += 2 << 20                                               # slack
    return tot


def _tn_candidates(n, max_tn=2048):
    if n % 128 == 0:
        c = [t for t in range(128, min(n, max_tn) + 1, 128) if n % t == 0]
        if c:
            return sorted(c, reverse=True)
    return [n]


def _tj_candidates(d, m1, max_tj=128):
    c = [t for t in range(1, min(d, max_tj) + 1)
         if d % t == 0 and (t * m1) % 8 == 0]
    if not c:
        return [d]
    return sorted(c, reverse=True)


# ---------------------------------------------------------------------------
# Wrapper
# ---------------------------------------------------------------------------
def scalable_dag_forward(x, w1, b1, fc2_ws, fc2_bs, w3, dims, K, *,
                         tj=None, tn=None, use_bf16=True, grid_order=None):
    """Forward pass of ScalableDAG_v1.

    x:  [n, d] float32 input batch.
    w1: [d, m1, d]  combined per-target fc1 weights (fc1_pos - fc1_neg).
    b1: [d, m1]     combined per-target fc1 bias.
    fc2_ws[l]: [K, dims[l+1], dims[l+2]];  fc2_bs[l]: [K, dims[l+2]].
    w3: [d, K]      per-target fc3 weights (no bias).
    Returns [n, d] float32, matching the PyTorch module's forward().
    """
    f32 = jnp.float32
    cdtype = jnp.bfloat16 if use_bf16 else f32
    w_itemsize = 2 if use_bf16 else 4

    n, d = x.shape
    m1 = int(dims[1])
    num_fc2 = len(dims) - 2
    assert num_fc2 >= 1 and int(dims[-1]) == 1
    num_hidden = num_fc2 - 1

    # Per hidden LC layer: (p = K*m_out, q_in). Layer 0's input is the fc1
    # output broadcast over the K heads, so its contraction width is m1.
    hidden_pq = []
    q_in = m1
    for l in range(num_hidden):
        p = K * int(dims[l + 2])
        hidden_pq.append((p, q_in))
        q_in = p
    q_final = q_in                     # width entering the fused last LC + fc3

    # ------------------------------------------------------------- VMEM budget
    try:
        vmem_cap = int(pltpu.get_tpu_info().vmem_capacity_bytes)
    except Exception:
        vmem_cap = 64 * 1024 * 1024    # v7x-safe fallback
    vmem_limit = max(32 * 1024 * 1024,
                     min(vmem_cap, 128 * 1024 * 1024) - 8 * 1024 * 1024)
    budget = int(0.6 * vmem_limit)

    # ---------------------------------------------------------- tile selection
    tj_cands = [tj] if tj is not None else _tj_candidates(d, m1)
    tn_cands = [tn] if tn is not None else _tn_candidates(n)
    best = None
    for tj_c in tj_cands:
        for tn_c in tn_cands:
            est = _estimate_vmem(d, m1, tj_c, tn_c, hidden_pq, q_final, w_itemsize)
            cells = (n // tn_c) * (d // tj_c)
            fits = est <= budget
            score = (1 if fits else 0,
                     1 if (fits and cells >= 2) else 0,   # feed both v7x TCs
                     tj_c * tn_c if fits else -est)
            if best is None or score > best[0]:
                best = (score, tj_c, tn_c)
    _, tj, tn = best
    assert d % tj == 0 and n % tn == 0
    n_jb, n_nb = d // tj, n // tn

    # ------------------------------------------------------- parameter packing
    x = x.astype(f32)
    eye_mask = 1.0 - jnp.eye(d, dtype=f32)
    # Zeroing input column j of target j == zeroing fc1 weight column j.
    w1m = w1.astype(f32) * eye_mask[:, None, :]                       # [d, m1, d]
    # Fold the fc1 bias in as an extra ones input row.
    w1T = jnp.concatenate(
        [w1m.reshape(d * m1, d), b1.astype(f32).reshape(d * m1, 1)],
        axis=1).astype(cdtype)                                        # [d*m1, d+1]
    xT = jnp.concatenate(
        [x.T, jnp.ones((1, n), dtype=f32)], axis=0).astype(cdtype)    # [d+1, n]

    hid_args = []
    for l in range(num_hidden):
        p, qi = hidden_pq[l]
        w2 = fc2_ws[l].astype(f32)                                    # [K, m_in, m_out]
        b2 = fc2_bs[l].astype(f32)                                    # [K, m_out]
        w2t = jnp.transpose(w2, (0, 2, 1))                            # [K, m_out, m_in]
        if l == 0:
            a = w2t.reshape(p, qi)                                    # dense: input shared over K
        else:
            a = jnp.einsum("kpm,kl->kplm", w2t,
                           jnp.eye(K, dtype=f32)).reshape(p, qi)      # block-diag over K
        wl = jnp.tile(a[None], (tj, 1, 1)).astype(cdtype)             # [tj, p, qi]
        bl = jnp.tile(b2.reshape(-1), tj).reshape(tj * p, 1).astype(f32)
        hid_args += [wl, bl]

    # Fuse the last LocallyConnected layer (output width 1) with fc3.
    w3f = w3.astype(f32)                                              # [d, K]
    if num_fc2 >= 2:
        w_last = fc2_ws[-1].astype(f32)                               # [K, m_last, 1]
        b_last = fc2_bs[-1].astype(f32)                               # [K, 1]
        m_last = int(dims[-2])
        w_eff = (w3f[:, :, None] * w_last[None, :, :, 0]).reshape(d, K * m_last)
        b_eff = w3f @ b_last[:, 0]                                    # [d]
        assert q_final == K * m_last
    else:
        w0 = fc2_ws[0].astype(f32)                                    # [K, m1, 1]
        b0 = fc2_bs[0].astype(f32)                                    # [K, 1]
        w_eff = w3f @ w0[:, :, 0]                                     # [d, m1]
        b_eff = w3f @ b0[:, 0]
        assert q_final == m1
    wf_arr = w_eff.reshape(d, 1, q_final).astype(cdtype)
    bf_arr = b_eff.reshape(d, 1, 1).astype(f32)

    args = [xT, w1T] + hid_args + [wf_arr, bf_arr]

    # ------------------------------------------- grid-axis order by HBM traffic
    def _nbytes(a):
        return int(a.size) * a.dtype.itemsize

    w_stream = _nbytes(w1T) + _nbytes(wf_arr) + _nbytes(bf_arr)       # per-ji operands
    x_stream = _nbytes(xT)                                            # per-ni operand
    if grid_order is None:
        j_inner = (w_stream * n_nb + x_stream) <= (w_stream + x_stream * n_jb)
    else:
        assert grid_order in ("j_inner", "n_inner")
        j_inner = grid_order == "j_inner"

    if j_inner:
        grid = (n_nb, n_jb)
        split = lambda i0, i1: (i1, i0)        # -> (ji, ni)
    else:
        grid = (n_jb, n_nb)
        split = lambda i0, i1: (i0, i1)        # -> (ji, ni)

    im_x = lambda i0, i1: (0, split(i0, i1)[1])
    im_w1 = lambda i0, i1: (split(i0, i1)[0], 0)
    im_inv3 = lambda i0, i1: (0, 0, 0)
    im_inv2 = lambda i0, i1: (0, 0)
    im_wf = lambda i0, i1: (split(i0, i1)[0], 0, 0)
    im_bf = lambda i0, i1: (split(i0, i1)[0], 0, 0)
    im_out = lambda i0, i1: (split(i0, i1)[0], 0, split(i0, i1)[1])

    in_specs = [
        pl.BlockSpec((d + 1, tn), im_x),               # x^T (+ ones row)
        pl.BlockSpec((tj * m1, d + 1), im_w1),         # per-target fc1 weights (+bias col)
    ]
    for l in range(num_hidden):
        p, qi = hidden_pq[l]
        in_specs += [
            pl.BlockSpec((tj, p, qi), im_inv3),        # grid-invariant LC weights
            pl.BlockSpec((tj * p, 1), im_inv2),        # grid-invariant LC bias
        ]
    in_specs += [
        pl.BlockSpec((tj, 1, q_final), im_wf),         # fused last-LC + fc3 weights
        pl.BlockSpec((tj, 1, 1), im_bf),               # fused bias
    ]
    out_spec = pl.BlockSpec((tj, 1, tn), im_out)

    # ----------------------------------------------------- advisory cost hint
    flops = 2 * n * d * m1 * (d + 1)
    trans = n * d * m1
    for p, qi in hidden_pq:
        flops += 2 * n * d * p * qi
        trans += n * d * p
    flops += 2 * n * d * q_final
    bytes_accessed = sum(_nbytes(a) for a in args) + 4 * d * n

    kernel = _make_kernel(tj, m1, num_hidden, cdtype)
    out3 = pl.pallas_call(
        kernel,
        out_shape=jax.ShapeDtypeStruct((d, 1, n), f32),
        grid=grid,
        in_specs=in_specs,
        out_specs=out_spec,
        compiler_params=pltpu.CompilerParams(
            dimension_semantics=("parallel", "parallel"),
            vmem_limit_bytes=int(vmem_limit)),
        cost_estimate=pl.CostEstimate(flops=int(flops), transcendentals=int(trans),
                                      bytes_accessed=int(bytes_accessed)),
    )(*args)
    # TODO(synk): grid-invariant LC weights still get the default double buffer;
    # pipeline_mode=pl.Buffered(1) would reclaim that VMEM once validated.
    return out3.reshape(d, n).T                                       # [n, d]


# ---------------------------------------------------------------------------
# Pure-JAX reference (mirrors the PyTorch forward) for validation
# ---------------------------------------------------------------------------
def reference_forward(x, w1, b1, fc2_ws, fc2_bs, w3, dims, K):
    n, d = x.shape
    cols = []
    for j in range(d):
        x_phi = x.at[:, j].set(0.0)
        h = x_phi @ w1[j].T + b1[j]                                   # [n, m1]
        h = jnp.broadcast_to(h[:, None, :], (n, K, dims[1]))
        for l in range(len(dims) - 2):
            h = jax.nn.sigmoid(h)
            h = jnp.einsum("nkm,kmp->nkp", h, fc2_ws[l]) + fc2_bs[l][None]
        h = h[:, :, 0]                                                # [n, K]
        cols.append(h @ w3[j])                                        # [n]
    return jnp.stack(cols, axis=1)


if __name__ == "__main__":
    # Small shapes consistent with the module: d variables, dims=[d, m1, m2, 1], K heads.
    d = 16
    dims = [d, 16, 8, 1]
    K = 8
    n = 256

    key = jax.random.PRNGKey(0)
    ks = jax.random.split(key, 16)

    x = jax.random.normal(ks[0], (n, d), dtype=jnp.float32)

    m1 = dims[1]
    # fc1_pos / fc1_neg: per-target Linear(d -> m1). The forward masks input
    # column j, so we leave weight column j non-zero to test that masking.
    w_pos = jax.random.normal(ks[1], (d, m1, d), dtype=jnp.float32) * 0.3
    w_neg = jax.random.normal(ks[2], (d, m1, d), dtype=jnp.float32) * 0.3
    b_pos = jax.random.normal(ks[3], (d, m1), dtype=jnp.float32) * 0.1
    b_neg = jax.random.normal(ks[4], (d, m1), dtype=jnp.float32) * 0.1
    w1 = w_pos - w_neg                   # combined fc1 weight [d, m1, d]
    b1 = b_pos - b_neg                   # combined fc1 bias   [d, m1]

    # fc2: LocallyConnected(K, dims[l+1], dims[l+2]) with bias.
    fc2_ws, fc2_bs = [], []
    for l in range(len(dims) - 2):
        m_in, m_out = dims[l + 1], dims[l + 2]
        fc2_ws.append(jax.random.normal(ks[5 + 2 * l], (K, m_in, m_out), dtype=jnp.float32) * 0.3)
        fc2_bs.append(jax.random.normal(ks[6 + 2 * l], (K, m_out), dtype=jnp.float32) * 0.1)

    # fc3: per-target Linear(K -> 1, bias=False) stacked -> [d, K].
    w3 = jax.random.normal(ks[12], (d, K), dtype=jnp.float32) * 0.3

    out = scalable_dag_forward(x, w1, b1, fc2_ws, fc2_bs, w3, dims, K)
    out = jax.block_until_ready(out)

    ref = reference_forward(x, w1, b1, fc2_ws, fc2_bs, w3, dims, K)
    assert out.shape == (n, d) and out.dtype == jnp.float32
    err = float(jnp.max(jnp.abs(out - ref)))
    assert err < 5e-2, err               # bf16 MXU operands, f32 accumulation
    print("KERNEL_OK")
</pallas_src>

<mosaic_0001>
module attributes {stable_mosaic.version = 11 : i64} {
  func.func @kernel(%arg0: i32, %arg1: i32, %arg2: memref<17x128xbf16, #tpu.memory_space<vmem>>, %arg3: memref<256x17xbf16, #tpu.memory_space<vmem>>, %arg4: memref<16x64x16xbf16, #tpu.memory_space<vmem>>, %arg5: memref<1024x1xf32, #tpu.memory_space<vmem>>, %arg6: memref<16x1x64xbf16, #tpu.memory_space<vmem>>, %arg7: memref<16x1x1xf32, #tpu.memory_space<vmem>>, %arg8: memref<16x1x128xf32, #tpu.memory_space<vmem>>) attributes {dimension_semantics = [#tpu.dimension_semantics<parallel>, #tpu.dimension_semantics<parallel>], iteration_bounds = array<i64: 1, 2>, scalar_prefetch = 0 : i64, scratch_operands = 0 : i64, tpu.core_type = #tpu.core_type<tc>, window_params = [{transform_indices = @transform_0, window_bounds = array<i64: 17, 128>}, {transform_indices = @transform_1, window_bounds = array<i64: 256, 17>}, {pipeline_mode = #tpu.pipeline_mode<synchronous>, transform_indices = @transform_2, window_bounds = array<i64: 16, 64, 16>}, {pipeline_mode = #tpu.pipeline_mode<synchronous>, transform_indices = @transform_3, window_bounds = array<i64: 1024, 1>}, {transform_indices = @transform_4, window_bounds = array<i64: 16, 1, 64>}, {transform_indices = @transform_5, window_bounds = array<i64: 16, 1, 1>}, {transform_indices = @transform_6, window_bounds = array<i64: 16, 1, 128>}]} {
    %c0 = arith.constant 0 : index
    %c0_0 = arith.constant 0 : index
    %0 = vector.load %arg3[%c0, %c0_0] : memref<256x17xbf16, #tpu.memory_space<vmem>>, vector<256x17xbf16>
    %c0_1 = arith.constant 0 : index
    %c0_2 = arith.constant 0 : index
    %1 = vector.load %arg2[%c0_1, %c0_2] : memref<17x128xbf16, #tpu.memory_space<vmem>>, vector<17x128xbf16>
    %cst = arith.constant dense<0.000000e+00> : vector<256x128xf32>
    %2 = tpu.matmul %0, %1, %cst {dimension_numbers = #tpu.dot_dimension_numbers<[1], [0], [0], [1], [0, 0, 1, 1], [], []>} : vector<256x17xbf16>, vector<17x128xbf16>, vector<256x128xf32> -> vector<256x128xf32>
    %c0_3 = arith.constant 0 : index
    %c0_4 = arith.constant 0 : index
    %c0_5 = arith.constant 0 : index
    %3 = vector.load %arg4[%c0_3, %c0_4, %c0_5] : memref<16x64x16xbf16, #tpu.memory_space<vmem>>, vector<16x64x16xbf16>
    %c0_6 = arith.constant 0 : index
    %c0_7 = arith.constant 0 : index
    %4 = vector.load %arg5[%c0_6, %c0_7] : memref<1024x1xf32, #tpu.memory_space<vmem>>, vector<1024x1xf32>
    %5 = arith.negf %2 : vector<256x128xf32>
    %6 = math.exp %5 : vector<256x128xf32>
    %cst_8 = arith.constant 1.000000e+00 : f32
    %7 = vector.broadcast %cst_8 : f32 to vector<256x128xf32>
    %8 = arith.addf %7, %6 : vector<256x128xf32>
    %9 = arith.divf %7, %8 : vector<256x128xf32>
    %10 = arith.truncf %9 : vector<256x128xf32> to vector<256x128xbf16>
    %11 = vector.shape_cast %10 : vector<256x128xbf16> to vector<16x16x128xbf16>
    "tpu.trace_start"() <{level = 10 : i32, message = "tpq,tqn->tpn"}> : () -> ()
    %cst_9 = arith.constant dense<0.000000e+00> : vector<16x64x128xf32>
    %12 = tpu.matmul %3, %11, %cst_9 {dimension_numbers = #tpu.dot_dimension_numbers<[2], [1], [1], [2], [0, 0, 0, 1, 1, 2], [0], [0]>} : vector<16x64x16xbf16>, vector<16x16x128xbf16>, vector<16x64x128xf32> -> vector<16x64x128xf32>
    "tpu.trace_stop"() : () -> ()
    %13 = vector.shape_cast %12 : vector<16x64x128xf32> to vector<1024x128xf32>
    %14 = vector.broadcast %4 : vector<1024x1xf32> to vector<1024x128xf32>
    %15 = arith.addf %13, %14 : vector<1024x128xf32>
    %16 = arith.negf %15 : vector<1024x128xf32>
    %17 = math.exp %16 : vector<1024x128xf32>
    %cst_10 = arith.constant 1.000000e+00 : f32
    %18 = vector.broadcast %cst_10 : f32 to vector<1024x128xf32>
    %19 = arith.addf %18, %17 : vector<1024x128xf32>
    %20 = arith.divf %18, %19 : vector<1024x128xf32>
    %21 = arith.truncf %20 : vector<1024x128xf32> to vector<1024x128xbf16>
    %22 = vector.shape_cast %21 : vector<1024x128xbf16> to vector<16x64x128xbf16>
    %c0_11 = arith.constant 0 : index
    %c0_12 = arith.constant 0 : index
    %c0_13 = arith.constant 0 : index
    %23 = vector.load %arg6[%c0_11, %c0_12, %c0_13] : memref<16x1x64xbf16, #tpu.memory_space<vmem>>, vector<16x1x64xbf16>
    "tpu.trace_start"() <{level = 10 : i32, message = "tpq,tqn->tpn"}> : () -> ()
    %cst_14 = arith.constant dense<0.000000e+00> : vector<16x1x128xf32>
    %24 = tpu.matmul %23, %22, %cst_14 {dimension_numbers = #tpu.dot_dimension_numbers<[2], [1], [1], [2], [0, 0, 0, 1, 1, 2], [0], [0]>} : vector<16x1x64xbf16>, vector<16x64x128xbf16>, vector<16x1x128xf32> -> vector<16x1x128xf32>
    "tpu.trace_stop"() : () -> ()
    %c0_15 = arith.constant 0 : index
    %c0_16 = arith.constant 0 : index
    %c0_17 = arith.constant 0 : index
    %25 = vector.load %arg7[%c0_15, %c0_16, %c0_17] : memref<16x1x1xf32, #tpu.memory_space<vmem>>, vector<16x1x1xf32>
    %26 = vector.broadcast %25 : vector<16x1x1xf32> to vector<16x1x128xf32>
    %27 = arith.addf %24, %26 : vector<16x1x128xf32>
    %c0_18 = arith.constant 0 : index
    %c0_19 = arith.constant 0 : index
    %c0_20 = arith.constant 0 : index
    %28 = vector.load %arg8[%c0_18, %c0_19, %c0_20] : memref<16x1x128xf32, #tpu.memory_space<vmem>>, vector<16x1x128xf32>
    tpu.vector_store %arg8[%c0_18, %c0_19, %c0_20], %27 {strides = array<i32>} : memref<16x1x128xf32, #tpu.memory_space<vmem>>, vector<16x1x128xf32>,
    return
  }
  func.func @transform_0(%arg0: i32, %arg1: i32) -> (i32, i32) {
    %c0_i32 = arith.constant 0 : i32
    %c0_i32_0 = arith.constant 0 : i32
    return %c0_i32, %arg1 : i32, i32
  }
  func.func @transform_1(%arg0: i32, %arg1: i32) -> (i32, i32) {
    %c0_i32 = arith.constant 0 : i32
    %c0_i32_0 = arith.constant 0 : i32
    return %arg0, %c0_i32 : i32, i32
  }
  func.func @transform_2(%arg0: i32, %arg1: i32) -> (i32, i32, i32) {
    %c0_i32 = arith.constant 0 : i32
    %c0_i32_0 = arith.constant 0 : i32
    %c0_i32_1 = arith.constant 0 : i32
    %c0_i32_2 = arith.constant 0 : i32
    return %c0_i32, %c0_i32_0, %c0_i32_1 : i32, i32, i32
  }
  func.func @transform_3(%arg0: i32, %arg1: i32) -> (i32, i32) {
    %c0_i32 = arith.constant 0 : i32
    %c0_i32_0 = arith.constant 0 : i32
    %c0_i32_1 = arith.constant 0 : i32
    return %c0_i32, %c0_i32_0 : i32, i32
  }
  func.func @transform_4(%arg0: i32, %arg1: i32) -> (i32, i32, i32) {
    %c0_i32 = arith.constant 0 : i32
    %c0_i32_0 = arith.constant 0 : i32
    %c0_i32_1 = arith.constant 0 : i32
    return %arg0, %c0_i32, %c0_i32_0 : i32, i32, i32
  }
  func.func @transform_5(%arg0: i32, %arg1: i32) -> (i32, i32, i32) {
    %c0_i32 = arith.constant 0 : i32
    %c0_i32_0 = arith.constant 0 : i32
    %c0_i32_1 = arith.constant 0 : i32
    return %arg0, %c0_i32, %c0_i32_0 : i32, i32, i32
  }
  func.func @transform_6(%arg0: i32, %arg1: i32) -> (i32, i32, i32) {
    %c0_i32 = arith.constant 0 : i32
    %c0_i32_0 = arith.constant 0 : i32
    return %arg0, %c0_i32, %arg1 : i32, i32, i32
  }
}

</mosaic_0001>

<llo_original>
// kernel: tpu_custom_call.1
$region0: #{tpu_custom_call.1}
  #allocation0 [shape = 'u32[]', space=smem, size = 0x4, offset = 0x4, fixed_abs, tag = 'smem constant byte address 0x4 - core index']
  #allocation1 [shape = 'u32[144,128]{1,0:T(1,128)}', space=vmem, size = 0x12000, scoped, tag = 'internal scratch']
  %s0 = inlined_call_operand.vmem [shape: bf16[17,256], index: 0, kind: input, shape index: {}]
  %s1 = inlined_call_operand.vmem [shape: bf16[256,17], index: 1, kind: input, shape index: {}]
  %s2 = inlined_call_operand.vmem [shape: bf16[16,64,16], index: 2, kind: input, shape index: {}]
  %s3 = inlined_call_operand.vmem [shape: f32[1024,1], index: 3, kind: input, shape index: {}]
  %s4 = inlined_call_operand.vmem [shape: bf16[16,1,64], index: 4, kind: input, shape index: {}]
  %s5 = inlined_call_operand.vmem [shape: f32[16,1,1], index: 5, kind: input, shape index: {}]
  %s6 = inlined_call_operand.hbm [shape: f32[16,1,256], index: 6, kind: output, shape index: {}]
  %s7 = sld [smem:[#allocation0]]
  $region98: #{tpu_custom_call.1} parent=0
    _
  %s9 = ssub.s32 1, %s7
  %s10 = scalar_select 0, %s9, %s7
  $region1: #{tpu_custom_call.1} parent=0
    #allocation2 [shape = 'u8[12288]{0}', space=vmem, size = 0x3000, scoped, tag = 'input window, operand 0']
    #allocation3 [shape = 'u8[16384]{0}', space=vmem, size = 0x4000, scoped, tag = 'output window, operand 0']
    #allocation4 [shape = 's32[2]{0}', space=sflag, size = 0x8, scoped, tag = 'scoped memory for tpu_custom_call.1']
    %11 = vsyncpa [#allocation4], 0
    %s12 = scalar_lea.sflag [#allocation4], 1
    %13 = vsyncpa %s12, 0
    loop: start=0, step=1, limit=4
    $region2: #{tpu_custom_call.1} parent=1 // loop_pre_header
      _
    $region3: #{tpu_custom_call.1} parent=1 // loop_header
      %s15 = sphi 0, %s19
      %p16 = scmp.ge.s32.totalorder %s15, 4
      %s22 = sphi 0, %s34
      %s23 = sphi 0, %s30
      %s24 = sphi 0, %s22
      %s25 = sphi 0, %s23
      %s26 = sphi 0, %s24
      %s27 = sphi 0, %s25
      %s37 = sphi 0, %s39
      %s40 = sphi 0, %s37
      %s41 = sphi 0, %s40
      %s57 = sphi 0, %s41
      %s63 = sphi 0, %s65
      %s66 = sphi 0, %s63
      %s67 = sphi 0, %s66
      %s83 = sphi 0, %s67
      %s87 = sphi 0, %s87
      %s89 = sphi 0, %s87
      %s90 = sphi 0, %s89
      %s104 = sphi 0, %s90
      %s108 = sphi 0, %s108
      %s110 = sphi 0, %s108
      %s111 = sphi 0, %s110
      %s125 = sphi 0, %s111
      %s131 = sphi 0, %s133
      %s134 = sphi 0, %s131
      %s135 = sphi 0, %s134
      %s151 = sphi 0, %s135
      %s157 = sphi 0, %s159
      %s160 = sphi 0, %s157
      %s161 = sphi 0, %s160
      %s177 = sphi 0, %s161
      %s185 = sphi 0, %s187
      %s188 = sphi 0, %s185
      %s189 = sphi 0, %s188
      %s205 = sphi 0, %s189
    $region4: #{tpu_custom_call.1} parent=1 // loop_header_branch
      %18 = sbr.rel (%p16) target = $region8
    $region5: #{tpu_custom_call.1} parent=1 // loop_body
      %s20 = ssub.s32 %s15, 1
      %s21 = ssub.s32 %s15, 2
      %s28 = sadd.s32 1, %s23
      %p29 = scmp.ge.s32.totalorder %s28, 2
      %s30 = scalar_select %p29, 0, %s28
      %s31 = sadd.s32 1, %s22
      %s32 = scalar_select %p29, %s31, %s22
      %p33 = scmp.ge.s32.totalorder %s32, 1
      %s34 = scalar_select %p33, 0, %s32
      %s35 = ssub.s32 %s23, %s30
      %p36 = scmp.eq.s32.totalorder %s35, 0
      %s38 = sadd.s32 %s37, 1
      %s39 = scalar_select %p36, %s37, %s38
      %p42 = pneg %p36
      %p43 = scmp.eq.s32.totalorder %s15, 1
      %p44 = por %p42, %p43
      %p45 = scmp.ne.s32.totalorder %s37, %s40
      %p46 = scmp.eq.s32.totalorder %s15, 0
      %p47 = por %p45, %p46
      %p48 = scmp.ne.s32.totalorder %s37, %s40
      %p49 = scmp.eq.s32.totalorder %s20, 1
      %p50 = por %p48, %p49
      %p51 = scmp.ne.s32.totalorder %s40, %s41
      %p52 = scmp.eq.s32.totalorder %s20, 0
      %p53 = por %p51, %p52
      %p54 = scmp.ne.s32.totalorder %s40, %s41
      %p55 = scmp.eq.s32.totalorder %s21, 1
      %p56 = por %p54, %p55
      %p58 = scmp.ne.s32.totalorder %s41, %s57
      %p59 = scmp.eq.s32.totalorder %s21, 0
      %p60 = por %p58, %p59
      %s61 = ssub.s32 %s22, %s34
      %p62 = scmp.eq.s32.totalorder %s61, 0
      %s64 = sadd.s32 %s63, 1
      %s65 = scalar_select %p62, %s63, %s64
      %p68 = pneg %p62
      %p69 = scmp.eq.s32.totalorder %s15, 1
      %p70 = por %p68, %p69
      %p71 = scmp.ne.s32.totalorder %s63, %s66
      %p72 = scmp.eq.s32.totalorder %s15, 0
      %p73 = por %p71, %p72
      %p74 = scmp.ne.s32.totalorder %s63, %s66
      %p75 = scmp.eq.s32.totalorder %s20, 1
      %p76 = por %p74, %p75
      %p77 = scmp.ne.s32.totalorder %s66, %s67
      %p78 = scmp.eq.s32.totalorder %s20, 0
      %p79 = por %p77, %p78
      %p80 = scmp.ne.s32.totalorder %s66, %s67
      %p81 = scmp.eq.s32.totalorder %s21, 1
      %p82 = por %p80, %p81
      %p84 = scmp.ne.s32.totalorder %s67, %s83
      %p85 = scmp.eq.s32.totalorder %s21, 0
      %p86 = por %p84, %p85
      %s88 = sadd.s32 %s87, 1
      %p91 = scmp.eq.s32.totalorder %s15, 1
      %p92 = scmp.ne.s32.totalorder %s87, %s89
      %p93 = scmp.eq.s32.totalorder %s15, 0
      %p94 = por %p92, %p93
      %p95 = scmp.ne.s32.totalorder %s87, %s89
      %p96 = scmp.eq.s32.totalorder %s20, 1
      %p97 = por %p95, %p96
      %p98 = scmp.ne.s32.totalorder %s89, %s90
      %p99 = scmp.eq.s32.totalorder %s20, 0
      %p100 = por %p98, %p99
      %p101 = scmp.ne.s32.totalorder %s89, %s90
      %p102 = scmp.eq.s32.totalorder %s21, 1
      %p103 = por %p101, %p102
      %p105 = scmp.ne.s32.totalorder %s90, %s104
      %p106 = scmp.eq.s32.totalorder %s21, 0
      %p107 = por %p105, %p106
      %s109 = sadd.s32 %s108, 1
      %p112 = scmp.eq.s32.totalorder %s15, 1
      %p113 = scmp.ne.s32.totalorder %s108, %s110
      %p114 = scmp.eq.s32.totalorder %s15, 0
      %p115 = por %p113, %p114
      %p116 = scmp.ne.s32.totalorder %s108, %s110
      %p117 = scmp.eq.s32.totalorder %s20, 1
      %p118 = por %p116, %p117
      %p119 = scmp.ne.s32.totalorder %s110, %s111
      %p120 = scmp.eq.s32.totalorder %s20, 0
      %p121 = por %p119, %p120
      %p122 = scmp.ne.s32.totalorder %s110, %s111
      %p123 = scmp.eq.s32.totalorder %s21, 1
      %p124 = por %p122, %p123
      %p126 = scmp.ne.s32.totalorder %s111, %s125
      %p127 = scmp.eq.s32.totalorder %s21, 0
      %p128 = por %p126, %p127
      %s129 = ssub.s32 %s22, %s34
      %p130 = scmp.eq.s32.totalorder %s129, 0
      %s132 = sadd.s32 %s131, 1
      %s133 = scalar_select %p130, %s131, %s132
      %p136 = pneg %p130
      %p137 = scmp.eq.s32.totalorder %s15, 1
      %p138 = por %p136, %p137
      %p139 = scmp.ne.s32.totalorder %s131, %s134
      %p140 = scmp.eq.s32.totalorder %s15, 0
      %p141 = por %p139, %p140
      %p142 = scmp.ne.s32.totalorder %s131, %s134
      %p143 = scmp.eq.s32.totalorder %s20, 1
      %p144 = por %p142, %p143
      %p145 = scmp.ne.s32.totalorder %s134, %s135
      %p146 = scmp.eq.s32.totalorder %s20, 0
      %p147 = por %p145, %p146
      %p148 = scmp.ne.s32.totalorder %s134, %s135
      %p149 = scmp.eq.s32.totalorder %s21, 1
      %p150 = por %p148, %p149
      %p152 = scmp.ne.s32.totalorder %s135, %s151
      %p153 = scmp.eq.s32.totalorder %s21, 0
      %p154 = por %p152, %p153
      %s155 = ssub.s32 %s22, %s34
      %p156 = scmp.eq.s32.totalorder %s155, 0
      %s158 = sadd.s32 %s157, 1
      %s159 = scalar_select %p156, %s157, %s158
      %p162 = pneg %p156
      %p163 = scmp.eq.s32.totalorder %s15, 1
      %p164 = por %p162, %p163
      %p165 = scmp.ne.s32.totalorder %s157, %s160
      %p166 = scmp.eq.s32.totalorder %s15, 0
      %p167 = por %p165, %p166
      %p168 = scmp.ne.s32.totalorder %s157, %s160
      %p169 = scmp.eq.s32.totalorder %s20, 1
      %p170 = por %p168, %p169
      %p171 = scmp.ne.s32.totalorder %s160, %s161
      %p172 = scmp.eq.s32.totalorder %s20, 0
      %p173 = por %p171, %p172
      %p174 = scmp.ne.s32.totalorder %s160, %s161
      %p175 = scmp.eq.s32.totalorder %s21, 1
      %p176 = por %p174, %p175
      %p178 = scmp.ne.s32.totalorder %s161, %s177
      %p179 = scmp.eq.s32.totalorder %s21, 0
      %p180 = por %p178, %p179
      %s181 = ssub.s32 %s22, %s34
      %s182 = ssub.s32 %s23, %s30
      %s183 = sor.u32 %s181, %s182
      %p184 = scmp.eq.s32.totalorder %s183, 0
      %s186 = sadd.s32 %s185, 1
      %s187 = scalar_select %p184, %s185, %s186
      %p190 = pneg %p184
      %p191 = scmp.eq.s32.totalorder %s15, 1
      %p192 = por %p190, %p191
      %p193 = scmp.ne.s32.totalorder %s185, %s188
      %p194 = scmp.eq.s32.totalorder %s15, 0
      %p195 = por %p193, %p194
      %p196 = scmp.ne.s32.totalorder %s185, %s188
      %p197 = scmp.eq.s32.totalorder %s20, 1
      %p198 = por %p196, %p197
      %p199 = scmp.ne.s32.totalorder %s188, %s189
      %p200 = scmp.eq.s32.totalorder %s20, 0
      %p201 = por %p199, %p200
      %p202 = scmp.ne.s32.totalorder %s188, %s189
      %p203 = scmp.eq.s32.totalorder %s21, 1
      %p204 = por %p202, %p203
      %p206 = scmp.ne.s32.totalorder %s189, %s205
      %p207 = scmp.eq.s32.totalorder %s21, 0
      %p208 = por %p206, %p207
      %p209 = scmp.le.s32.totalorder 1, %s15
      %p210 = scmp.lt.s32.totalorder %s15, 3
      %p211 = pnand %p209, %p210
      %p212 = pneg %p211
      // Predicated region
      $region9: #{tpu_custom_call.1} parent=5 // pred_check
        _
      $region10: #{tpu_custom_call.1} parent=5 // pred_check_branch
        %214 = sbr.rel (%p211) target = $region12
      $region11: #{tpu_custom_call.1} parent=5 // pred_region
        %s215 = ssub.s32 %s15, 1
        // Predicated region
        $region13: #{tpu_custom_call.1} parent=11 // pred_check
          %p216 = pneg %p79
        $region14: #{tpu_custom_call.1} parent=11 // pred_check_branch
          %218 = sbr.rel (%p216) target = $region16
        $region15: #{tpu_custom_call.1} parent=11 // pred_region
          %s219 = smul.u32 32, %s24
          %p220 = scmp.lt.s32.totalorder %s219, 31
          %s221 = scalar_select %p220, %s219, 31
          %s222 = smul.addr %s221, 4
          %s223 = scalar_lea.vmem %s1, %s222
          %s224 = smul.u32 32, %s24
        $region16: #{tpu_custom_call.1} parent=11 // pred_fallthru
          _
        // Predicated region
        $region17: #{tpu_custom_call.1} parent=11 // pred_check
          %p225 = pneg %p100
        $region18: #{tpu_custom_call.1} parent=11 // pred_check_branch
          %227 = sbr.rel (%p225) target = $region20
        $region19: #{tpu_custom_call.1} parent=11 // pred_region
          _
        $region20: #{tpu_custom_call.1} parent=11 // pred_fallthru
          _
        // Predicated region
        $region21: #{tpu_custom_call.1} parent=11 // pred_check
          %p228 = pneg %p121
        $region22: #{tpu_custom_call.1} parent=11 // pred_check_branch
          %230 = sbr.rel (%p228) target = $region24
        $region23: #{tpu_custom_call.1} parent=11 // pred_region
          _
        $region24: #{tpu_custom_call.1} parent=11 // pred_fallthru
          _
        // Predicated region
        $region25: #{tpu_custom_call.1} parent=11 // pred_check
          %p231 = pneg %p147
        $region26: #{tpu_custom_call.1} parent=11 // pred_check_branch
          %233 = sbr.rel (%p231) target = $region28
        $region27: #{tpu_custom_call.1} parent=11 // pred_region
          %s234 = smul.u32 16, %s24
          %p235 = scmp.lt.s32.totalorder %s234, 15
          %s236 = scalar_select %p235, %s234, 15
          %s237 = scalar_lea.vmem %s4, %s236
          %s238 = smul.u32 16, %s24
        $region28: #{tpu_custom_call.1} parent=11 // pred_fallthru
          _
        // Predicated region
        $region29: #{tpu_custom_call.1} parent=11 // pred_check
          %p239 = pneg %p173
        $region30: #{tpu_custom_call.1} parent=11 // pred_check_branch
          %241 = sbr.rel (%p239) target = $region32
        $region31: #{tpu_custom_call.1} parent=11 // pred_region
          %s242 = smul.u32 16, %s24
          %p243 = scmp.lt.s32.totalorder %s242, 15
          %s244 = scalar_select %p243, %s242, 15
          %s245 = scalar_lea.vmem %s5, %s244
          %s246 = smul.u32 16, %s24
        $region32: #{tpu_custom_call.1} parent=11 // pred_fallthru
          _
      $region12: #{tpu_custom_call.1} parent=5 // pred_fallthru
        _
      %p247 = scmp.lt.s32.totalorder %s15, 2
      // Predicated region
      $region33: #{tpu_custom_call.1} parent=5 // pred_check
        %p248 = pneg %p247
      $region34: #{tpu_custom_call.1} parent=5 // pred_check_branch
        %250 = sbr.rel (%p248) target = $region36
      $region35: #{tpu_custom_call.1} parent=5 // pred_region
        // Predicated region
        $region37: #{tpu_custom_call.1} parent=35 // pred_check
          %p251 = pneg %p47
        $region38: #{tpu_custom_call.1} parent=35 // pred_check_branch
          %253 = sbr.rel (%p251) target = $region40
        $region39: #{tpu_custom_call.1} parent=35 // pred_region
          %s254 = sand.u32 %s37, 1
          %s255 = sand.u32 %s37, 1
          %s256 = smul.addr %s255, 12
          %s257 = scalar_lea.vmem [#allocation2], %s256
          %s258 = smul.addr %s23, 4
          %s259 = scalar_lea.vmem %s0, %s258
          // Predicated region
          $region41: #{tpu_custom_call.1} parent=39 // pred_check
            _
          $region42: #{tpu_custom_call.1} parent=39 // pred_check_branch
            %261 = sbr.rel (0) target = $region44
          $region43: #{tpu_custom_call.1} parent=39 // pred_region
            // Predicated region
            $region45: #{tpu_custom_call.1} parent=43 // pred_check
              _
            $region46: #{tpu_custom_call.1} parent=43 // pred_check_branch
              %263 = sbr.rel target = $region48
            $region47: #{tpu_custom_call.1} parent=43 // pred_region
              // Predicated region
              $region60: #{tpu_custom_call.1} parent=47 // pred_check
                _
              $region61: #{tpu_custom_call.1} parent=47 // pred_check_branch
                %282 = sbr.rel (0) target = $region63
              $region62: #{tpu_custom_call.1} parent=47 // pred_region
                loop: start=0, step=1, limit=1
                $region64: #{tpu_custom_call.1} parent=62 // loop_pre_header
                  _
                $region65: #{tpu_custom_call.1} parent=62 // loop_header
                  %s284 = sphi 0, %s288
                  %p285 = scmp.ge.s32.totalorder %s284, 1
                  %s289 = sphi %s259, %s259
                  %s290 = sphi %s257, %s257
                $region66: #{tpu_custom_call.1} parent=62 // loop_header_branch
                  %287 = sbr.rel (%p285) target = $region70
                $region67: #{tpu_custom_call.1} parent=62 // loop_body
                  _
                $region68: #{tpu_custom_call.1} parent=62 // loop_footer
                  %s288 = sadd.s32 1, %s284
                $region69: #{tpu_custom_call.1} parent=62 // loop_footer_branch
                  %283 = sbr.rel target = $region65
                $region70: #{tpu_custom_call.1} parent=62 // loop_exit
                  _
                loop: start=0, step=1, limit=1
                $region71: #{tpu_custom_call.1} parent=62 // loop_pre_header
                  _
                $region72: #{tpu_custom_call.1} parent=62 // loop_header
                  %s293 = sphi 0, %s297
                  %p294 = scmp.ge.s32.totalorder %s293, 1
                  %s298 = sphi %s259, %s259
                  %s299 = sphi %s257, %s257
                $region73: #{tpu_custom_call.1} parent=62 // loop_header_branch
                  %296 = sbr.rel (%p294) target = $region77
                $region74: #{tpu_custom_call.1} parent=62 // loop_body
                  %v300 = vld [vmem:[%s298] sm:$0xf]
                  %301 = vst [vmem:[%s299] sm:$0xf] %v300
                  %v302 = vld [vmem:[%s298 + $0x8] sm:$0xf]
                  %303 = vst [vmem:[%s299 + $0x4] sm:$0xf] %v302
                  %v304 = vld [vmem:[%s298 + $0x10] sm:$0xf]
                  %305 = vst [vmem:[%s299 + $0x8] sm:$0xf] %v304
                $region75: #{tpu_custom_call.1} parent=62 // loop_footer
                  %s297 = sadd.s32 1, %s293
                $region76: #{tpu_custom_call.1} parent=62 // loop_footer_branch
                  %292 = sbr.rel target = $region72
                $region77: #{tpu_custom_call.1} parent=62 // loop_exit
                  _
              $region63: #{tpu_custom_call.1} parent=47 // pred_fallthru
                _
            $region48: #{tpu_custom_call.1} parent=43 // pred_fallthru
              _
            // Predicated region
            $region49: #{tpu_custom_call.1} parent=43 // pred_check
              _
            $region50: #{tpu_custom_call.1} parent=43 // pred_check_branch
              %265 = sbr.rel (0) target = $region52
            $region51: #{tpu_custom_call.1} parent=43 // pred_region
              loop: start=0, step=1, limit=1
              $region53: #{tpu_custom_call.1} parent=51 // loop_pre_header
                _
              $region54: #{tpu_custom_call.1} parent=51 // loop_header
                %s268 = sphi 0, %s272
                %p269 = scmp.ge.s32.totalorder %s268, 1
                %s273 = sphi %s259, %s259
                %s274 = sphi %s257, %s257
              $region55: #{tpu_custom_call.1} parent=51 // loop_header_branch
                %271 = sbr.rel (%p269) target = $region59
              $region56: #{tpu_custom_call.1} parent=51 // loop_body
                %v275 = vld [vmem:[%s273] sm:$0xf]
                %276 = vst [vmem:[%s274] sm:$0xf] %v275
                %v277 = vld [vmem:[%s273 + $0x8] sm:$0xf]
                %278 = vst [vmem:[%s274 + $0x4] sm:$0xf] %v277
                %v279 = vld [vmem:[%s273 + $0x10] sm:$0xf]
                %280 = vst [vmem:[%s274 + $0x8] sm:$0xf] %v279
              $region57: #{tpu_custom_call.1} parent=51 // loop_footer
                %s272 = sadd.s32 1, %s268
              $region58: #{tpu_custom_call.1} parent=51 // loop_footer_branch
                %267 = sbr.rel target = $region54
              $region59: #{tpu_custom_call.1} parent=51 // loop_exit
                _
            $region52: #{tpu_custom_call.1} parent=43 // pred_fallthru
              _
          $region44: #{tpu_custom_call.1} parent=39 // pred_fallthru
            _
          %306 = vnop
        $region40: #{tpu_custom_call.1} parent=35 // pred_fallthru
          _
      $region36: #{tpu_custom_call.1} parent=5 // pred_fallthru
        _
      %p307 = scmp.le.s32.totalorder 1, %s15
      %p308 = scmp.lt.s32.totalorder %s15, 3
      %p309 = pnand %p307, %p308
      %p310 = pneg %p309
      // Predicated region
      $region78: #{tpu_custom_call.1} parent=5 // pred_check
        _
      $region79: #{tpu_custom_call.1} parent=5 // pred_check_branch
        %312 = sbr.rel (%p309) target = $region81
      $region80: #{tpu_custom_call.1} parent=5 // pred_region
        %s313 = ssub.s32 %s15, 1
        %s314 = sand.u32 %s40, 1
        %s315 = sand.u32 %s40, 1
        %s316 = smul.addr %s315, 12
        %s317 = scalar_lea.vmem [#allocation2], %s316
        // Predicated region
        $region82: #{tpu_custom_call.1} parent=80 // pred_check
          %p318 = pneg %p53
        $region83: #{tpu_custom_call.1} parent=80 // pred_check_branch
          %320 = sbr.rel (%p318) target = $region85
        $region84: #{tpu_custom_call.1} parent=80 // pred_region
          _
        $region85: #{tpu_custom_call.1} parent=80 // pred_fallthru
          _
        %s321 = sand.u32 %s40, 1
        %s322 = sand.u32 %s40, 1
        %s323 = smul.addr %s322, 12
        %s324 = scalar_lea.vmem [#allocation2], %s323
        %p325 = pneg %p53
        %p326 = pneg %p50
        %s327 = smul.u32 32, %s24
        %p328 = scmp.lt.s32.totalorder %s327, 31
        %s329 = scalar_select %p328, %s327, 31
        %s330 = smul.addr %s329, 4
        %s331 = scalar_lea.vmem %s1, %s330
        %p332 = pneg %p79
        %p333 = pneg %p76
        %p334 = pneg %p100
        %p335 = pneg %p97
        %p336 = pneg %p121
        %p337 = pneg %p118
        %s338 = smul.u32 16, %s24
        %p339 = scmp.lt.s32.totalorder %s338, 15
        %s340 = scalar_select %p339, %s338, 15
        %s341 = scalar_lea.vmem %s4, %s340
        %p342 = pneg %p147
        %p343 = pneg %p144
        %s344 = smul.u32 16, %s24
        %p345 = scmp.lt.s32.totalorder %s344, 15
        %s346 = scalar_select %p345, %s344, 15
        %s347 = scalar_lea.vmem %s5, %s346
        %p348 = pneg %p173
        %p349 = pneg %p170
        %p350 = pneg %p201
        %p351 = pneg %p198
        %s352 = sand.u32 %s188, 1
        %s353 = scalar_lea.sflag [#allocation4], %s352
        %s354 = sand.u32 %s188, 1
        %s355 = smul.addr %s354, 16
        %s356 = scalar_lea.vmem [#allocation3], %s355
        %s357 = smul.u32 32, %s24
        %p358 = scmp.lt.s32.totalorder %s357, 31
        %s359 = scalar_select %p358, %s357, 31
        %s360 = smul.addr %s359, 4
        %s361 = scalar_lea.vmem %s1, %s360
        %s362 = smul.u32 32, %s24
        %s363 = smul.u32 16, %s24
        %p364 = scmp.lt.s32.totalorder %s363, 15
        %s365 = scalar_select %p364, %s363, 15
        %s366 = scalar_lea.vmem %s4, %s365
        %s367 = smul.u32 16, %s24
        %s368 = smul.u32 16, %s24
        %p369 = scmp.lt.s32.totalorder %s368, 15
        %s370 = scalar_select %p369, %s368, 15
        %s371 = scalar_lea.vmem %s5, %s370
        %s372 = smul.u32 16, %s24
        %s373 = smul.u32 16, %s24
        %v375 = vld [vmem:[%s361] sm:$0xf]
        %v376 = vld [vmem:[%s361 + $0x4] sm:$0xf]
        %v377 = vld [vmem:[%s361 + $0x8] sm:$0xf]
        %v378 = vld [vmem:[%s361 + $0xc] sm:$0xf]
        %v379 = vld [vmem:[%s361 + $0x10] sm:$0xf]
        %v380 = vld [vmem:[%s361 + $0x14] sm:$0xf]
        %v381 = vld [vmem:[%s361 + $0x18] sm:$0xf]
        %v382 = vld [vmem:[%s361 + $0x1c] sm:$0xf]
        %v383 = vld [vmem:[%s361 + $0x20] sm:$0xf]
        %v384 = vld [vmem:[%s361 + $0x24] sm:$0xf]
        %v385 = vld [vmem:[%s361 + $0x28] sm:$0xf]
        %v386 = vld [vmem:[%s361 + $0x2c] sm:$0xf]
        %v387 = vld [vmem:[%s361 + $0x30] sm:$0xf]
        %v388 = vld [vmem:[%s361 + $0x34] sm:$0xf]
        %v389 = vld [vmem:[%s361 + $0x38] sm:$0xf]
        %v390 = vld [vmem:[%s361 + $0x3c] sm:$0xf]
        %v391 = vld [vmem:[%s361 + $0x40] sm:$0xf]
        %v392 = vld [vmem:[%s361 + $0x44] sm:$0xf]
        %v393 = vld [vmem:[%s361 + $0x48] sm:$0xf]
        %v394 = vld [vmem:[%s361 + $0x4c] sm:$0xf]
        %v395 = vld [vmem:[%s361 + $0x50] sm:$0xf]
        %v396 = vld [vmem:[%s361 + $0x54] sm:$0xf]
        %v397 = vld [vmem:[%s361 + $0x58] sm:$0xf]
        %v398 = vld [vmem:[%s361 + $0x5c] sm:$0xf]
        %v399 = vld [vmem:[%s361 + $0x60] sm:$0xf]
        %v400 = vld [vmem:[%s361 + $0x64] sm:$0xf]
        %v401 = vld [vmem:[%s361 + $0x68] sm:$0xf]
        %v402 = vld [vmem:[%s361 + $0x6c] sm:$0xf]
        %v403 = vld [vmem:[%s361 + $0x70] sm:$0xf]
        %v404 = vld [vmem:[%s361 + $0x74] sm:$0xf]
        %v405 = vld [vmem:[%s361 + $0x78] sm:$0xf]
        %v406 = vld [vmem:[%s361 + $0x7c] sm:$0xf]
        %v407 = vld [vmem:[%s317] sm:$0xf]
        %v408 = vld [vmem:[%s317 + $0x4] sm:$0xf]
        %v409 = vld [vmem:[%s317 + $0x8] sm:$0x1]
        %v442 = vunpack.c.l.b16 %v375
        %v443 = vunpack.c.l.b16 %v376
        %v444 = vunpack.c.l.b16 %v377
        %v445 = vunpack.c.l.b16 %v378
        %v446 = vunpack.c.l.b16 %v379
        %v447 = vunpack.c.l.b16 %v380
        %v448 = vunpack.c.l.b16 %v381
        %v449 = vunpack.c.l.b16 %v382
        %v450 = vunpack.c.l.b16 %v383
        %v451 = vunpack.c.l.b16 %v384
        %v452 = vunpack.c.l.b16 %v385
        %v453 = vunpack.c.l.b16 %v386
        %v454 = vunpack.c.l.b16 %v387
        %v455 = vunpack.c.l.b16 %v388
        %v456 = vunpack.c.l.b16 %v389
        %v457 = vunpack.c.l.b16 %v390
        %v458 = vunpack.c.l.b16 %v391
        %v459 = vunpack.c.l.b16 %v392
        %v460 = vunpack.c.l.b16 %v393
        %v461 = vunpack.c.l.b16 %v394
        %v462 = vunpack.c.l.b16 %v395
        %v463 = vunpack.c.l.b16 %v396
        %v464 = vunpack.c.l.b16 %v397
        %v465 = vunpack.c.l.b16 %v398
        %v466 = vunpack.c.l.b16 %v399
        %v467 = vunpack.c.l.b16 %v400
        %v468 = vunpack.c.l.b16 %v401
        %v469 = vunpack.c.l.b16 %v402
        %v470 = vunpack.c.l.b16 %v403
        %v471 = vunpack.c.l.b16 %v404
        %v472 = vunpack.c.l.b16 %v405
        %v473 = vunpack.c.l.b16 %v406
        %v474 = vpack.c.b16 %v443, %v442
        %v475 = vpack.c.b16 %v445, %v444
        %v476 = vpack.c.b16 %v447, %v446
        %v477 = vpack.c.b16 %v449, %v448
        %v478 = vpack.c.b16 %v451, %v450
        %v479 = vpack.c.b16 %v453, %v452
        %v480 = vpack.c.b16 %v455, %v454
        %v481 = vpack.c.b16 %v457, %v456
        %v482 = vpack.c.b16 %v459, %v458
        %v483 = vpack.c.b16 %v461, %v460
        %v484 = vpack.c.b16 %v463, %v462
        %v485 = vpack.c.b16 %v465, %v464
        %v486 = vpack.c.b16 %v467, %v466
        %v487 = vpack.c.b16 %v469, %v468
        %v488 = vpack.c.b16 %v471, %v470
        %v489 = vpack.c.b16 %v473, %v472
        %v493 = vunpack.c.l.b16 %v407
        %v494 = vunpack.c.l.b16 %v408
        %v495 = vunpack.c.l.b16 %v409
        %v496 = vpack.c.b16 %v494, %v493
        %v497 = vpack.c.b16 %v495, %v495
        %vm499 = vcmask 138240
        %v501 = vsel %vm499, %v474, 0
        %v504 = vsel %vm499, %v475, 0
        %v507 = vsel %vm499, %v476, 0
        %v510 = vsel %vm499, %v477, 0
        %v513 = vsel %vm499, %v478, 0
        %v516 = vsel %vm499, %v479, 0
        %v519 = vsel %vm499, %v480, 0
        %v522 = vsel %vm499, %v481, 0
        %v525 = vsel %vm499, %v482, 0
        %v528 = vsel %vm499, %v483, 0
        %v531 = vsel %vm499, %v484, 0
        %v534 = vsel %vm499, %v485, 0
        %v537 = vsel %vm499, %v486, 0
        %v540 = vsel %vm499, %v487, 0
        %v543 = vsel %vm499, %v488, 0
        %v546 = vsel %vm499, %v489, 0
        %vm548 = vcmask 1040384
        %v549 = vsel 0, 4294967295, 65535
        %v550 = vsel %vm548, %v549, 0
        %v552 = vand.u32 %v497, %v550
        %554 = vmatprep.subr.bf16.mxu0 0
        %555 = vmatpush1.bf16.msra.mxu0 %v496
        %556 = vmatprep.subr.bf16.mxu0 0
        %557 = vmatpush1.bf16.msra.mxu0 %v552
        %558 = vmatprep.subr.bf16.mxu0 0
        %559 = vmatpush1.bf16.msra.mxu0 0
        %560 = vmatprep.subr.bf16.mxu0 0
        %561 = vmatpush1.bf16.msra.mxu0 0
        %562 = vmatprep.subr.bf16.mxu0 0
        %563 = vmatpush1.bf16.msra.mxu0 0
        %564 = vmatprep.subr.bf16.mxu0 0
        %565 = vmatpush1.bf16.msra.mxu0 0
        %566 = vmatprep.subr.bf16.mxu0 0
        %567 = vmatpush1.bf16.msra.mxu0 0
        %568 = vmatprep.subr.bf16.mxu0 0
        %569 = vmatpush1.bf16.msra.mxu0 0
        %570 = vmatprep.subr.bf16.mxu0 0
        %571 = vmatpush1.bf16.msra.mxu0 0
        %572 = vmatprep.subr.bf16.mxu0 0
        %573 = vmatpush1.bf16.msra.mxu0 0
        %574 = vmatprep.subr.bf16.mxu0 0
        %575 = vmatpush1.bf16.msra.mxu0 0
        %576 = vmatprep.subr.bf16.mxu0 0
        %577 = vmatpush1.bf16.msra.mxu0 0
        %578 = vmatprep.subr.bf16.mxu0 0
        %579 = vmatpush1.bf16.msra.mxu0 0
        %580 = vmatprep.subr.bf16.mxu0 0
        %581 = vmatpush1.bf16.msra.mxu0 0
        %582 = vmatprep.subr.bf16.mxu0 0
        %583 = vmatpush1.bf16.msra.mxu0 0
        %584 = vmatprep.subr.bf16.mxu0 0
        %585 = vmatpush1.bf16.msra.mxu0 0
        %586 = vmatprep.mubr.bf16.mxu0 0
        %587 = vmatmul.mubr.bf16.gmra.mrb[0].mxu0 %v501
        %v588 = vpop.f32.mrb[0].mxu0
        %v589 = vadd.f32 0.0, %v588
        %v590 = vpop.f32.mrb[0].mxu0
        %v591 = vpop.f32.mrb[0].mxu0
        %v592 = vadd.f32 0.0, %v591
        %v593 = vpop.f32.mrb[0].mxu0
        %594 = vmatprep.mubr.bf16.mxu0 0
        %595 = vmatmul.mubr.bf16.gmra.mrb[0].mxu0 %v504
        %v596 = vpop.f32.mrb[0].mxu0
        %v597 = vadd.f32 0.0, %v596
        %v598 = vpop.f32.mrb[0].mxu0
        %v599 = vpop.f32.mrb[0].mxu0
        %v600 = vadd.f32 0.0, %v599
        %v601 = vpop.f32.mrb[0].mxu0
        %602 = vmatprep.mubr.bf16.mxu0 0
        %603 = vmatmul.mubr.bf16.gmra.mrb[0].mxu0 %v507
        %v604 = vpop.f32.mrb[0].mxu0
        %v605 = vadd.f32 0.0, %v604
        %v606 = vpop.f32.mrb[0].mxu0
        %v607 = vpop.f32.mrb[0].mxu0
        %v608 = vadd.f32 0.0, %v607
        %v609 = vpop.f32.mrb[0].mxu0
        %610 = vmatprep.mubr.bf16.mxu0 0
        %611 = vmatmul.mubr.bf16.gmra.mrb[0].mxu0 %v510
        %v612 = vpop.f32.mrb[0].mxu0
        %v613 = vadd.f32 0.0, %v612
        %v614 = vpop.f32.mrb[0].mxu0
        %v615 = vpop.f32.mrb[0].mxu0
        %v616 = vadd.f32 0.0, %v615
        %v617 = vpop.f32.mrb[0].mxu0
        %618 = vmatprep.mubr.bf16.mxu0 0
        %619 = vmatmul.mubr.bf16.gmra.mrb[0].mxu0 %v513
        %v620 = vpop.f32.mrb[0].mxu0
        %v621 = vadd.f32 0.0, %v620
        %v622 = vpop.f32.mrb[0].mxu0
        %v623 = vpop.f32.mrb[0].mxu0
        %v624 = vadd.f32 0.0, %v623
        %v625 = vpop.f32.mrb[0].mxu0
        %626 = vmatprep.mubr.bf16.mxu0 0
        %627 = vmatmul.mubr.bf16.gmra.mrb[0].mxu0 %v516
        %v628 = vpop.f32.mrb[0].mxu0
        %v629 = vadd.f32 0.0, %v628
        %v630 = vpop.f32.mrb[0].mxu0
        %v631 = vpop.f32.mrb[0].mxu0
        %v632 = vadd.f32 0.0, %v631
        %v633 = vpop.f32.mrb[0].mxu0
        %634 = vmatprep.mubr.bf16.mxu0 0
        %635 = vmatmul.mubr.bf16.gmra.mrb[0].mxu0 %v519
        %v636 = vpop.f32.mrb[0].mxu0
        %v637 = vadd.f32 0.0, %v636
        %v638 = vpop.f32.mrb[0].mxu0
        %v639 = vpop.f32.mrb[0].mxu0
        %v640 = vadd.f32 0.0, %v639
        %v641 = vpop.f32.mrb[0].mxu0
        %642 = vmatprep.mubr.bf16.mxu0 0
        %643 = vmatmul.mubr.bf16.gmra.mrb[0].mxu0 %v522
        %v644 = vpop.f32.mrb[0].mxu0
        %v645 = vadd.f32 0.0, %v644
        %v646 = vpop.f32.mrb[0].mxu0
        %v647 = vpop.f32.mrb[0].mxu0
        %v648 = vadd.f32 0.0, %v647
        %v649 = vpop.f32.mrb[0].mxu0
        %650 = vmatprep.mubr.bf16.mxu0 0
        %651 = vmatmul.mubr.bf16.gmra.mrb[0].mxu0 %v525
        %v652 = vpop.f32.mrb[0].mxu0
        %v653 = vadd.f32 0.0, %v652
        %v654 = vpop.f32.mrb[0].mxu0
        %v655 = vpop.f32.mrb[0].mxu0
        %v656 = vadd.f32 0.0, %v655
        %v657 = vpop.f32.mrb[0].mxu0
        %658 = vmatprep.mubr.bf16.mxu0 0
        %659 = vmatmul.mubr.bf16.gmra.mrb[0].mxu0 %v528
        %v660 = vpop.f32.mrb[0].mxu0
        %v661 = vadd.f32 0.0, %v660
        %v662 = vpop.f32.mrb[0].mxu0
        %v663 = vpop.f32.mrb[0].mxu0
        %v664 = vadd.f32 0.0, %v663
        %v665 = vpop.f32.mrb[0].mxu0
        %666 = vmatprep.mubr.bf16.mxu0 0
        %667 = vmatmul.mubr.bf16.gmra.mrb[0].mxu0 %v531
        %v668 = vpop.f32.mrb[0].mxu0
        %v669 = vadd.f32 0.0, %v668
        %v670 = vpop.f32.mrb[0].mxu0
        %v671 = vpop.f32.mrb[0].mxu0
        %v672 = vadd.f32 0.0, %v671
        %v673 = vpop.f32.mrb[0].mxu0
        %674 = vmatprep.mubr.bf16.mxu0 0
        %675 = vmatmul.mubr.bf16.gmra.mrb[0].mxu0 %v534
        %v676 = vpop.f32.mrb[0].mxu0
        %v677 = vadd.f32 0.0, %v676
        %v678 = vpop.f32.mrb[0].mxu0
        %v679 = vpop.f32.mrb[0].mxu0
        %v680 = vadd.f32 0.0, %v679
        %v681 = vpop.f32.mrb[0].mxu0
        %682 = vmatprep.mubr.bf16.mxu0 0
        %683 = vmatmul.mubr.bf16.gmra.mrb[0].mxu0 %v537
        %v684 = vpop.f32.mrb[0].mxu0
        %v685 = vadd.f32 0.0, %v684
        %v686 = vpop.f32.mrb[0].mxu0
        %v687 = vpop.f32.mrb[0].mxu0
        %v688 = vadd.f32 0.0, %v687
        %v689 = vpop.f32.mrb[0].mxu0
        %690 = vmatprep.mubr.bf16.mxu0 0
        %691 = vmatmul.mubr.bf16.gmra.mrb[0].mxu0 %v540
        %v692 = vpop.f32.mrb[0].mxu0
        %v693 = vadd.f32 0.0, %v692
        %v694 = vpop.f32.mrb[0].mxu0
        %v695 = vpop.f32.mrb[0].mxu0
        %v696 = vadd.f32 0.0, %v695
        %v697 = vpop.f32.mrb[0].mxu0
        %698 = vmatprep.mubr.bf16.mxu0 0
        %699 = vmatmul.mubr.bf16.gmra.mrb[0].mxu0 %v543
        %v700 = vpop.f32.mrb[0].mxu0
        %v701 = vadd.f32 0.0, %v700
        %v702 = vpop.f32.mrb[0].mxu0
        %v703 = vpop.f32.mrb[0].mxu0
        %v704 = vadd.f32 0.0, %v703
        %v705 = vpop.f32.mrb[0].mxu0
        %706 = vmatprep.mubr.bf16.mxu0 0
        %707 = vmatmul.mubr.bf16.gmra.mrb[0].mxu0 %v546
        %v708 = vpop.f32.mrb[0].mxu0
        %v709 = vadd.f32 0.0, %v708
        %v710 = vpop.f32.mrb[0].mxu0
        %v711 = vpop.f32.mrb[0].mxu0
        %v712 = vadd.f32 0.0, %v711
        %v713 = vpop.f32.mrb[0].mxu0
        %714 = vdwg.mxu0
        %v715 = vld [vmem:[%s2] sm:$0xf]
        %v716 = vld [vmem:[%s2 + $0x4] sm:$0xf]
        %v717 = vld [vmem:[%s2 + $0x8] sm:$0xf]
        %v718 = vld [vmem:[%s2 + $0xc] sm:$0xf]
        %v719 = vld [vmem:[%s2 + $0x10] sm:$0xf]
        %v720 = vld [vmem:[%s2 + $0x14] sm:$0xf]
        %v721 = vld [vmem:[%s2 + $0x18] sm:$0xf]
        %v722 = vld [vmem:[%s2 + $0x1c] sm:$0xf]
        %v723 = vld [vmem:[%s2 + $0x20] sm:$0xf]
        %v724 = vld [vmem:[%s2 + $0x24] sm:$0xf]
        %v725 = vld [vmem:[%s2 + $0x28] sm:$0xf]
        %v726 = vld [vmem:[%s2 + $0x2c] sm:$0xf]
        %v727 = vld [vmem:[%s2 + $0x30] sm:$0xf]
        %v728 = vld [vmem:[%s2 + $0x34] sm:$0xf]
        %v729 = vld [vmem:[%s2 + $0x38] sm:$0xf]
        %v730 = vld [vmem:[%s2 + $0x3c] sm:$0xf]
        %v731 = vld [vmem:[%s2 + $0x40] sm:$0xf]
        %v732 = vld [vmem:[%s2 + $0x44] sm:$0xf]
        %v733 = vld [vmem:[%s2 + $0x48] sm:$0xf]
        %v734 = vld [vmem:[%s2 + $0x4c] sm:$0xf]
        %v735 = vld [vmem:[%s2 + $0x50] sm:$0xf]
        %v736 = vld [vmem:[%s2 + $0x54] sm:$0xf]
        %v737 = vld [vmem:[%s2 + $0x58] sm:$0xf]
        %v738 = vld [vmem:[%s2 + $0x5c] sm:$0xf]
        %v739 = vld [vmem:[%s2 + $0x60] sm:$0xf]
        %v740 = vld [vmem:[%s2 + $0x64] sm:$0xf]
        %v741 = vld [vmem:[%s2 + $0x68] sm:$0xf]
        %v742 = vld [vmem:[%s2 + $0x6c] sm:$0xf]
        %v743 = vld [vmem:[%s2 + $0x70] sm:$0xf]
        %v744 = vld [vmem:[%s2 + $0x74] sm:$0xf]
        %v745 = vld [vmem:[%s2 + $0x78] sm:$0xf]
        %v746 = vld [vmem:[%s2 + $0x7c] sm:$0xf]
        %v747 = vld [vmem:[%s2 + $0x80] sm:$0xf]
        %v748 = vld [vmem:[%s2 + $0x84] sm:$0xf]
        %v749 = vld [vmem:[%s2 + $0x88] sm:$0xf]
        %v750 = vld [vmem:[%s2 + $0x8c] sm:$0xf]
        %v751 = vld [vmem:[%s2 + $0x90] sm:$0xf]
        %v752 = vld [vmem:[%s2 + $0x94] sm:$0xf]
        %v753 = vld [vmem:[%s2 + $0x98] sm:$0xf]
        %v754 = vld [vmem:[%s2 + $0x9c] sm:$0xf]
        %v755 = vld [vmem:[%s2 + $0xa0] sm:$0xf]
        %v756 = vld [vmem:[%s2 + $0xa4] sm:$0xf]
        %v757 = vld [vmem:[%s2 + $0xa8] sm:$0xf]
        %v758 = vld [vmem:[%s2 + $0xac] sm:$0xf]
        %v759 = vld [vmem:[%s2 + $0xb0] sm:$0xf]
        %v760 = vld [vmem:[%s2 + $0xb4] sm:$0xf]
        %v761 = vld [vmem:[%s2 + $0xb8] sm:$0xf]
        %v762 = vld [vmem:[%s2 + $0xbc] sm:$0xf]
        %v763 = vld [vmem:[%s2 + $0xc0] sm:$0xf]
        %v764 = vld [vmem:[%s2 + $0xc4] sm:$0xf]
        %v765 = vld [vmem:[%s2 + $0xc8] sm:$0xf]
        %v766 = vld [vmem:[%s2 + $0xcc] sm:$0xf]
        %v767 = vld [vmem:[%s2 + $0xd0] sm:$0xf]
        %v768 = vld [vmem:[%s2 + $0xd4] sm:$0xf]
        %v769 = vld [vmem:[%s2 + $0xd8] sm:$0xf]
        %v770 = vld [vmem:[%s2 + $0xdc] sm:$0xf]
        %v771 = vld [vmem:[%s2 + $0xe0] sm:$0xf]
        %v772 = vld [vmem:[%s2 + $0xe4] sm:$0xf]
        %v773 = vld [vmem:[%s2 + $0xe8] sm:$0xf]
        %v774 = vld [vmem:[%s2 + $0xec] sm:$0xf]
        %v775 = vld [vmem:[%s2 + $0xf0] sm:$0xf]
        %v776 = vld [vmem:[%s2 + $0xf4] sm:$0xf]
        %v777 = vld [vmem:[%s2 + $0xf8] sm:$0xf]
        %v778 = vld [vmem:[%s2 + $0xfc] sm:$0xf]
        %v779 = vld [vmem:[%s2 + $0x100] sm:$0xf]
        %v780 = vld [vmem:[%s2 + $0x104] sm:$0xf]
        %v781 = vld [vmem:[%s2 + $0x108] sm:$0xf]
        %v782 = vld [vmem:[%s2 + $0x10c] sm:$0xf]
        %v783 = vld [vmem:[%s2 + $0x110] sm:$0xf]
        %v784 = vld [vmem:[%s2 + $0x114] sm:$0xf]
        %v785 = vld [vmem:[%s2 + $0x118] sm:$0xf]
        %v786 = vld [vmem:[%s2 + $0x11c] sm:$0xf]
        %v787 = vld [vmem:[%s2 + $0x120] sm:$0xf]
        %v788 = vld [vmem:[%s2 + $0x124] sm:$0xf]
        %v789 = vld [vmem:[%s2 + $0x128] sm:$0xf]
        %v790 = vld [vmem:[%s2 + $0x12c] sm:$0xf]
        %v791 = vld [vmem:[%s2 + $0x130] sm:$0xf]
        %v792 = vld [vmem:[%s2 + $0x134] sm:$0xf]
        %v793 = vld [vmem:[%s2 + $0x138] sm:$0xf]
        %v794 = vld [vmem:[%s2 + $0x13c] sm:$0xf]
        %v795 = vld [vmem:[%s2 + $0x140] sm:$0xf]
        %v796 = vld [vmem:[%s2 + $0x144] sm:$0xf]
        %v797 = vld [vmem:[%s2 + $0x148] sm:$0xf]
        %v798 = vld [vmem:[%s2 + $0x14c] sm:$0xf]
        %v799 = vld [vmem:[%s2 + $0x150] sm:$0xf]
        %v800 = vld [vmem:[%s2 + $0x154] sm:$0xf]
        %v801 = vld [vmem:[%s2 + $0x158] sm:$0xf]
        %v802 = vld [vmem:[%s2 + $0x15c] sm:$0xf]
        %v803 = vld [vmem:[%s2 + $0x160] sm:$0xf]
        %v804 = vld [vmem:[%s2 + $0x164] sm:$0xf]
        %v805 = vld [vmem:[%s2 + $0x168] sm:$0xf]
        %v806 = vld [vmem:[%s2 + $0x16c] sm:$0xf]
        %v807 = vld [vmem:[%s2 + $0x170] sm:$0xf]
        %v808 = vld [vmem:[%s2 + $0x174] sm:$0xf]
        %v809 = vld [vmem:[%s2 + $0x178] sm:$0xf]
        %v810 = vld [vmem:[%s2 + $0x17c] sm:$0xf]
        %v811 = vld [vmem:[%s2 + $0x180] sm:$0xf]
        %v812 = vld [vmem:[%s2 + $0x184] sm:$0xf]
        %v813 = vld [vmem:[%s2 + $0x188] sm:$0xf]
        %v814 = vld [vmem:[%s2 + $0x18c] sm:$0xf]
        %v815 = vld [vmem:[%s2 + $0x190] sm:$0xf]
        %v816 = vld [vmem:[%s2 + $0x194] sm:$0xf]
        %v817 = vld [vmem:[%s2 + $0x198] sm:$0xf]
        %v818 = vld [vmem:[%s2 + $0x19c] sm:$0xf]
        %v819 = vld [vmem:[%s2 + $0x1a0] sm:$0xf]
        %v820 = vld [vmem:[%s2 + $0x1a4] sm:$0xf]
        %v821 = vld [vmem:[%s2 + $0x1a8] sm:$0xf]
        %v822 = vld [vmem:[%s2 + $0x1ac] sm:$0xf]
        %v823 = vld [vmem:[%s2 + $0x1b0] sm:$0xf]
        %v824 = vld [vmem:[%s2 + $0x1b4] sm:$0xf]
        %v825 = vld [vmem:[%s2 + $0x1b8] sm:$0xf]
        %v826 = vld [vmem:[%s2 + $0x1bc] sm:$0xf]
        %v827 = vld [vmem:[%s2 + $0x1c0] sm:$0xf]
        %v828 = vld [vmem:[%s2 + $0x1c4] sm:$0xf]
        %v829 = vld [vmem:[%s2 + $0x1c8] sm:$0xf]
        %v830 = vld [vmem:[%s2 + $0x1cc] sm:$0xf]
        %v831 = vld [vmem:[%s2 + $0x1d0] sm:$0xf]
        %v832 = vld [vmem:[%s2 + $0x1d4] sm:$0xf]
        %v833 = vld [vmem:[%s2 + $0x1d8] sm:$0xf]
        %v834 = vld [vmem:[%s2 + $0x1dc] sm:$0xf]
        %v835 = vld [vmem:[%s2 + $0x1e0] sm:$0xf]
        %v836 = vld [vmem:[%s2 + $0x1e4] sm:$0xf]
        %v837 = vld [vmem:[%s2 + $0x1e8] sm:$0xf]
        %v838 = vld [vmem:[%s2 + $0x1ec] sm:$0xf]
        %v839 = vld [vmem:[%s2 + $0x1f0] sm:$0xf]
        %v840 = vld [vmem:[%s2 + $0x1f4] sm:$0xf]
        %v841 = vld [vmem:[%s2 + $0x1f8] sm:$0xf]
        %v842 = vld [vmem:[%s2 + $0x1fc] sm:$0xf]
        %v843 = vld [vmem:[%s3] sm:$0xff]
        %v844 = vld [vmem:[%s3 + $0x8] sm:$0xff]
        %v845 = vld [vmem:[%s3 + $0x10] sm:$0xff]
        %v846 = vld [vmem:[%s3 + $0x18] sm:$0xff]
        %v847 = vld [vmem:[%s3 + $0x20] sm:$0xff]
        %v848 = vld [vmem:[%s3 + $0x28] sm:$0xff]
        %v849 = vld [vmem:[%s3 + $0x30] sm:$0xff]
        %v850 = vld [vmem:[%s3 + $0x38] sm:$0xff]
        %v851 = vld [vmem:[%s3 + $0x40] sm:$0xff]
        %v852 = vld [vmem:[%s3 + $0x48] sm:$0xff]
        %v853 = vld [vmem:[%s3 + $0x50] sm:$0xff]
        %v854 = vld [vmem:[%s3 + $0x58] sm:$0xff]
        %v855 = vld [vmem:[%s3 + $0x60] sm:$0xff]
        %v856 = vld [vmem:[%s3 + $0x68] sm:$0xff]
        %v857 = vld [vmem:[%s3 + $0x70] sm:$0xff]
        %v858 = vld [vmem:[%s3 + $0x78] sm:$0xff]
        %v859 = vld [vmem:[%s3 + $0x80] sm:$0xff]
        %v860 = vld [vmem:[%s3 + $0x88] sm:$0xff]
        %v861 = vld [vmem:[%s3 + $0x90] sm:$0xff]
        %v862 = vld [vmem:[%s3 + $0x98] sm:$0xff]
        %v863 = vld [vmem:[%s3 + $0xa0] sm:$0xff]
        %v864 = vld [vmem:[%s3 + $0xa8] sm:$0xff]
        %v865 = vld [vmem:[%s3 + $0xb0] sm:$0xff]
        %v866 = vld [vmem:[%s3 + $0xb8] sm:$0xff]
        %v867 = vld [vmem:[%s3 + $0xc0] sm:$0xff]
        %v868 = vld [vmem:[%s3 + $0xc8] sm:$0xff]
        %v869 = vld [vmem:[%s3 + $0xd0] sm:$0xff]
        %v870 = vld [vmem:[%s3 + $0xd8] sm:$0xff]
        %v871 = vld [vmem:[%s3 + $0xe0] sm:$0xff]
        %v872 = vld [vmem:[%s3 + $0xe8] sm:$0xff]
        %v873 = vld [vmem:[%s3 + $0xf0] sm:$0xff]
        %v874 = vld [vmem:[%s3 + $0xf8] sm:$0xff]
        %v875 = vld [vmem:[%s3 + $0x100] sm:$0xff]
        %v876 = vld [vmem:[%s3 + $0x108] sm:$0xff]
        %v877 = vld [vmem:[%s3 + $0x110] sm:$0xff]
        %v878 = vld [vmem:[%s3 + $0x118] sm:$0xff]
        %v879 = vld [vmem:[%s3 + $0x120] sm:$0xff]
        %v880 = vld [vmem:[%s3 + $0x128] sm:$0xff]
        %v881 = vld [vmem:[%s3 + $0x130] sm:$0xff]
        %v882 = vld [vmem:[%s3 + $0x138] sm:$0xff]
        %v883 = vld [vmem:[%s3 + $0x140] sm:$0xff]
        %v884 = vld [vmem:[%s3 + $0x148] sm:$0xff]
        %v885 = vld [vmem:[%s3 + $0x150] sm:$0xff]
        %v886 = vld [vmem:[%s3 + $0x158] sm:$0xff]
        %v887 = vld [vmem:[%s3 + $0x160] sm:$0xff]
        %v888 = vld [vmem:[%s3 + $0x168] sm:$0xff]
        %v889 = vld [vmem:[%s3 + $0x170] sm:$0xff]
        %v890 = vld [vmem:[%s3 + $0x178] sm:$0xff]
        %v891 = vld [vmem:[%s3 + $0x180] sm:$0xff]
        %v892 = vld [vmem:[%s3 + $0x188] sm:$0xff]
        %v893 = vld [vmem:[%s3 + $0x190] sm:$0xff]
        %v894 = vld [vmem:[%s3 + $0x198] sm:$0xff]
        %v895 = vld [vmem:[%s3 + $0x1a0] sm:$0xff]
        %v896 = vld [vmem:[%s3 + $0x1a8] sm:$0xff]
        %v897 = vld [vmem:[%s3 + $0x1b0] sm:$0xff]
        %v898 = vld [vmem:[%s3 + $0x1b8] sm:$0xff]
        %v899 = vld [vmem:[%s3 + $0x1c0] sm:$0xff]
        %v900 = vld [vmem:[%s3 + $0x1c8] sm:$0xff]
        %v901 = vld [vmem:[%s3 + $0x1d0] sm:$0xff]
        %v902 = vld [vmem:[%s3 + $0x1d8] sm:$0xff]
        %v903 = vld [vmem:[%s3 + $0x1e0] sm:$0xff]
        %v904 = vld [vmem:[%s3 + $0x1e8] sm:$0xff]
        %v905 = vld [vmem:[%s3 + $0x1f0] sm:$0xff]
        %v906 = vld [vmem:[%s3 + $0x1f8] sm:$0xff]
        %v907 = vld [vmem:[%s3 + $0x200] sm:$0xff]
        %v908 = vld [vmem:[%s3 + $0x208] sm:$0xff]
        %v909 = vld [vmem:[%s3 + $0x210] sm:$0xff]
        %v910 = vld [vmem:[%s3 + $0x218] sm:$0xff]
        %v911 = vld [vmem:[%s3 + $0x220] sm:$0xff]
        %v912 = vld [vmem:[%s3 + $0x228] sm:$0xff]
        %v913 = vld [vmem:[%s3 + $0x230] sm:$0xff]
        %v914 = vld [vmem:[%s3 + $0x238] sm:$0xff]
        %v915 = vld [vmem:[%s3 + $0x240] sm:$0xff]
        %v916 = vld [vmem:[%s3 + $0x248] sm:$0xff]
        %v917 = vld [vmem:[%s3 + $0x250] sm:$0xff]
        %v918 = vld [vmem:[%s3 + $0x258] sm:$0xff]
        %v919 = vld [vmem:[%s3 + $0x260] sm:$0xff]
        %v920 = vld [vmem:[%s3 + $0x268] sm:$0xff]
        %v921 = vld [vmem:[%s3 + $0x270] sm:$0xff]
        %v922 = vld [vmem:[%s3 + $0x278] sm:$0xff]
        %v923 = vld [vmem:[%s3 + $0x280] sm:$0xff]
        %v924 = vld [vmem:[%s3 + $0x288] sm:$0xff]
        %v925 = vld [vmem:[%s3 + $0x290] sm:$0xff]
        %v926 = vld [vmem:[%s3 + $0x298] sm:$0xff]
        %v927 = vld [vmem:[%s3 + $0x2a0] sm:$0xff]
        %v928 = vld [vmem:[%s3 + $0x2a8] sm:$0xff]
        %v929 = vld [vmem:[%s3 + $0x2b0] sm:$0xff]
        %v930 = vld [vmem:[%s3 + $0x2b8] sm:$0xff]
        %v931 = vld [vmem:[%s3 + $0x2c0] sm:$0xff]
        %v932 = vld [vmem:[%s3 + $0x2c8] sm:$0xff]
        %v933 = vld [vmem:[%s3 + $0x2d0] sm:$0xff]
        %v934 = vld [vmem:[%s3 + $0x2d8] sm:$0xff]
        %v935 = vld [vmem:[%s3 + $0x2e0] sm:$0xff]
        %v936 = vld [vmem:[%s3 + $0x2e8] sm:$0xff]
        %v937 = vld [vmem:[%s3 + $0x2f0] sm:$0xff]
        %v938 = vld [vmem:[%s3 + $0x2f8] sm:$0xff]
        %v939 = vld [vmem:[%s3 + $0x300] sm:$0xff]
        %v940 = vld [vmem:[%s3 + $0x308] sm:$0xff]
        %v941 = vld [vmem:[%s3 + $0x310] sm:$0xff]
        %v942 = vld [vmem:[%s3 + $0x318] sm:$0xff]
        %v943 = vld [vmem:[%s3 + $0x320] sm:$0xff]
        %v944 = vld [vmem:[%s3 + $0x328] sm:$0xff]
        %v945 = vld [vmem:[%s3 + $0x330] sm:$0xff]
        %v946 = vld [vmem:[%s3 + $0x338] sm:$0xff]
        %v947 = vld [vmem:[%s3 + $0x340] sm:$0xff]
        %v948 = vld [vmem:[%s3 + $0x348] sm:$0xff]
        %v949 = vld [vmem:[%s3 + $0x350] sm:$0xff]
        %v950 = vld [vmem:[%s3 + $0x358] sm:$0xff]
        %v951 = vld [vmem:[%s3 + $0x360] sm:$0xff]
        %v952 = vld [vmem:[%s3 + $0x368] sm:$0xff]
        %v953 = vld [vmem:[%s3 + $0x370] sm:$0xff]
        %v954 = vld [vmem:[%s3 + $0x378] sm:$0xff]
        %v955 = vld [vmem:[%s3 + $0x380] sm:$0xff]
        %v956 = vld [vmem:[%s3 + $0x388] sm:$0xff]
        %v957 = vld [vmem:[%s3 + $0x390] sm:$0xff]
        %v958 = vld [vmem:[%s3 + $0x398] sm:$0xff]
        %v959 = vld [vmem:[%s3 + $0x3a0] sm:$0xff]
        %v960 = vld [vmem:[%s3 + $0x3a8] sm:$0xff]
        %v961 = vld [vmem:[%s3 + $0x3b0] sm:$0xff]
        %v962 = vld [vmem:[%s3 + $0x3b8] sm:$0xff]
        %v963 = vld [vmem:[%s3 + $0x3c0] sm:$0xff]
        %v964 = vld [vmem:[%s3 + $0x3c8] sm:$0xff]
        %v965 = vld [vmem:[%s3 + $0x3d0] sm:$0xff]
        %v966 = vld [vmem:[%s3 + $0x3d8] sm:$0xff]
        %v967 = vld [vmem:[%s3 + $0x3e0] sm:$0xff]
        %v968 = vld [vmem:[%s3 + $0x3e8] sm:$0xff]
        %v969 = vld [vmem:[%s3 + $0x3f0] sm:$0xff]
        %v970 = vld [vmem:[%s3 + $0x3f8] sm:$0xff]
        %v971 = vxor.u32 %v589, 2147483648
        %v972 = vxor.u32 %v592, 2147483648
        %v973 = vxor.u32 %v597, 2147483648
        %v974 = vxor.u32 %v600, 2147483648
        %v975 = vxor.u32 %v605, 2147483648
        %v976 = vxor.u32 %v608, 2147483648
        %v977 = vxor.u32 %v613, 2147483648
        %v978 = vxor.u32 %v616, 2147483648
        %v979 = vxor.u32 %v621, 2147483648
        %v980 = vxor.u32 %v624, 2147483648
        %v981 = vxor.u32 %v629, 2147483648
        %v982 = vxor.u32 %v632, 2147483648
        %v983 = vxor.u32 %v637, 2147483648
        %v984 = vxor.u32 %v640, 2147483648
        %v985 = vxor.u32 %v645, 2147483648
        %v986 = vxor.u32 %v648, 2147483648
        %v987 = vxor.u32 %v653, 2147483648
        %v988 = vxor.u32 %v656, 2147483648
        %v989 = vxor.u32 %v661, 2147483648
        %v990 = vxor.u32 %v664, 2147483648
        %v991 = vxor.u32 %v669, 2147483648
        %v992 = vxor.u32 %v672, 2147483648
        %v993 = vxor.u32 %v677, 2147483648
        %v994 = vxor.u32 %v680, 2147483648
        %v995 = vxor.u32 %v685, 2147483648
        %v996 = vxor.u32 %v688, 2147483648
        %v997 = vxor.u32 %v693, 2147483648
        %v998 = vxor.u32 %v696, 2147483648
        %v999 = vxor.u32 %v701, 2147483648
        %v1000 = vxor.u32 %v704, 2147483648
        %v1001 = vxor.u32 %v709, 2147483648
        %v1002 = vxor.u32 %v712, 2147483648
        %v1003 = vmul.f32 %v971, 1.442695
        %v1004 = vpow.pop %v1003
        %v1005 = vmul.f32 %v972, 1.442695
        %v1006 = vpow.pop %v1005
        %v1007 = vmul.f32 %v973, 1.442695
        %v1008 = vpow.pop %v1007
        %v1009 = vmul.f32 %v974, 1.442695
        %v1010 = vpow.pop %v1009
        %v1011 = vmul.f32 %v975, 1.442695
        %v1012 = vpow.pop %v1011
        %v1013 = vmul.f32 %v976, 1.442695
        %v1014 = vpow.pop %v1013
        %v1015 = vmul.f32 %v977, 1.442695
        %v1016 = vpow.pop %v1015
        %v1017 = vmul.f32 %v978, 1.442695
        %v1018 = vpow.pop %v1017
        %v1019 = vmul.f32 %v979, 1.442695
        %v1020 = vpow.pop %v1019
        %v1021 = vmul.f32 %v980, 1.442695
        %v1022 = vpow.pop %v1021
        %v1023 = vmul.f32 %v981, 1.442695
        %v1024 = vpow.pop %v1023
        %v1025 = vmul.f32 %v982, 1.442695
        %v1026 = vpow.pop %v1025
        %v1027 = vmul.f32 %v983, 1.442695
        %v1028 = vpow.pop %v1027
        %v1029 = vmul.f32 %v984, 1.442695
        %v1030 = vpow.pop %v1029
        %v1031 = vmul.f32 %v985, 1.442695
        %v1032 = vpow.pop %v1031
        %v1033 = vmul.f32 %v986, 1.442695
        %v1034 = vpow.pop %v1033
        %v1035 = vmul.f32 %v987, 1.442695
        %v1036 = vpow.pop %v1035
        %v1037 = vmul.f32 %v988, 1.442695
        %v1038 = vpow.pop %v1037
        %v1039 = vmul.f32 %v989, 1.442695
        %v1040 = vpow.pop %v1039
        %v1041 = vmul.f32 %v990, 1.442695
        %v1042 = vpow.pop %v1041
        %v1043 = vmul.f32 %v991, 1.442695
        %v1044 = vpow.pop %v1043
        %v1045 = vmul.f32 %v992, 1.442695
        %v1046 = vpow.pop %v1045
        %v1047 = vmul.f32 %v993, 1.442695
        %v1048 = vpow.pop %v1047
        %v1049 = vmul.f32 %v994, 1.442695
        %v1050 = vpow.pop %v1049
        %v1051 = vmul.f32 %v995, 1.442695
        %v1052 = vpow.pop %v1051
        %v1053 = vmul.f32 %v996, 1.442695
        %v1054 = vpow.pop %v1053
        %v1055 = vmul.f32 %v997, 1.442695
        %v1056 = vpow.pop %v1055
        %v1057 = vmul.f32 %v998, 1.442695
        %v1058 = vpow.pop %v1057
        %v1059 = vmul.f32 %v999, 1.442695
        %v1060 = vpow.pop %v1059
        %v1061 = vmul.f32 %v1000, 1.442695
        %v1062 = vpow.pop %v1061
        %v1063 = vmul.f32 %v1001, 1.442695
        %v1064 = vpow.pop %v1063
        %v1065 = vmul.f32 %v1002, 1.442695
        %v1066 = vpow.pop %v1065
        %v1067 = vadd.f32 %v1004, 1.0
        %v1068 = vadd.f32 %v1006, 1.0
        %v1069 = vadd.f32 %v1008, 1.0
        %v1070 = vadd.f32 %v1010, 1.0
        %v1071 = vadd.f32 %v1012, 1.0
        %v1072 = vadd.f32 %v1014, 1.0
        %v1073 = vadd.f32 %v1016, 1.0
        %v1074 = vadd.f32 %v1018, 1.0
        %v1075 = vadd.f32 %v1020, 1.0
        %v1076 = vadd.f32 %v1022, 1.0
        %v1077 = vadd.f32 %v1024, 1.0
        %v1078 = vadd.f32 %v1026, 1.0
        %v1079 = vadd.f32 %v1028, 1.0
        %v1080 = vadd.f32 %v1030, 1.0
        %v1081 = vadd.f32 %v1032, 1.0
        %v1082 = vadd.f32 %v1034, 1.0
        %v1083 = vadd.f32 %v1036, 1.0
        %v1084 = vadd.f32 %v1038, 1.0
        %v1085 = vadd.f32 %v1040, 1.0
        %v1086 = vadd.f32 %v1042, 1.0
        %v1087 = vadd.f32 %v1044, 1.0
        %v1088 = vadd.f32 %v1046, 1.0
        %v1089 = vadd.f32 %v1048, 1.0
        %v1090 = vadd.f32 %v1050, 1.0
        %v1091 = vadd.f32 %v1052, 1.0
        %v1092 = vadd.f32 %v1054, 1.0
        %v1093 = vadd.f32 %v1056, 1.0
        %v1094 = vadd.f32 %v1058, 1.0
        %v1095 = vadd.f32 %v1060, 1.0
        %v1096 = vadd.f32 %v1062, 1.0
        %v1097 = vadd.f32 %v1064, 1.0
        %v1098 = vadd.f32 %v1066, 1.0
        %v1099 = vrcp.pop %v1067
        %v1100 = vmul.f32 1.0, %v1099
        %v1101 = vrcp.pop %v1068
        %v1102 = vmul.f32 1.0, %v1101
        %v1103 = vrcp.pop %v1069
        %v1104 = vmul.f32 1.0, %v1103
        %v1105 = vrcp.pop %v1070
        %v1106 = vmul.f32 1.0, %v1105
        %v1107 = vrcp.pop %v1071
        %v1108 = vmul.f32 1.0, %v1107
        %v1109 = vrcp.pop %v1072
        %v1110 = vmul.f32 1.0, %v1109
        %v1111 = vrcp.pop %v1073
        %v1112 = vmul.f32 1.0, %v1111
        %v1113 = vrcp.pop %v1074
        %v1114 = vmul.f32 1.0, %v1113
        %v1115 = vrcp.pop %v1075
        %v1116 = vmul.f32 1.0, %v1115
        %v1117 = vrcp.pop %v1076
        %v1118 = vmul.f32 1.0, %v1117
        %v1119 = vrcp.pop %v1077
        %v1120 = vmul.f32 1.0, %v1119
        %v1121 = vrcp.pop %v1078
        %v1122 = vmul.f32 1.0, %v1121
        %v1123 = vrcp.pop %v1079
        %v1124 = vmul.f32 1.0, %v1123
        %v1125 = vrcp.pop %v1080
        %v1126 = vmul.f32 1.0, %v1125
        %v1127 = vrcp.pop %v1081
        %v1128 = vmul.f32 1.0, %v1127
        %v1129 = vrcp.pop %v1082
        %v1130 = vmul.f32 1.0, %v1129
        %v1131 = vrcp.pop %v1083
        %v1132 = vmul.f32 1.0, %v1131
        %v1133 = vrcp.pop %v1084
        %v1134 = vmul.f32 1.0, %v1133
        %v1135 = vrcp.pop %v1085
        %v1136 = vmul.f32 1.0, %v1135
        %v1137 = vrcp.pop %v1086
        %v1138 = vmul.f32 1.0, %v1137
        %v1139 = vrcp.pop %v1087
        %v1140 = vmul.f32 1.0, %v1139
        %v1141 = vrcp.pop %v1088
        %v1142 = vmul.f32 1.0, %v1141
        %v1143 = vrcp.pop %v1089
        %v1144 = vmul.f32 1.0, %v1143
        %v1145 = vrcp.pop %v1090
        %v1146 = vmul.f32 1.0, %v1145
        %v1147 = vrcp.pop %v1091
        %v1148 = vmul.f32 1.0, %v1147
        %v1149 = vrcp.pop %v1092
        %v1150 = vmul.f32 1.0, %v1149
        %v1151 = vrcp.pop %v1093
        %v1152 = vmul.f32 1.0, %v1151
        %v1153 = vrcp.pop %v1094
        %v1154 = vmul.f32 1.0, %v1153
        %v1155 = vrcp.pop %v1095
        %v1156 = vmul.f32 1.0, %v1155
        %v1157 = vrcp.pop %v1096
        %v1158 = vmul.f32 1.0, %v1157
        %v1159 = vrcp.pop %v1097
        %v1160 = vmul.f32 1.0, %v1159
        %v1161 = vrcp.pop %v1098
        %v1162 = vmul.f32 1.0, %v1161
        %v1163 = vpack.c.bf16 %v1102, %v1100
        %v1164 = vpack.c.bf16 %v1106, %v1104
        %v1165 = vpack.c.bf16 %v1110, %v1108
        %v1166 = vpack.c.bf16 %v1114, %v1112
        %v1167 = vpack.c.bf16 %v1118, %v1116
        %v1168 = vpack.c.bf16 %v1122, %v1120
        %v1169 = vpack.c.bf16 %v1126, %v1124
        %v1170 = vpack.c.bf16 %v1130, %v1128
        %v1171 = vpack.c.bf16 %v1134, %v1132
        %v1172 = vpack.c.bf16 %v1138, %v1136
        %v1173 = vpack.c.bf16 %v1142, %v1140
        %v1174 = vpack.c.bf16 %v1146, %v1144
        %v1175 = vpack.c.bf16 %v1150, %v1148
        %v1176 = vpack.c.bf16 %v1154, %v1152
        %v1177 = vpack.c.bf16 %v1158, %v1156
        %v1178 = vpack.c.bf16 %v1162, %v1160
        %v1187 = vunpack.c.l.b16 %v715
        %v1188 = vunpack.c.l.b16 %v716
        %v1189 = vunpack.c.l.b16 %v717
        %v1190 = vunpack.c.l.b16 %v718
        %v1191 = vunpack.c.l.b16 %v719
        %v1192 = vunpack.c.l.b16 %v720
        %v1193 = vunpack.c.l.b16 %v721
        %v1194 = vunpack.c.l.b16 %v722
        %v1195 = vpack.c.b16 %v1188, %v1187
        %v1196 = vpack.c.b16 %v1190, %v1189
        %v1197 = vpack.c.b16 %v1192, %v1191
        %v1198 = vpack.c.b16 %v1194, %v1193
        %vm1199 = vcmask 130048
        %v1201 = vsel %vm1199, %v1195, 0
        %v1204 = vsel %vm1199, %v1196, 0
        %v1207 = vsel %vm1199, %v1197, 0
        %v1210 = vsel %vm1199, %v1198, 0
        %1212 = vmatprep.subr.bf16.mxu0 0
        %1213 = vmatpush1.bf16.msra.mxu0 %v1163
        %1214 = vmatprep.subr.bf16.mxu0 0
        %1215 = vmatpush1.bf16.msra.mxu0 0
        %1216 = vmatprep.subr.bf16.mxu0 0
        %1217 = vmatpush1.bf16.msra.mxu0 0
        %1218 = vmatprep.subr.bf16.mxu0 0
        %1219 = vmatpush1.bf16.msra.mxu0 0
        %1220 = vmatprep.subr.bf16.mxu0 0
        %1221 = vmatpush1.bf16.msra.mxu0 0
        %1222 = vmatprep.subr.bf16.mxu0 0
        %1223 = vmatpush1.bf16.msra.mxu0 0
        %1224 = vmatprep.subr.bf16.mxu0 0
        %1225 = vmatpush1.bf16.msra.mxu0 0
        %1226 = vmatprep.subr.bf16.mxu0 0
        %1227 = vmatpush1.bf16.msra.mxu0 0
        %1228 = vmatprep.subr.bf16.mxu0 0
        %1229 = vmatpush1.bf16.msra.mxu0 0
        %1230 = vmatprep.subr.bf16.mxu0 0
        %1231 = vmatpush1.bf16.msra.mxu0 0
        %1232 = vmatprep.subr.bf16.mxu0 0
        %1233 = vmatpush1.bf16.msra.mxu0 0
        %1234 = vmatprep.subr.bf16.mxu0 0
        %1235 = vmatpush1.bf16.msra.mxu0 0
        %1236 = vmatprep.subr.bf16.mxu0 0
        %1237 = vmatpush1.bf16.msra.mxu0 0
        %1238 = vmatprep.subr.bf16.mxu0 0
        %1239 = vmatpush1.bf16.msra.mxu0 0
        %1240 = vmatprep.subr.bf16.mxu0 0
        %1241 = vmatpush1.bf16.msra.mxu0 0
        %1242 = vmatprep.subr.bf16.mxu0 0
        %1243 = vmatpush1.bf16.msra.mxu0 0
        %1244 = vmatprep.mubr.bf16.mxu0 0
        %1245 = vmatmul.mubr.bf16.gmra.mrb[0].mxu0 %v1201
        %v1246 = vpop.f32.mrb[0].mxu0
        %v1247 = vadd.f32 0.0, %v1246
        %v1248 = vpop.f32.mrb[0].mxu0
        %v1249 = vpop.f32.mrb[0].mxu0
        %v1250 = vadd.f32 0.0, %v1249
        %v1251 = vpop.f32.mrb[0].mxu0
        %1252 = vmatprep.mubr.bf16.mxu0 0
        %1253 = vmatmul.mubr.bf16.gmra.mrb[0].mxu0 %v1204
        %v1254 = vpop.f32.mrb[0].mxu0
        %v1255 = vadd.f32 0.0, %v1254
        %v1256 = vpop.f32.mrb[0].mxu0
        %v1257 = vpop.f32.mrb[0].mxu0
        %v1258 = vadd.f32 0.0, %v1257
        %v1259 = vpop.f32.mrb[0].mxu0
        %1260 = vmatprep.mubr.bf16.mxu0 0
        %1261 = vmatmul.mubr.bf16.gmra.mrb[0].mxu0 %v1207
        %v1262 = vpop.f32.mrb[0].mxu0
        %v1263 = vadd.f32 0.0, %v1262
        %v1264 = vpop.f32.mrb[0].mxu0
        %v1265 = vpop.f32.mrb[0].mxu0
        %v1266 = vadd.f32 0.0, %v1265
        %v1267 = vpop.f32.mrb[0].mxu0
        %1268 = vmatprep.mubr.bf16.mxu0 0
        %1269 = vmatmul.mubr.bf16.gmra.mrb[0].mxu0 %v1210
        %v1270 = vpop.f32.mrb[0].mxu0
        %v1271 = vadd.f32 0.0, %v1270
        %v1272 = vpop.f32.mrb[0].mxu0
        %v1273 = vpop.f32.mrb[0].mxu0
        %v1274 = vadd.f32 0.0, %v1273
        %v1275 = vpop.f32.mrb[0].mxu0
        %1276 = vdwg.mxu0
        %v1285 = vunpack.c.l.b16 %v723
        %v1286 = vunpack.c.l.b16 %v724
        %v1287 = vunpack.c.l.b16 %v725
        %v1288 = vunpack.c.l.b16 %v726
        %v1289 = vunpack.c.l.b16 %v727
        %v1290 = vunpack.c.l.b16 %v728
        %v1291 = vunpack.c.l.b16 %v729
        %v1292 = vunpack.c.l.b16 %v730
        %v1293 = vpack.c.b16 %v1286, %v1285
        %v1294 = vpack.c.b16 %v1288, %v1287
        %v1295 = vpack.c.b16 %v1290, %v1289
        %v1296 = vpack.c.b16 %v1292, %v1291
        %v1298 = vsel %vm1199, %v1293, 0
        %v1301 = vsel %vm1199, %v1294, 0
        %v1304 = vsel %vm1199, %v1295, 0
        %v1307 = vsel %vm1199, %v1296, 0
        %1309 = vmatprep.subr.bf16.mxu0 0
        %1310 = vmatpush1.bf16.msra.mxu0 %v1164
        %1311 = vmatprep.subr.bf16.mxu0 0
        %1312 = vmatpush1.bf16.msra.mxu0 0
        %1313 = vmatprep.subr.bf16.mxu0 0
        %1314 = vmatpush1.bf16.msra.mxu0 0
        %1315 = vmatprep.subr.bf16.mxu0 0
        %1316 = vmatpush1.bf16.msra.mxu0 0
        %1317 = vmatprep.subr.bf16.mxu0 0
        %1318 = vmatpush1.bf16.msra.mxu0 0
        %1319 = vmatprep.subr.bf16.mxu0 0
        %1320 = vmatpush1.bf16.msra.mxu0 0
        %1321 = vmatprep.subr.bf16.mxu0 0
        %1322 = vmatpush1.bf16.msra.mxu0 0
        %1323 = vmatprep.subr.bf16.mxu0 0
        %1324 = vmatpush1.bf16.msra.mxu0 0
        %1325 = vmatprep.subr.bf16.mxu0 0
        %1326 = vmatpush1.bf16.msra.mxu0 0
        %1327 = vmatprep.subr.bf16.mxu0 0
        %1328 = vmatpush1.bf16.msra.mxu0 0
        %1329 = vmatprep.subr.bf16.mxu0 0
        %1330 = vmatpush1.bf16.msra.mxu0 0
        %1331 = vmatprep.subr.bf16.mxu0 0
        %1332 = vmatpush1.bf16.msra.mxu0 0
        %1333 = vmatprep.subr.bf16.mxu0 0
        %1334 = vmatpush1.bf16.msra.mxu0 0
        %1335 = vmatprep.subr.bf16.mxu0 0
        %1336 = vmatpush1.bf16.msra.mxu0 0
        %1337 = vmatprep.subr.bf16.mxu0 0
        %1338 = vmatpush1.bf16.msra.mxu0 0
        %1339 = vmatprep.subr.bf16.mxu0 0
        %1340 = vmatpush1.bf16.msra.mxu0 0
        %1341 = vmatprep.mubr.bf16.mxu0 0
        %1342 = vmatmul.mubr.bf16.gmra.mrb[0].mxu0 %v1298
        %v1343 = vpop.f32.mrb[0].mxu0
        %v1344 = vadd.f32 0.0, %v1343
        %v1345 = vpop.f32.mrb[0].mxu0
        %v1346 = vpop.f32.mrb[0].mxu0
        %v1347 = vadd.f32 0.0, %v1346
        %v1348 = vpop.f32.mrb[0].mxu0
        %1349 = vmatprep.mubr.bf16.mxu0 0
        %1350 = vmatmul.mubr.bf16.gmra.mrb[0].mxu0 %v1301
        %v1351 = vpop.f32.mrb[0].mxu0
        %v1352 = vadd.f32 0.0, %v1351
        %v1353 = vpop.f32.mrb[0].mxu0
        %v1354 = vpop.f32.mrb[0].mxu0
        %v1355 = vadd.f32 0.0, %v1354
        %v1356 = vpop.f32.mrb[0].mxu0
        %1357 = vmatprep.mubr.bf16.mxu0 0
        %1358 = vmatmul.mubr.bf16.gmra.mrb[0].mxu0 %v1304
        %v1359 = vpop.f32.mrb[0].mxu0
        %v1360 = vadd.f32 0.0, %v1359
        %v1361 = vpop.f32.mrb[0].mxu0
        %v1362 = vpop.f32.mrb[0].mxu0
        %v1363 = vadd.f32 0.0, %v1362
        %v1364 = vpop.f32.mrb[0].mxu0
        %1365 = vmatprep.mubr.bf16.mxu0 0
        %1366 = vmatmul.mubr.bf16.gmra.mrb[0].mxu0 %v1307
        %v1367 = vpop.f32.mrb[0].mxu0
        %v1368 = vadd.f32 0.0, %v1367
        %v1369 = vpop.f32.mrb[0].mxu0
        %v1370 = vpop.f32.mrb[0].mxu0
        %v1371 = vadd.f32 0.0, %v1370
        %v1372 = vpop.f32.mrb[0].mxu0
        %1373 = vdwg.mxu0
        %v1382 = vunpack.c.l.b16 %v731
        %v1383 = vunpack.c.l.b16 %v732
        %v1384 = vunpack.c.l.b16 %v733
        %v1385 = vunpack.c.l.b16 %v734
        %v1386 = vunpack.c.l.b16 %v735
        %v1387 = vunpack.c.l.b16 %v736
        %v1388 = vunpack.c.l.b16 %v737
        %v1389 = vunpack.c.l.b16 %v738
        %v1390 = vpack.c.b16 %v1383, %v1382
        %v1391 = vpack.c.b16 %v1385, %v1384
        %v1392 = vpack.c.b16 %v1387, %v1386
        %v1393 = vpack.c.b16 %v1389, %v1388
        %v1395 = vsel %vm1199, %v1390, 0
        %v1398 = vsel %vm1199, %v1391, 0
        %v1401 = vsel %vm1199, %v1392, 0
        %v1404 = vsel %vm1199, %v1393, 0
        %1406 = vmatprep.subr.bf16.mxu0 0
        %1407 = vmatpush1.bf16.msra.mxu0 %v1165
        %1408 = vmatprep.subr.bf16.mxu0 0
        %1409 = vmatpush1.bf16.msra.mxu0 0
        %1410 = vmatprep.subr.bf16.mxu0 0
        %1411 = vmatpush1.bf16.msra.mxu0 0
        %1412 = vmatprep.subr.bf16.mxu0 0
        %1413 = vmatpush1.bf16.msra.mxu0 0
        %1414 = vmatprep.subr.bf16.mxu0 0
        %1415 = vmatpush1.bf16.msra.mxu0 0
        %1416 = vmatprep.subr.bf16.mxu0 0
        %1417 = vmatpush1.bf16.msra.mxu0 0
        %1418 = vmatprep.subr.bf16.mxu0 0
        %1419 = vmatpush1.bf16.msra.mxu0 0
        %1420 = vmatprep.subr.bf16.mxu0 0
        %1421 = vmatpush1.bf16.msra.mxu0 0
        %1422 = vmatprep.subr.bf16.mxu0 0
        %1423 = vmatpush1.bf16.msra.mxu0 0
        %1424 = vmatprep.subr.bf16.mxu0 0
        %1425 = vmatpush1.bf16.msra.mxu0 0
        %1426 = vmatprep.subr.bf16.mxu0 0
        %1427 = vmatpush1.bf16.msra.mxu0 0
        %1428 = vmatprep.subr.bf16.mxu0 0
        %1429 = vmatpush1.bf16.msra.mxu0 0
        %1430 = vmatprep.subr.bf16.mxu0 0
        %1431 = vmatpush1.bf16.msra.mxu0 0
        %1432 = vmatprep.subr.bf16.mxu0 0
        %1433 = vmatpush1.bf16.msra.mxu0 0
        %1434 = vmatprep.subr.bf16.mxu0 0
        %1435 = vmatpush1.bf16.msra.mxu0 0
        %1436 = vmatprep.subr.bf16.mxu0 0
        %1437 = vmatpush1.bf16.msra.mxu0 0
        %1438 = vmatprep.mubr.bf16.mxu0 0
        %1439 = vmatmul.mubr.bf16.gmra.mrb[0].mxu0 %v1395
        %v1440 = vpop.f32.mrb[0].mxu0
        %v1441 = vadd.f32 0.0, %v1440
        %v1442 = vpop.f32.mrb[0].mxu0
        %v1443 = vpop.f32.mrb[0].mxu0
        %v1444 = vadd.f32 0.0, %v1443
        %v1445 = vpop.f32.mrb[0].mxu0
        %1446 = vmatprep.mubr.bf16.mxu0 0
        %1447 = vmatmul.mubr.bf16.gmra.mrb[0].mxu0 %v1398
        %v1448 = vpop.f32.mrb[0].mxu0
        %v1449 = vadd.f32 0.0, %v1448
        %v1450 = vpop.f32.mrb[0].mxu0
        %v1451 = vpop.f32.mrb[0].mxu0
        %v1452 = vadd.f32 0.0, %v1451
        %v1453 = vpop.f32.mrb[0].mxu0
        %1454 = vmatprep.mubr.bf16.mxu0 0
        %1455 = vmatmul.mubr.bf16.gmra.mrb[0].mxu0 %v1401
        %v1456 = vpop.f32.mrb[0].mxu0
        %v1457 = vadd.f32 0.0, %v1456
        %v1458 = vpop.f32.mrb[0].mxu0
        %v1459 = vpop.f32.mrb[0].mxu0
        %v1460 = vadd.f32 0.0, %v1459
        %v1461 = vpop.f32.mrb[0].mxu0
        %1462 = vmatprep.mubr.bf16.mxu0 0
        %1463 = vmatmul.mubr.bf16.gmra.mrb[0].mxu0 %v1404
        %v1464 = vpop.f32.mrb[0].mxu0
        %v1465 = vadd.f32 0.0, %v1464
        %v1466 = vpop.f32.mrb[0].mxu0
        %v1467 = vpop.f32.mrb[0].mxu0
        %v1468 = vadd.f32 0.0, %v1467
        %v1469 = vpop.f32.mrb[0].mxu0
        %1470 = vdwg.mxu0
        %v1479 = vunpack.c.l.b16 %v739
        %v1480 = vunpack.c.l.b16 %v740
        %v1481 = vunpack.c.l.b16 %v741
        %v1482 = vunpack.c.l.b16 %v742
        %v1483 = vunpack.c.l.b16 %v743
        %v1484 = vunpack.c.l.b16 %v744
        %v1485 = vunpack.c.l.b16 %v745
        %v1486 = vunpack.c.l.b16 %v746
        %v1487 = vpack.c.b16 %v1480, %v1479
        %v1488 = vpack.c.b16 %v1482, %v1481
        %v1489 = vpack.c.b16 %v1484, %v1483
        %v1490 = vpack.c.b16 %v1486, %v1485
        %v1492 = vsel %vm1199, %v1487, 0
        %v1495 = vsel %vm1199, %v1488, 0
        %v1498 = vsel %vm1199, %v1489, 0
        %v1501 = vsel %vm1199, %v1490, 0
        %1503 = vmatprep.subr.bf16.mxu0 0
        %1504 = vmatpush1.bf16.msra.mxu0 %v1166
        %1505 = vmatprep.subr.bf16.mxu0 0
        %1506 = vmatpush1.bf16.msra.mxu0 0
        %1507 = vmatprep.subr.bf16.mxu0 0
        %1508 = vmatpush1.bf16.msra.mxu0 0
        %1509 = vmatprep.subr.bf16.mxu0 0
        %1510 = vmatpush1.bf16.msra.mxu0 0
        %1511 = vmatprep.subr.bf16.mxu0 0
        %1512 = vmatpush1.bf16.msra.mxu0 0
        %1513 = vmatprep.subr.bf16.mxu0 0
        %1514 = vmatpush1.bf16.msra.mxu0 0
        %1515 = vmatprep.subr.bf16.mxu0 0
        %1516 = vmatpush1.bf16.msra.mxu0 0
        %1517 = vmatprep.subr.bf16.mxu0 0
        %1518 = vmatpush1.bf16.msra.mxu0 0
        %1519 = vmatprep.subr.bf16.mxu0 0
        %1520 = vmatpush1.bf16.msra.mxu0 0
        %1521 = vmatprep.subr.bf16.mxu0 0
        %1522 = vmatpush1.bf16.msra.mxu0 0
        %1523 = vmatprep.subr.bf16.mxu0 0
        %1524 = vmatpush1.bf16.msra.mxu0 0
        %1525 = vmatprep.subr.bf16.mxu0 0
        %1526 = vmatpush1.bf16.msra.mxu0 0
        %1527 = vmatprep.subr.bf16.mxu0 0
        %1528 = vmatpush1.bf16.msra.mxu0 0
        %1529 = vmatprep.subr.bf16.mxu0 0
        %1530 = vmatpush1.bf16.msra.mxu0 0
        %1531 = vmatprep.subr.bf16.mxu0 0
        %1532 = vmatpush1.bf16.msra.mxu0 0
        %1533 = vmatprep.subr.bf16.mxu0 0
        %1534 = vmatpush1.bf16.msra.mxu0 0
        %1535 = vmatprep.mubr.bf16.mxu0 0
        %1536 = vmatmul.mubr.bf16.gmra.mrb[0].mxu0 %v1492
        %v1537 = vpop.f32.mrb[0].mxu0
        %v1538 = vadd.f32 0.0, %v1537
        %v1539 = vpop.f32.mrb[0].mxu0
        %v1540 = vpop.f32.mrb[0].mxu0
        %v1541 = vadd.f32 0.0, %v1540
        %v1542 = vpop.f32.mrb[0].mxu0
        %1543 = vmatprep.mubr.bf16.mxu0 0
        %1544 = vmatmul.mubr.bf16.gmra.mrb[0].mxu0 %v1495
        %v1545 = vpop.f32.mrb[0].mxu0
        %v1546 = vadd.f32 0.0, %v1545
        %v1547 = vpop.f32.mrb[0].mxu0
        %v1548 = vpop.f32.mrb[0].mxu0
        %v1549 = vadd.f32 0.0, %v1548
        %v1550 = vpop.f32.mrb[0].mxu0
        %1551 = vmatprep.mubr.bf16.mxu0 0
        %1552 = vmatmul.mubr.bf16.gmra.mrb[0].mxu0 %v1498
        %v1553 = vpop.f32.mrb[0].mxu0
        %v1554 = vadd.f32 0.0, %v1553
        %v1555 = vpop.f32.mrb[0].mxu0
        %v1556 = vpop.f32.mrb[0].mxu0
        %v1557 = vadd.f32 0.0, %v1556
        %v1558 = vpop.f32.mrb[0].mxu0
        %1559 = vmatprep.mubr.bf16.mxu0 0
        %1560 = vmatmul.mubr.bf16.gmra.mrb[0].mxu0 %v1501
        %v1561 = vpop.f32.mrb[0].mxu0
        %v1562 = vadd.f32 0.0, %v1561
        %v1563 = vpop.f32.mrb[0].mxu0
        %v1564 = vpop.f32.mrb[0].mxu0
        %v1565 = vadd.f32 0.0, %v1564
        %v1566 = vpop.f32.mrb[0].mxu0
        %1567 = vdwg.mxu0
        %v1576 = vunpack.c.l.b16 %v747
        %v1577 = vunpack.c.l.b16 %v748
        %v1578 = vunpack.c.l.b16 %v749
        %v1579 = vunpack.c.l.b16 %v750
        %v1580 = vunpack.c.l.b16 %v751
        %v1581 = vunpack.c.l.b16 %v752
        %v1582 = vunpack.c.l.b16 %v753
        %v1583 = vunpack.c.l.b16 %v754
        %v1584 = vpack.c.b16 %v1577, %v1576
        %v1585 = vpack.c.b16 %v1579, %v1578
        %v1586 = vpack.c.b16 %v1581, %v1580
        %v1587 = vpack.c.b16 %v1583, %v1582
        %v1589 = vsel %vm1199, %v1584, 0
        %v1592 = vsel %vm1199, %v1585, 0
        %v1595 = vsel %vm1199, %v1586, 0
        %v1598 = vsel %vm1199, %v1587, 0
        %1600 = vmatprep.subr.bf16.mxu0 0
        %1601 = vmatpush1.bf16.msra.mxu0 %v1167
        %1602 = vmatprep.subr.bf16.mxu0 0
        %1603 = vmatpush1.bf16.msra.mxu0 0
        %1604 = vmatprep.subr.bf16.mxu0 0
        %1605 = vmatpush1.bf16.msra.mxu0 0
        %1606 = vmatprep.subr.bf16.mxu0 0
        %1607 = vmatpush1.bf16.msra.mxu0 0
        %1608 = vmatprep.subr.bf16.mxu0 0
        %1609 = vmatpush1.bf16.msra.mxu0 0
        %1610 = vmatprep.subr.bf16.mxu0 0
        %1611 = vmatpush1.bf16.msra.mxu0 0
        %1612 = vmatprep.subr.bf16.mxu0 0
        %1613 = vmatpush1.bf16.msra.mxu0 0
        %1614 = vmatprep.subr.bf16.mxu0 0
        %1615 = vmatpush1.bf16.msra.mxu0 0
        %1616 = vmatprep.subr.bf16.mxu0 0
        %1617 = vmatpush1.bf16.msra.mxu0 0
        %1618 = vmatprep.subr.bf16.mxu0 0
        %1619 = vmatpush1.bf16.msra.mxu0 0
        %1620 = vmatprep.subr.bf16.mxu0 0
        %1621 = vmatpush1.bf16.msra.mxu0 0
        %1622 = vmatprep.subr.bf16.mxu0 0
        %1623 = vmatpush1.bf16.msra.mxu0 0
        %1624 = vmatprep.subr.bf16.mxu0 0
        %1625 = vmatpush1.bf16.msra.mxu0 0
        %1626 = vmatprep.subr.bf16.mxu0 0
        %1627 = vmatpush1.bf16.msra.mxu0 0
        %1628 = vmatprep.subr.bf16.mxu0 0
        %1629 = vmatpush1.bf16.msra.mxu0 0
        %1630 = vmatprep.subr.bf16.mxu0 0
        %1631 = vmatpush1.bf16.msra.mxu0 0
        %1632 = vmatprep.mubr.bf16.mxu0 0
        %1633 = vmatmul.mubr.bf16.gmra.mrb[0].mxu0 %v1589
        %v1634 = vpop.f32.mrb[0].mxu0
        %v1635 = vadd.f32 0.0, %v1634
        %v1636 = vpop.f32.mrb[0].mxu0
        %v1637 = vpop.f32.mrb[0].mxu0
        %v1638 = vadd.f32 0.0, %v1637
        %v1639 = vpop.f32.mrb[0].mxu0
        %1640 = vmatprep.mubr.bf16.mxu0 0
        %1641 = vmatmul.mubr.bf16.gmra.mrb[0].mxu0 %v1592
        %v1642 = vpop.f32.mrb[0].mxu0
        %v1643 = vadd.f32 0.0, %v1642
        %v1644 = vpop.f32.mrb[0].mxu0
        %v1645 = vpop.f32.mrb[0].mxu0
        %v1646 = vadd.f32 0.0, %v1645
        %v1647 = vpop.f32.mrb[0].mxu0
        %1648 = vmatprep.mubr.bf16.mxu0 0
        %1649 = vmatmul.mubr.bf16.gmra.mrb[0].mxu0 %v1595
        %v1650 = vpop.f32.mrb[0].mxu0
        %v1651 = vadd.f32 0.0, %v1650
        %v1652 = vpop.f32.mrb[0].mxu0
        %v1653 = vpop.f32.mrb[0].mxu0
        %v1654 = vadd.f32 0.0, %v1653
        %v1655 = vpop.f32.mrb[0].mxu0
        %1656 = vmatprep.mubr.bf16.mxu0 0
        %1657 = vmatmul.mubr.bf16.gmra.mrb[0].mxu0 %v1598
        %v1658 = vpop.f32.mrb[0].mxu0
        %v1659 = vadd.f32 0.0, %v1658
        %v1660 = vpop.f32.mrb[0].mxu0
        %v1661 = vpop.f32.mrb[0].mxu0
        %v1662 = vadd.f32 0.0, %v1661
        %v1663 = vpop.f32.mrb[0].mxu0
        %1664 = vdwg.mxu0
        %v1673 = vunpack.c.l.b16 %v755
        %v1674 = vunpack.c.l.b16 %v756
        %v1675 = vunpack.c.l.b16 %v757
        %v1676 = vunpack.c.l.b16 %v758
        %v1677 = vunpack.c.l.b16 %v759
        %v1678 = vunpack.c.l.b16 %v760
        %v1679 = vunpack.c.l.b16 %v761
        %v1680 = vunpack.c.l.b16 %v762
        %v1681 = vpack.c.b16 %v1674, %v1673
        %v1682 = vpack.c.b16 %v1676, %v1675
        %v1683 = vpack.c.b16 %v1678, %v1677
        %v1684 = vpack.c.b16 %v1680, %v1679
        %v1686 = vsel %vm1199, %v1681, 0
        %v1689 = vsel %vm1199, %v1682, 0
        %v1692 = vsel %vm1199, %v1683, 0
        %v1695 = vsel %vm1199, %v1684, 0
        %1697 = vmatprep.subr.bf16.mxu0 0
        %1698 = vmatpush1.bf16.msra.mxu0 %v1168
        %1699 = vmatprep.subr.bf16.mxu0 0
        %1700 = vmatpush1.bf16.msra.mxu0 0
        %1701 = vmatprep.subr.bf16.mxu0 0
        %1702 = vmatpush1.bf16.msra.mxu0 0
        %1703 = vmatprep.subr.bf16.mxu0 0
        %1704 = vmatpush1.bf16.msra.mxu0 0
        %1705 = vmatprep.subr.bf16.mxu0 0
        %1706 = vmatpush1.bf16.msra.mxu0 0
        %1707 = vmatprep.subr.bf16.mxu0 0
        %1708 = vmatpush1.bf16.msra.mxu0 0
        %1709 = vmatprep.subr.bf16.mxu0 0
        %1710 = vmatpush1.bf16.msra.mxu0 0
        %1711 = vmatprep.subr.bf16.mxu0 0
        %1712 = vmatpush1.bf16.msra.mxu0 0
        %1713 = vmatprep.subr.bf16.mxu0 0
        %1714 = vmatpush1.bf16.msra.mxu0 0
        %1715 = vmatprep.subr.bf16.mxu0 0
        %1716 = vmatpush1.bf16.msra.mxu0 0
        %1717 = vmatprep.subr.bf16.mxu0 0
        %1718 = vmatpush1.bf16.msra.mxu0 0
        %1719 = vmatprep.subr.bf16.mxu0 0
        %1720 = vmatpush1.bf16.msra.mxu0 0
        %1721 = vmatprep.subr.bf16.mxu0 0
        %1722 = vmatpush1.bf16.msra.mxu0 0
        %1723 = vmatprep.subr.bf16.mxu0 0
        %1724 = vmatpush1.bf16.msra.mxu0 0
        %1725 = vmatprep.subr.bf16.mxu0 0
        %1726 = vmatpush1.bf16.msra.mxu0 0
        %1727 = vmatprep.subr.bf16.mxu0 0
        %1728 = vmatpush1.bf16.msra.mxu0 0
        %1729 = vmatprep.mubr.bf16.mxu0 0
        %1730 = vmatmul.mubr.bf16.gmra.mrb[0].mxu0 %v1686
        %v1731 = vpop.f32.mrb[0].mxu0
        %v1732 = vadd.f32 0.0, %v1731
        %v1733 = vpop.f32.mrb[0].mxu0
        %v1734 = vpop.f32.mrb[0].mxu0
        %v1735 = vadd.f32 0.0, %v1734
        %v1736 = vpop.f32.mrb[0].mxu0
        %1737 = vmatprep.mubr.bf16.mxu0 0
        %1738 = vmatmul.mubr.bf16.gmra.mrb[0].mxu0 %v1689
        %v1739 = vpop.f32.mrb[0].mxu0
        %v1740 = vadd.f32 0.0, %v1739
        %v1741 = vpop.f32.mrb[0].mxu0
        %v1742 = vpop.f32.mrb[0].mxu0
        %v1743 = vadd.f32 0.0, %v1742
        %v1744 = vpop.f32.mrb[0].mxu0
        %1745 = vmatprep.mubr.bf16.mxu0 0
        %1746 = vmatmul.mubr.bf16.gmra.mrb[0].mxu0 %v1692
        %v1747 = vpop.f32.mrb[0].mxu0
        %v1748 = vadd.f32 0.0, %v1747
        %v1749 = vpop.f32.mrb[0].mxu0
        %v1750 = vpop.f32.mrb[0].mxu0
        %v1751 = vadd.f32 0.0, %v1750
        %v1752 = vpop.f32.mrb[0].mxu0
        %1753 = vmatprep.mubr.bf16.mxu0 0
        %1754 = vmatmul.mubr.bf16.gmra.mrb[0].mxu0 %v1695
        %v1755 = vpop.f32.mrb[0].mxu0
        %v1756 = vadd.f32 0.0, %v1755
        %v1757 = vpop.f32.mrb[0].mxu0
        %v1758 = vpop.f32.mrb[0].mxu0
        %v1759 = vadd.f32 0.0, %v1758
        %v1760 = vpop.f32.mrb[0].mxu0
        %1761 = vdwg.mxu0
        %v1770 = vunpack.c.l.b16 %v763
        %v1771 = vunpack.c.l.b16 %v764
        %v1772 = vunpack.c.l.b16 %v765
        %v1773 = vunpack.c.l.b16 %v766
        %v1774 = vunpack.c.l.b16 %v767
        %v1775 = vunpack.c.l.b16 %v768
        %v1776 = vunpack.c.l.b16 %v769
        %v1777 = vunpack.c.l.b16 %v770
        %v1778 = vpack.c.b16 %v1771, %v1770
        %v1779 = vpack.c.b16 %v1773, %v1772
        %v1780 = vpack.c.b16 %v1775, %v1774
        %v1781 = vpack.c.b16 %v1777, %v1776
        %v1783 = vsel %vm1199, %v1778, 0
        %v1786 = vsel %vm1199, %v1779, 0
        %v1789 = vsel %vm1199, %v1780, 0
        %v1792 = vsel %vm1199, %v1781, 0
        %1794 = vmatprep.subr.bf16.mxu0 0
        %1795 = vmatpush1.bf16.msra.mxu0 %v1169
        %1796 = vmatprep.subr.bf16.mxu0 0
        %1797 = vmatpush1.bf16.msra.mxu0 0
        %1798 = vmatprep.subr.bf16.mxu0 0
        %1799 = vmatpush1.bf16.msra.mxu0 0
        %1800 = vmatprep.subr.bf16.mxu0 0
        %1801 = vmatpush1.bf16.msra.mxu0 0
        %1802 = vmatprep.subr.bf16.mxu0 0
        %1803 = vmatpush1.bf16.msra.mxu0 0
        %1804 = vmatprep.subr.bf16.mxu0 0
        %1805 = vmatpush1.bf16.msra.mxu0 0
        %1806 = vmatprep.subr.bf16.mxu0 0
        %1807 = vmatpush1.bf16.msra.mxu0 0
        %1808 = vmatprep.subr.bf16.mxu0 0
        %1809 = vmatpush1.bf16.msra.mxu0 0
        %1810 = vmatprep.subr.bf16.mxu0 0
        %1811 = vmatpush1.bf16.msra.mxu0 0
        %1812 = vmatprep.subr.bf16.mxu0 0
        %1813 = vmatpush1.bf16.msra.mxu0 0
        %1814 = vmatprep.subr.bf16.mxu0 0
        %1815 = vmatpush1.bf16.msra.mxu0 0
        %1816 = vmatprep.subr.bf16.mxu0 0
        %1817 = vmatpush1.bf16.msra.mxu0 0
        %1818 = vmatprep.subr.bf16.mxu0 0
        %1819 = vmatpush1.bf16.msra.mxu0 0
        %1820 = vmatprep.subr.bf16.mxu0 0
        %1821 = vmatpush1.bf16.msra.mxu0 0
        %1822 = vmatprep.subr.bf16.mxu0 0
        %1823 = vmatpush1.bf16.msra.mxu0 0
        %1824 = vmatprep.subr.bf16.mxu0 0
        %1825 = vmatpush1.bf16.msra.mxu0 0
        %1826 = vmatprep.mubr.bf16.mxu0 0
        %1827 = vmatmul.mubr.bf16.gmra.mrb[0].mxu0 %v1783
        %v1828 = vpop.f32.mrb[0].mxu0
        %v1829 = vadd.f32 0.0, %v1828
        %v1830 = vpop.f32.mrb[0].mxu0
        %v1831 = vpop.f32.mrb[0].mxu0
        %v1832 = vadd.f32 0.0, %v1831
        %v1833 = vpop.f32.mrb[0].mxu0
        %1834 = vmatprep.mubr.bf16.mxu0 0
        %1835 = vmatmul.mubr.bf16.gmra.mrb[0].mxu0 %v1786
        %v1836 = vpop.f32.mrb[0].mxu0
        %v1837 = vadd.f32 0.0, %v1836
        %v1838 = vpop.f32.mrb[0].mxu0
        %v1839 = vpop.f32.mrb[0].mxu0
        %v1840 = vadd.f32 0.0, %v1839
        %v1841 = vpop.f32.mrb[0].mxu0
        %1842 = vmatprep.mubr.bf16.mxu0 0
        %1843 = vmatmul.mubr.bf16.gmra.mrb[0].mxu0 %v1789
        %v1844 = vpop.f32.mrb[0].mxu0
        %v1845 = vadd.f32 0.0, %v1844
        %v1846 = vpop.f32.mrb[0].mxu0
        %v1847 = vpop.f32.mrb[0].mxu0
        %v1848 = vadd.f32 0.0, %v1847
        %v1849 = vpop.f32.mrb[0].mxu0
        %1850 = vmatprep.mubr.bf16.mxu0 0
        %1851 = vmatmul.mubr.bf16.gmra.mrb[0].mxu0 %v1792
        %v1852 = vpop.f32.mrb[0].mxu0
        %v1853 = vadd.f32 0.0, %v1852
        %v1854 = vpop.f32.mrb[0].mxu0
        %v1855 = vpop.f32.mrb[0].mxu0
        %v1856 = vadd.f32 0.0, %v1855
        %v1857 = vpop.f32.mrb[0].mxu0
        %1858 = vdwg.mxu0
        %v1867 = vunpack.c.l.b16 %v771
        %v1868 = vunpack.c.l.b16 %v772
        %v1869 = vunpack.c.l.b16 %v773
        %v1870 = vunpack.c.l.b16 %v774
        %v1871 = vunpack.c.l.b16 %v775
        %v1872 = vunpack.c.l.b16 %v776
        %v1873 = vunpack.c.l.b16 %v777
        %v1874 = vunpack.c.l.b16 %v778
        %v1875 = vpack.c.b16 %v1868, %v1867
        %v1876 = vpack.c.b16 %v1870, %v1869
        %v1877 = vpack.c.b16 %v1872, %v1871
        %v1878 = vpack.c.b16 %v1874, %v1873
        %v1880 = vsel %vm1199, %v1875, 0
        %v1883 = vsel %vm1199, %v1876, 0
        %v1886 = vsel %vm1199, %v1877, 0
        %v1889 = vsel %vm1199, %v1878, 0
        %1891 = vmatprep.subr.bf16.mxu0 0
        %1892 = vmatpush1.bf16.msra.mxu0 %v1170
        %1893 = vmatprep.subr.bf16.mxu0 0
        %1894 = vmatpush1.bf16.msra.mxu0 0
        %1895 = vmatprep.subr.bf16.mxu0 0
        %1896 = vmatpush1.bf16.msra.mxu0 0
        %1897 = vmatprep.subr.bf16.mxu0 0
        %1898 = vmatpush1.bf16.msra.mxu0 0
        %1899 = vmatprep.subr.bf16.mxu0 0
        %1900 = vmatpush1.bf16.msra.mxu0 0
        %1901 = vmatprep.subr.bf16.mxu0 0
        %1902 = vmatpush1.bf16.msra.mxu0 0
        %1903 = vmatprep.subr.bf16.mxu0 0
        %1904 = vmatpush1.bf16.msra.mxu0 0
        %1905 = vmatprep.subr.bf16.mxu0 0
        %1906 = vmatpush1.bf16.msra.mxu0 0
        %1907 = vmatprep.subr.bf16.mxu0 0
        %1908 = vmatpush1.bf16.msra.mxu0 0
        %1909 = vmatprep.subr.bf16.mxu0 0
        %1910 = vmatpush1.bf16.msra.mxu0 0
        %1911 = vmatprep.subr.bf16.mxu0 0
        %1912 = vmatpush1.bf16.msra.mxu0 0
        %1913 = vmatprep.subr.bf16.mxu0 0
        %1914 = vmatpush1.bf16.msra.mxu0 0
        %1915 = vmatprep.subr.bf16.mxu0 0
        %1916 = vmatpush1.bf16.msra.mxu0 0
        %1917 = vmatprep.subr.bf16.mxu0 0
        %1918 = vmatpush1.bf16.msra.mxu0 0
        %1919 = vmatprep.subr.bf16.mxu0 0
        %1920 = vmatpush1.bf16.msra.mxu0 0
        %1921 = vmatprep.subr.bf16.mxu0 0
        %1922 = vmatpush1.bf16.msra.mxu0 0
        %1923 = vmatprep.mubr.bf16.mxu0 0
        %1924 = vmatmul.mubr.bf16.gmra.mrb[0].mxu0 %v1880
        %v1925 = vpop.f32.mrb[0].mxu0
        %v1926 = vadd.f32 0.0, %v1925
        %v1927 = vpop.f32.mrb[0].mxu0
        %v1928 = vpop.f32.mrb[0].mxu0
        %v1929 = vadd.f32 0.0, %v1928
        %v1930 = vpop.f32.mrb[0].mxu0
        %1931 = vmatprep.mubr.bf16.mxu0 0
        %1932 = vmatmul.mubr.bf16.gmra.mrb[0].mxu0 %v1883
        %v1933 = vpop.f32.mrb[0].mxu0
        %v1934 = vadd.f32 0.0, %v1933
        %v1935 = vpop.f32.mrb[0].mxu0
        %v1936 = vpop.f32.mrb[0].mxu0
        %v1937 = vadd.f32 0.0, %v1936
        %v1938 = vpop.f32.mrb[0].mxu0
        %1939 = vmatprep.mubr.bf16.mxu0 0
        %1940 = vmatmul.mubr.bf16.gmra.mrb[0].mxu0 %v1886
        %v1941 = vpop.f32.mrb[0].mxu0
        %v1942 = vadd.f32 0.0, %v1941
        %v1943 = vpop.f32.mrb[0].mxu0
        %v1944 = vpop.f32.mrb[0].mxu0
        %v1945 = vadd.f32 0.0, %v1944
        %v1946 = vpop.f32.mrb[0].mxu0
        %1947 = vmatprep.mubr.bf16.mxu0 0
        %1948 = vmatmul.mubr.bf16.gmra.mrb[0].mxu0 %v1889
        %v1949 = vpop.f32.mrb[0].mxu0
        %v1950 = vadd.f32 0.0, %v1949
        %v1951 = vpop.f32.mrb[0].mxu0
        %v1952 = vpop.f32.mrb[0].mxu0
        %v1953 = vadd.f32 0.0, %v1952
        %v1954 = vpop.f32.mrb[0].mxu0
        %1955 = vdwg.mxu0
        %v1964 = vunpack.c.l.b16 %v779
        %v1965 = vunpack.c.l.b16 %v780
        %v1966 = vunpack.c.l.b16 %v781
        %v1967 = vunpack.c.l.b16 %v782
        %v1968 = vunpack.c.l.b16 %v783
        %v1969 = vunpack.c.l.b16 %v784
        %v1970 = vunpack.c.l.b16 %v785
        %v1971 = vunpack.c.l.b16 %v786
        %v1972 = vpack.c.b16 %v1965, %v1964
        %v1973 = vpack.c.b16 %v1967, %v1966
        %v1974 = vpack.c.b16 %v1969, %v1968
        %v1975 = vpack.c.b16 %v1971, %v1970
        %v1977 = vsel %vm1199, %v1972, 0
        %v1980 = vsel %vm1199, %v1973, 0
        %v1983 = vsel %vm1199, %v1974, 0
        %v1986 = vsel %vm1199, %v1975, 0
        %1988 = vmatprep.subr.bf16.mxu0 0
        %1989 = vmatpush1.bf16.msra.mxu0 %v1171
        %1990 = vmatprep.subr.bf16.mxu0 0
        %1991 = vmatpush1.bf16.msra.mxu0 0
        %1992 = vmatprep.subr.bf16.mxu0 0
        %1993 = vmatpush1.bf16.msra.mxu0 0
        %1994 = vmatprep.subr.bf16.mxu0 0
        %1995 = vmatpush1.bf16.msra.mxu0 0
        %1996 = vmatprep.subr.bf16.mxu0 0
        %1997 = vmatpush1.bf16.msra.mxu0 0
        %1998 = vmatprep.subr.bf16.mxu0 0
        %1999 = vmatpush1.bf16.msra.mxu0 0
        %2000 = vmatprep.subr.bf16.mxu0 0
        %2001 = vmatpush1.bf16.msra.mxu0 0
        %2002 = vmatprep.subr.bf16.mxu0 0
        %2003 = vmatpush1.bf16.msra.mxu0 0
        %2004 = vmatprep.subr.bf16.mxu0 0
        %2005 = vmatpush1.bf16.msra.mxu0 0
        %2006 = vmatprep.subr.bf16.mxu0 0
        %2007 = vmatpush1.bf16.msra.mxu0 0
        %2008 = vmatprep.subr.bf16.mxu0 0
        %2009 = vmatpush1.bf16.msra.mxu0 0
        %2010 = vmatprep.subr.bf16.mxu0 0
        %2011 = vmatpush1.bf16.msra.mxu0 0
        %2012 = vmatprep.subr.bf16.mxu0 0
        %2013 = vmatpush1.bf16.msra.mxu0 0
        %2014 = vmatprep.subr.bf16.mxu0 0
        %2015 = vmatpush1.bf16.msra.mxu0 0
        %2016 = vmatprep.subr.bf16.mxu0 0
        %2017 = vmatpush1.bf16.msra.mxu0 0
        %2018 = vmatprep.subr.bf16.mxu0 0
        %2019 = vmatpush1.bf16.msra.mxu0 0
        %2020 = vmatprep.mubr.bf16.mxu0 0
        %2021 = vmatmul.mubr.bf16.gmra.mrb[0].mxu0 %v1977
        %v2022 = vpop.f32.mrb[0].mxu0
        %v2023 = vadd.f32 0.0, %v2022
        %v2024 = vpop.f32.mrb[0].mxu0
        %v2025 = vpop.f32.mrb[0].mxu0
        %v2026 = vadd.f32 0.0, %v2025
        %v2027 = vpop.f32.mrb[0].mxu0
        %2028 = vmatprep.mubr.bf16.mxu0 0
        %2029 = vmatmul.mubr.bf16.gmra.mrb[0].mxu0 %v1980
        %v2030 = vpop.f32.mrb[0].mxu0
        %v2031 = vadd.f32 0.0, %v2030
        %v2032 = vpop.f32.mrb[0].mxu0
        %v2033 = vpop.f32.mrb[0].mxu0
        %v2034 = vadd.f32 0.0, %v2033
        %v2035 = vpop.f32.mrb[0].mxu0
        %2036 = vmatprep.mubr.bf16.mxu0 0
        %2037 = vmatmul.mubr.bf16.gmra.mrb[0].mxu0 %v1983
        %v2038 = vpop.f32.mrb[0].mxu0
        %v2039 = vadd.f32 0.0, %v2038
        %v2040 = vpop.f32.mrb[0].mxu0
        %v2041 = vpop.f32.mrb[0].mxu0
        %v2042 = vadd.f32 0.0, %v2041
        %v2043 = vpop.f32.mrb[0].mxu0
        %2044 = vmatprep.mubr.bf16.mxu0 0
        %2045 = vmatmul.mubr.bf16.gmra.mrb[0].mxu0 %v1986
        %v2046 = vpop.f32.mrb[0].mxu0
        %v2047 = vadd.f32 0.0, %v2046
        %v2048 = vpop.f32.mrb[0].mxu0
        %v2049 = vpop.f32.mrb[0].mxu0
        %v2050 = vadd.f32 0.0, %v2049
        %v2051 = vpop.f32.mrb[0].mxu0
        %2052 = vdwg.mxu0
        %v2061 = vunpack.c.l.b16 %v787
        %v2062 = vunpack.c.l.b16 %v788
        %v2063 = vunpack.c.l.b16 %v789
        %v2064 = vunpack.c.l.b16 %v790
        %v2065 = vunpack.c.l.b16 %v791
        %v2066 = vunpack.c.l.b16 %v792
        %v2067 = vunpack.c.l.b16 %v793
        %v2068 = vunpack.c.l.b16 %v794
        %v2069 = vpack.c.b16 %v2062, %v2061
        %v2070 = vpack.c.b16 %v2064, %v2063
        %v2071 = vpack.c.b16 %v2066, %v2065
        %v2072 = vpack.c.b16 %v2068, %v2067
        %v2074 = vsel %vm1199, %v2069, 0
        %v2077 = vsel %vm1199, %v2070, 0
        %v2080 = vsel %vm1199, %v2071, 0
        %v2083 = vsel %vm1199, %v2072, 0
        %2085 = vmatprep.subr.bf16.mxu0 0
        %2086 = vmatpush1.bf16.msra.mxu0 %v1172
        %2087 = vmatprep.subr.bf16.mxu0 0
        %2088 = vmatpush1.bf16.msra.mxu0 0
        %2089 = vmatprep.subr.bf16.mxu0 0
        %2090 = vmatpush1.bf16.msra.mxu0 0
        %2091 = vmatprep.subr.bf16.mxu0 0
        %2092 = vmatpush1.bf16.msra.mxu0 0
        %2093 = vmatprep.subr.bf16.mxu0 0
        %2094 = vmatpush1.bf16.msra.mxu0 0
        %2095 = vmatprep.subr.bf16.mxu0 0
        %2096 = vmatpush1.bf16.msra.mxu0 0
        %2097 = vmatprep.subr.bf16.mxu0 0
        %2098 = vmatpush1.bf16.msra.mxu0 0
        %2099 = vmatprep.subr.bf16.mxu0 0
        %2100 = vmatpush1.bf16.msra.mxu0 0
        %2101 = vmatprep.subr.bf16.mxu0 0
        %2102 = vmatpush1.bf16.msra.mxu0 0
        %2103 = vmatprep.subr.bf16.mxu0 0
        %2104 = vmatpush1.bf16.msra.mxu0 0
        %2105 = vmatprep.subr.bf16.mxu0 0
        %2106 = vmatpush1.bf16.msra.mxu0 0
        %2107 = vmatprep.subr.bf16.mxu0 0
        %2108 = vmatpush1.bf16.msra.mxu0 0
        %2109 = vmatprep.subr.bf16.mxu0 0
        %2110 = vmatpush1.bf16.msra.mxu0 0
        %2111 = vmatprep.subr.bf16.mxu0 0
        %2112 = vmatpush1.bf16.msra.mxu0 0
        %2113 = vmatprep.subr.bf16.mxu0 0
        %2114 = vmatpush1.bf16.msra.mxu0 0
        %2115 = vmatprep.subr.bf16.mxu0 0
        %2116 = vmatpush1.bf16.msra.mxu0 0
        %2117 = vmatprep.mubr.bf16.mxu0 0
        %2118 = vmatmul.mubr.bf16.gmra.mrb[0].mxu0 %v2074
        %v2119 = vpop.f32.mrb[0].mxu0
        %v2120 = vadd.f32 0.0, %v2119
        %v2121 = vpop.f32.mrb[0].mxu0
        %v2122 = vpop.f32.mrb[0].mxu0
        %v2123 = vadd.f32 0.0, %v2122
        %v2124 = vpop.f32.mrb[0].mxu0
        %2125 = vmatprep.mubr.bf16.mxu0 0
        %2126 = vmatmul.mubr.bf16.gmra.mrb[0].mxu0 %v2077
        %v2127 = vpop.f32.mrb[0].mxu0
        %v2128 = vadd.f32 0.0, %v2127
        %v2129 = vpop.f32.mrb[0].mxu0
        %v2130 = vpop.f32.mrb[0].mxu0
        %v2131 = vadd.f32 0.0, %v2130
        %v2132 = vpop.f32.mrb[0].mxu0
        %2133 = vmatprep.mubr.bf16.mxu0 0
        %2134 = vmatmul.mubr.bf16.gmra.mrb[0].mxu0 %v2080
        %v2135 = vpop.f32.mrb[0].mxu0
        %v2136 = vadd.f32 0.0, %v2135
        %v2137 = vpop.f32.mrb[0].mxu0
        %v2138 = vpop.f32.mrb[0].mxu0
        %v2139 = vadd.f32 0.0, %v2138
        %v2140 = vpop.f32.mrb[0].mxu0
        %2141 = vmatprep.mubr.bf16.mxu0 0
        %2142 = vmatmul.mubr.bf16.gmra.mrb[0].mxu0 %v2083
        %v2143 = vpop.f32.mrb[0].mxu0
        %v2144 = vadd.f32 0.0, %v2143
        %v2145 = vpop.f32.mrb[0].mxu0
        %v2146 = vpop.f32.mrb[0].mxu0
        %v2147 = vadd.f32 0.0, %v2146
        %v2148 = vpop.f32.mrb[0].mxu0
        %2149 = vdwg.mxu0
        %v2158 = vunpack.c.l.b16 %v795
        %v2159 = vunpack.c.l.b16 %v796
        %v2160 = vunpack.c.l.b16 %v797
        %v2161 = vunpack.c.l.b16 %v798
        %v2162 = vunpack.c.l.b16 %v799
        %v2163 = vunpack.c.l.b16 %v800
        %v2164 = vunpack.c.l.b16 %v801
        %v2165 = vunpack.c.l.b16 %v802
        %v2166 = vpack.c.b16 %v2159, %v2158
        %v2167 = vpack.c.b16 %v2161, %v2160
        %v2168 = vpack.c.b16 %v2163, %v2162
        %v2169 = vpack.c.b16 %v2165, %v2164
        %v2171 = vsel %vm1199, %v2166, 0
        %v2174 = vsel %vm1199, %v2167, 0
        %v2177 = vsel %vm1199, %v2168, 0
        %v2180 = vsel %vm1199, %v2169, 0
        %2182 = vmatprep.subr.bf16.mxu0 0
        %2183 = vmatpush1.bf16.msra.mxu0 %v1173
        %2184 = vmatprep.subr.bf16.mxu0 0
        %2185 = vmatpush1.bf16.msra.mxu0 0
        %2186 = vmatprep.subr.bf16.mxu0 0
        %2187 = vmatpush1.bf16.msra.mxu0 0
        %2188 = vmatprep.subr.bf16.mxu0 0
        %2189 = vmatpush1.bf16.msra.mxu0 0
        %2190 = vmatprep.subr.bf16.mxu0 0
        %2191 = vmatpush1.bf16.msra.mxu0 0
        %2192 = vmatprep.subr.bf16.mxu0 0
        %2193 = vmatpush1.bf16.msra.mxu0 0
        %2194 = vmatprep.subr.bf16.mxu0 0
        %2195 = vmatpush1.bf16.msra.mxu0 0
        %2196 = vmatprep.subr.bf16.mxu0 0
        %2197 = vmatpush1.bf16.msra.mxu0 0
        %2198 = vmatprep.subr.bf16.mxu0 0
        %2199 = vmatpush1.bf16.msra.mxu0 0
        %2200 = vmatprep.subr.bf16.mxu0 0
        %2201 = vmatpush1.bf16.msra.mxu0 0
        %2202 = vmatprep.subr.bf16.mxu0 0
        %2203 = vmatpush1.bf16.msra.mxu0 0
        %2204 = vmatprep.subr.bf16.mxu0 0
        %2205 = vmatpush1.bf16.msra.mxu0 0
        %2206 = vmatprep.subr.bf16.mxu0 0
        %2207 = vmatpush1.bf16.msra.mxu0 0
        %2208 = vmatprep.subr.bf16.mxu0 0
        %2209 = vmatpush1.bf16.msra.mxu0 0
        %2210 = vmatprep.subr.bf16.mxu0 0
        %2211 = vmatpush1.bf16.msra.mxu0 0
        %2212 = vmatprep.subr.bf16.mxu0 0
        %2213 = vmatpush1.bf16.msra.mxu0 0
        %2214 = vmatprep.mubr.bf16.mxu0 0
        %2215 = vmatmul.mubr.bf16.gmra.mrb[0].mxu0 %v2171
        %v2216 = vpop.f32.mrb[0].mxu0
        %v2217 = vadd.f32 0.0, %v2216
        %v2218 = vpop.f32.mrb[0].mxu0
        %v2219 = vpop.f32.mrb[0].mxu0
        %v2220 = vadd.f32 0.0, %v2219
        %v2221 = vpop.f32.mrb[0].mxu0
        %2222 = vmatprep.mubr.bf16.mxu0 0
        %2223 = vmatmul.mubr.bf16.gmra.mrb[0].mxu0 %v2174
        %v2224 = vpop.f32.mrb[0].mxu0
        %v2225 = vadd.f32 0.0, %v2224
        %v2226 = vpop.f32.mrb[0].mxu0
        %v2227 = vpop.f32.mrb[0].mxu0
        %v2228 = vadd.f32 0.0, %v2227
        %v2229 = vpop.f32.mrb[0].mxu0
        %2230 = vmatprep.mubr.bf16.mxu0 0
        %2231 = vmatmul.mubr.bf16.gmra.mrb[0].mxu0 %v2177
        %v2232 = vpop.f32.mrb[0].mxu0
        %v2233 = vadd.f32 0.0, %v2232
        %v2234 = vpop.f32.mrb[0].mxu0
        %v2235 = vpop.f32.mrb[0].mxu0
        %v2236 = vadd.f32 0.0, %v2235
        %v2237 = vpop.f32.mrb[0].mxu0
        %2238 = vmatprep.mubr.bf16.mxu0 0
        %2239 = vmatmul.mubr.bf16.gmra.mrb[0].mxu0 %v2180
        %v2240 = vpop.f32.mrb[0].mxu0
        %v2241 = vadd.f32 0.0, %v2240
        %v2242 = vpop.f32.mrb[0].mxu0
        %v2243 = vpop.f32.mrb[0].mxu0
        %v2244 = vadd.f32 0.0, %v2243
        %v2245 = vpop.f32.mrb[0].mxu0
        %2246 = vdwg.mxu0
        %v2255 = vunpack.c.l.b16 %v803
        %v2256 = vunpack.c.l.b16 %v804
        %v2257 = vunpack.c.l.b16 %v805
        %v2258 = vunpack.c.l.b16 %v806
        %v2259 = vunpack.c.l.b16 %v807
        %v2260 = vunpack.c.l.b16 %v808
        %v2261 = vunpack.c.l.b16 %v809
        %v2262 = vunpack.c.l.b16 %v810
        %v2263 = vpack.c.b16 %v2256, %v2255
        %v2264 = vpack.c.b16 %v2258, %v2257
        %v2265 = vpack.c.b16 %v2260, %v2259
        %v2266 = vpack.c.b16 %v2262, %v2261
        %v2268 = vsel %vm1199, %v2263, 0
        %v2271 = vsel %vm1199, %v2264, 0
        %v2274 = vsel %vm1199, %v2265, 0
        %v2277 = vsel %vm1199, %v2266, 0
        %2279 = vmatprep.subr.bf16.mxu0 0
        %2280 = vmatpush1.bf16.msra.mxu0 %v1174
        %2281 = vmatprep.subr.bf16.mxu0 0
        %2282 = vmatpush1.bf16.msra.mxu0 0
        %2283 = vmatprep.subr.bf16.mxu0 0
        %2284 = vmatpush1.bf16.msra.mxu0 0
        %2285 = vmatprep.subr.bf16.mxu0 0
        %2286 = vmatpush1.bf16.msra.mxu0 0
        %2287 = vmatprep.subr.bf16.mxu0 0
        %2288 = vmatpush1.bf16.msra.mxu0 0
        %2289 = vmatprep.subr.bf16.mxu0 0
        %2290 = vmatpush1.bf16.msra.mxu0 0
        %2291 = vmatprep.subr.bf16.mxu0 0
        %2292 = vmatpush1.bf16.msra.mxu0 0
        %2293 = vmatprep.subr.bf16.mxu0 0
        %2294 = vmatpush1.bf16.msra.mxu0 0
        %2295 = vmatprep.subr.bf16.mxu0 0
        %2296 = vmatpush1.bf16.msra.mxu0 0
        %2297 = vmatprep.subr.bf16.mxu0 0
        %2298 = vmatpush1.bf16.msra.mxu0 0
        %2299 = vmatprep.subr.bf16.mxu0 0
        %2300 = vmatpush1.bf16.msra.mxu0 0
        %2301 = vmatprep.subr.bf16.mxu0 0
        %2302 = vmatpush1.bf16.msra.mxu0 0
        %2303 = vmatprep.subr.bf16.mxu0 0
        %2304 = vmatpush1.bf16.msra.mxu0 0
        %2305 = vmatprep.subr.bf16.mxu0 0
        %2306 = vmatpush1.bf16.msra.mxu0 0
        %2307 = vmatprep.subr.bf16.mxu0 0
        %2308 = vmatpush1.bf16.msra.mxu0 0
        %2309 = vmatprep.subr.bf16.mxu0 0
        %2310 = vmatpush1.bf16.msra.mxu0 0
        %2311 = vmatprep.mubr.bf16.mxu0 0
        %2312 = vmatmul.mubr.bf16.gmra.mrb[0].mxu0 %v2268
        %v2313 = vpop.f32.mrb[0].mxu0
        %v2314 = vadd.f32 0.0, %v2313
        %v2315 = vpop.f32.mrb[0].mxu0
        %v2316 = vpop.f32.mrb[0].mxu0
        %v2317 = vadd.f32 0.0, %v2316
        %v2318 = vpop.f32.mrb[0].mxu0
        %2319 = vmatprep.mubr.bf16.mxu0 0
        %2320 = vmatmul.mubr.bf16.gmra.mrb[0].mxu0 %v2271
        %v2321 = vpop.f32.mrb[0].mxu0
        %v2322 = vadd.f32 0.0, %v2321
        %v2323 = vpop.f32.mrb[0].mxu0
        %v2324 = vpop.f32.mrb[0].mxu0
        %v2325 = vadd.f32 0.0, %v2324
        %v2326 = vpop.f32.mrb[0].mxu0
        %2327 = vmatprep.mubr.bf16.mxu0 0
        %2328 = vmatmul.mubr.bf16.gmra.mrb[0].mxu0 %v2274
        %v2329 = vpop.f32.mrb[0].mxu0
        %v2330 = vadd.f32 0.0, %v2329
        %v2331 = vpop.f32.mrb[0].mxu0
        %v2332 = vpop.f32.mrb[0].mxu0
        %v2333 = vadd.f32 0.0, %v2332
        %v2334 = vpop.f32.mrb[0].mxu0
        %2335 = vmatprep.mubr.bf16.mxu0 0
        %2336 = vmatmul.mubr.bf16.gmra.mrb[0].mxu0 %v2277
        %v2337 = vpop.f32.mrb[0].mxu0
        %v2338 = vadd.f32 0.0, %v2337
        %v2339 = vpop.f32.mrb[0].mxu0
        %v2340 = vpop.f32.mrb[0].mxu0
        %v2341 = vadd.f32 0.0, %v2340
        %v2342 = vpop.f32.mrb[0].mxu0
        %2343 = vdwg.mxu0
        %v2352 = vunpack.c.l.b16 %v811
        %v2353 = vunpack.c.l.b16 %v812
        %v2354 = vunpack.c.l.b16 %v813
        %v2355 = vunpack.c.l.b16 %v814
        %v2356 = vunpack.c.l.b16 %v815
        %v2357 = vunpack.c.l.b16 %v816
        %v2358 = vunpack.c.l.b16 %v817
        %v2359 = vunpack.c.l.b16 %v818
        %v2360 = vpack.c.b16 %v2353, %v2352
        %v2361 = vpack.c.b16 %v2355, %v2354
        %v2362 = vpack.c.b16 %v2357, %v2356
        %v2363 = vpack.c.b16 %v2359, %v2358
        %v2365 = vsel %vm1199, %v2360, 0
        %v2368 = vsel %vm1199, %v2361, 0
        %v2371 = vsel %vm1199, %v2362, 0
        %v2374 = vsel %vm1199, %v2363, 0
        %2376 = vmatprep.subr.bf16.mxu0 0
        %2377 = vmatpush1.bf16.msra.mxu0 %v1175
        %2378 = vmatprep.subr.bf16.mxu0 0
        %2379 = vmatpush1.bf16.msra.mxu0 0
        %2380 = vmatprep.subr.bf16.mxu0 0
        %2381 = vmatpush1.bf16.msra.mxu0 0
        %2382 = vmatprep.subr.bf16.mxu0 0
        %2383 = vmatpush1.bf16.msra.mxu0 0
        %2384 = vmatprep.subr.bf16.mxu0 0
        %2385 = vmatpush1.bf16.msra.mxu0 0
        %2386 = vmatprep.subr.bf16.mxu0 0
        %2387 = vmatpush1.bf16.msra.mxu0 0
        %2388 = vmatprep.subr.bf16.mxu0 0
        %2389 = vmatpush1.bf16.msra.mxu0 0
        %2390 = vmatprep.subr.bf16.mxu0 0
        %2391 = vmatpush1.bf16.msra.mxu0 0
        %2392 = vmatprep.subr.bf16.mxu0 0
        %2393 = vmatpush1.bf16.msra.mxu0 0
        %2394 = vmatprep.subr.bf16.mxu0 0
        %2395 = vmatpush1.bf16.msra.mxu0 0
        %2396 = vmatprep.subr.bf16.mxu0 0
        %2397 = vmatpush1.bf16.msra.mxu0 0
        %2398 = vmatprep.subr.bf16.mxu0 0
        %2399 = vmatpush1.bf16.msra.mxu0 0
        %2400 = vmatprep.subr.bf16.mxu0 0
        %2401 = vmatpush1.bf16.msra.mxu0 0
        %2402 = vmatprep.subr.bf16.mxu0 0
        %2403 = vmatpush1.bf16.msra.mxu0 0
        %2404 = vmatprep.subr.bf16.mxu0 0
        %2405 = vmatpush1.bf16.msra.mxu0 0
        %2406 = vmatprep.subr.bf16.mxu0 0
        %2407 = vmatpush1.bf16.msra.mxu0 0
        %2408 = vmatprep.mubr.bf16.mxu0 0
        %2409 = vmatmul.mubr.bf16.gmra.mrb[0].mxu0 %v2365
        %v2410 = vpop.f32.mrb[0].mxu0
        %v2411 = vadd.f32 0.0, %v2410
        %v2412 = vpop.f32.mrb[0].mxu0
        %v2413 = vpop.f32.mrb[0].mxu0
        %v2414 = vadd.f32 0.0, %v2413
        %v2415 = vpop.f32.mrb[0].mxu0
        %2416 = vmatprep.mubr.bf16.mxu0 0
        %2417 = vmatmul.mubr.bf16.gmra.mrb[0].mxu0 %v2368
        %v2418 = vpop.f32.mrb[0].mxu0
        %v2419 = vadd.f32 0.0, %v2418
        %v2420 = vpop.f32.mrb[0].mxu0
        %v2421 = vpop.f32.mrb[0].mxu0
        %v2422 = vadd.f32 0.0, %v2421
        %v2423 = vpop.f32.mrb[0].mxu0
        %2424 = vmatprep.mubr.bf16.mxu0 0
        %2425 = vmatmul.mubr.bf16.gmra.mrb[0].mxu0 %v2371
        %v2426 = vpop.f32.mrb[0].mxu0
        %v2427 = vadd.f32 0.0, %v2426
        %v2428 = vpop.f32.mrb[0].mxu0
        %v2429 = vpop.f32.mrb[0].mxu0
        %v2430 = vadd.f32 0.0, %v2429
        %v2431 = vpop.f32.mrb[0].mxu0
        %2432 = vmatprep.mubr.bf16.mxu0 0
        %2433 = vmatmul.mubr.bf16.gmra.mrb[0].mxu0 %v2374
        %v2434 = vpop.f32.mrb[0].mxu0
        %v2435 = vadd.f32 0.0, %v2434
        %v2436 = vpop.f32.mrb[0].mxu0
        %v2437 = vpop.f32.mrb[0].mxu0
        %v2438 = vadd.f32 0.0, %v2437
        %v2439 = vpop.f32.mrb[0].mxu0
        %2440 = vdwg.mxu0
        %v2449 = vunpack.c.l.b16 %v819
        %v2450 = vunpack.c.l.b16 %v820
        %v2451 = vunpack.c.l.b16 %v821
        %v2452 = vunpack.c.l.b16 %v822
        %v2453 = vunpack.c.l.b16 %v823
        %v2454 = vunpack.c.l.b16 %v824
        %v2455 = vunpack.c.l.b16 %v825
        %v2456 = vunpack.c.l.b16 %v826
        %v2457 = vpack.c.b16 %v2450, %v2449
        %v2458 = vpack.c.b16 %v2452, %v2451
        %v2459 = vpack.c.b16 %v2454, %v2453
        %v2460 = vpack.c.b16 %v2456, %v2455
        %v2462 = vsel %vm1199, %v2457, 0
        %v2465 = vsel %vm1199, %v2458, 0
        %v2468 = vsel %vm1199, %v2459, 0
        %v2471 = vsel %vm1199, %v2460, 0
        %2473 = vmatprep.subr.bf16.mxu0 0
        %2474 = vmatpush1.bf16.msra.mxu0 %v1176
        %2475 = vmatprep.subr.bf16.mxu0 0
        %2476 = vmatpush1.bf16.msra.mxu0 0
        %2477 = vmatprep.subr.bf16.mxu0 0
        %2478 = vmatpush1.bf16.msra.mxu0 0
        %2479 = vmatprep.subr.bf16.mxu0 0
        %2480 = vmatpush1.bf16.msra.mxu0 0
        %2481 = vmatprep.subr.bf16.mxu0 0
        %2482 = vmatpush1.bf16.msra.mxu0 0
        %2483 = vmatprep.subr.bf16.mxu0 0
        %2484 = vmatpush1.bf16.msra.mxu0 0
        %2485 = vmatprep.subr.bf16.mxu0 0
        %2486 = vmatpush1.bf16.msra.mxu0 0
        %2487 = vmatprep.subr.bf16.mxu0 0
        %2488 = vmatpush1.bf16.msra.mxu0 0
        %2489 = vmatprep.subr.bf16.mxu0 0
        %2490 = vmatpush1.bf16.msra.mxu0 0
        %2491 = vmatprep.subr.bf16.mxu0 0
        %2492 = vmatpush1.bf16.msra.mxu0 0
        %2493 = vmatprep.subr.bf16.mxu0 0
        %2494 = vmatpush1.bf16.msra.mxu0 0
        %2495 = vmatprep.subr.bf16.mxu0 0
        %2496 = vmatpush1.bf16.msra.mxu0 0
        %2497 = vmatprep.subr.bf16.mxu0 0
        %2498 = vmatpush1.bf16.msra.mxu0 0
        %2499 = vmatprep.subr.bf16.mxu0 0
        %2500 = vmatpush1.bf16.msra.mxu0 0
        %2501 = vmatprep.subr.bf16.mxu0 0
        %2502 = vmatpush1.bf16.msra.mxu0 0
        %2503 = vmatprep.subr.bf16.mxu0 0
        %2504 = vmatpush1.bf16.msra.mxu0 0
        %2505 = vmatprep.mubr.bf16.mxu0 0
        %2506 = vmatmul.mubr.bf16.gmra.mrb[0].mxu0 %v2462
        %v2507 = vpop.f32.mrb[0].mxu0
        %v2508 = vadd.f32 0.0, %v2507
        %v2509 = vpop.f32.mrb[0].mxu0
        %v2510 = vpop.f32.mrb[0].mxu0
        %v2511 = vadd.f32 0.0, %v2510
        %v2512 = vpop.f32.mrb[0].mxu0
        %2513 = vmatprep.mubr.bf16.mxu0 0
        %2514 = vmatmul.mubr.bf16.gmra.mrb[0].mxu0 %v2465
        %v2515 = vpop.f32.mrb[0].mxu0
        %v2516 = vadd.f32 0.0, %v2515
        %v2517 = vpop.f32.mrb[0].mxu0
        %v2518 = vpop.f32.mrb[0].mxu0
        %v2519 = vadd.f32 0.0, %v2518
        %v2520 = vpop.f32.mrb[0].mxu0
        %2521 = vmatprep.mubr.bf16.mxu0 0
        %2522 = vmatmul.mubr.bf16.gmra.mrb[0].mxu0 %v2468
        %v2523 = vpop.f32.mrb[0].mxu0
        %v2524 = vadd.f32 0.0, %v2523
        %v2525 = vpop.f32.mrb[0].mxu0
        %v2526 = vpop.f32.mrb[0].mxu0
        %v2527 = vadd.f32 0.0, %v2526
        %v2528 = vpop.f32.mrb[0].mxu0
        %2529 = vmatprep.mubr.bf16.mxu0 0
        %2530 = vmatmul.mubr.bf16.gmra.mrb[0].mxu0 %v2471
        %v2531 = vpop.f32.mrb[0].mxu0
        %v2532 = vadd.f32 0.0, %v2531
        %v2533 = vpop.f32.mrb[0].mxu0
        %v2534 = vpop.f32.mrb[0].mxu0
        %v2535 = vadd.f32 0.0, %v2534
        %v2536 = vpop.f32.mrb[0].mxu0
        %2537 = vdwg.mxu0
        %v2546 = vunpack.c.l.b16 %v827
        %v2547 = vunpack.c.l.b16 %v828
        %v2548 = vunpack.c.l.b16 %v829
        %v2549 = vunpack.c.l.b16 %v830
        %v2550 = vunpack.c.l.b16 %v831
        %v2551 = vunpack.c.l.b16 %v832
        %v2552 = vunpack.c.l.b16 %v833
        %v2553 = vunpack.c.l.b16 %v834
        %v2554 = vpack.c.b16 %v2547, %v2546
        %v2555 = vpack.c.b16 %v2549, %v2548
        %v2556 = vpack.c.b16 %v2551, %v2550
        %v2557 = vpack.c.b16 %v2553, %v2552
        %v2559 = vsel %vm1199, %v2554, 0
        %v2562 = vsel %vm1199, %v2555, 0
        %v2565 = vsel %vm1199, %v2556, 0
        %v2568 = vsel %vm1199, %v2557, 0
        %2570 = vmatprep.subr.bf16.mxu0 0
        %2571 = vmatpush1.bf16.msra.mxu0 %v1177
        %2572 = vmatprep.subr.bf16.mxu0 0
        %2573 = vmatpush1.bf16.msra.mxu0 0
        %2574 = vmatprep.subr.bf16.mxu0 0
        %2575 = vmatpush1.bf16.msra.mxu0 0
        %2576 = vmatprep.subr.bf16.mxu0 0
        %2577 = vmatpush1.bf16.msra.mxu0 0
        %2578 = vmatprep.subr.bf16.mxu0 0
        %2579 = vmatpush1.bf16.msra.mxu0 0
        %2580 = vmatprep.subr.bf16.mxu0 0
        %2581 = vmatpush1.bf16.msra.mxu0 0
        %2582 = vmatprep.subr.bf16.mxu0 0
        %2583 = vmatpush1.bf16.msra.mxu0 0
        %2584 = vmatprep.subr.bf16.mxu0 0
        %2585 = vmatpush1.bf16.msra.mxu0 0
        %2586 = vmatprep.subr.bf16.mxu0 0
        %2587 = vmatpush1.bf16.msra.mxu0 0
        %2588 = vmatprep.subr.bf16.mxu0 0
        %2589 = vmatpush1.bf16.msra.mxu0 0
        %2590 = vmatprep.subr.bf16.mxu0 0
        %2591 = vmatpush1.bf16.msra.mxu0 0
        %2592 = vmatprep.subr.bf16.mxu0 0
        %2593 = vmatpush1.bf16.msra.mxu0 0
        %2594 = vmatprep.subr.bf16.mxu0 0
        %2595 = vmatpush1.bf16.msra.mxu0 0
        %2596 = vmatprep.subr.bf16.mxu0 0
        %2597 = vmatpush1.bf16.msra.mxu0 0
        %2598 = vmatprep.subr.bf16.mxu0 0
        %2599 = vmatpush1.bf16.msra.mxu0 0
        %2600 = vmatprep.subr.bf16.mxu0 0
        %2601 = vmatpush1.bf16.msra.mxu0 0
        %2602 = vmatprep.mubr.bf16.mxu0 0
        %2603 = vmatmul.mubr.bf16.gmra.mrb[0].mxu0 %v2559
        %v2604 = vpop.f32.mrb[0].mxu0
        %v2605 = vadd.f32 0.0, %v2604
        %v2606 = vpop.f32.mrb[0].mxu0
        %v2607 = vpop.f32.mrb[0].mxu0
        %v2608 = vadd.f32 0.0, %v2607
        %v2609 = vpop.f32.mrb[0].mxu0
        %2610 = vmatprep.mubr.bf16.mxu0 0
        %2611 = vmatmul.mubr.bf16.gmra.mrb[0].mxu0 %v2562
        %v2612 = vpop.f32.mrb[0].mxu0
        %v2613 = vadd.f32 0.0, %v2612
        %v2614 = vpop.f32.mrb[0].mxu0
        %v2615 = vpop.f32.mrb[0].mxu0
        %v2616 = vadd.f32 0.0, %v2615
        %v2617 = vpop.f32.mrb[0].mxu0
        %2618 = vmatprep.mubr.bf16.mxu0 0
        %2619 = vmatmul.mubr.bf16.gmra.mrb[0].mxu0 %v2565
        %v2620 = vpop.f32.mrb[0].mxu0
        %v2621 = vadd.f32 0.0, %v2620
        %v2622 = vpop.f32.mrb[0].mxu0
        %v2623 = vpop.f32.mrb[0].mxu0
        %v2624 = vadd.f32 0.0, %v2623
        %v2625 = vpop.f32.mrb[0].mxu0
        %2626 = vmatprep.mubr.bf16.mxu0 0
        %2627 = vmatmul.mubr.bf16.gmra.mrb[0].mxu0 %v2568
        %v2628 = vpop.f32.mrb[0].mxu0
        %v2629 = vadd.f32 0.0, %v2628
        %v2630 = vpop.f32.mrb[0].mxu0
        %v2631 = vpop.f32.mrb[0].mxu0
        %v2632 = vadd.f32 0.0, %v2631
        %v2633 = vpop.f32.mrb[0].mxu0
        %2634 = vdwg.mxu0
        %v2643 = vunpack.c.l.b16 %v835
        %v2644 = vunpack.c.l.b16 %v836
        %v2645 = vunpack.c.l.b16 %v837
        %v2646 = vunpack.c.l.b16 %v838
        %v2647 = vunpack.c.l.b16 %v839
        %v2648 = vunpack.c.l.b16 %v840
        %v2649 = vunpack.c.l.b16 %v841
        %v2650 = vunpack.c.l.b16 %v842
        %v2651 = vpack.c.b16 %v2644, %v2643
        %v2652 = vpack.c.b16 %v2646, %v2645
        %v2653 = vpack.c.b16 %v2648, %v2647
        %v2654 = vpack.c.b16 %v2650, %v2649
        %v2656 = vsel %vm1199, %v2651, 0
        %v2659 = vsel %vm1199, %v2652, 0
        %v2662 = vsel %vm1199, %v2653, 0
        %v2665 = vsel %vm1199, %v2654, 0
        %2667 = vmatprep.subr.bf16.mxu0 0
        %2668 = vmatpush1.bf16.msra.mxu0 %v1178
        %2669 = vmatprep.subr.bf16.mxu0 0
        %2670 = vmatpush1.bf16.msra.mxu0 0
        %2671 = vmatprep.subr.bf16.mxu0 0
        %2672 = vmatpush1.bf16.msra.mxu0 0
        %2673 = vmatprep.subr.bf16.mxu0 0
        %2674 = vmatpush1.bf16.msra.mxu0 0
        %2675 = vmatprep.subr.bf16.mxu0 0
        %2676 = vmatpush1.bf16.msra.mxu0 0
        %2677 = vmatprep.subr.bf16.mxu0 0
        %2678 = vmatpush1.bf16.msra.mxu0 0
        %2679 = vmatprep.subr.bf16.mxu0 0
        %2680 = vmatpush1.bf16.msra.mxu0 0
        %2681 = vmatprep.subr.bf16.mxu0 0
        %2682 = vmatpush1.bf16.msra.mxu0 0
        %2683 = vmatprep.subr.bf16.mxu0 0
        %2684 = vmatpush1.bf16.msra.mxu0 0
        %2685 = vmatprep.subr.bf16.mxu0 0
        %2686 = vmatpush1.bf16.msra.mxu0 0
        %2687 = vmatprep.subr.bf16.mxu0 0
        %2688 = vmatpush1.bf16.msra.mxu0 0
        %2689 = vmatprep.subr.bf16.mxu0 0
        %2690 = vmatpush1.bf16.msra.mxu0 0
        %2691 = vmatprep.subr.bf16.mxu0 0
        %2692 = vmatpush1.bf16.msra.mxu0 0
        %2693 = vmatprep.subr.bf16.mxu0 0
        %2694 = vmatpush1.bf16.msra.mxu0 0
        %2695 = vmatprep.subr.bf16.mxu0 0
        %2696 = vmatpush1.bf16.msra.mxu0 0
        %2697 = vmatprep.subr.bf16.mxu0 0
        %2698 = vmatpush1.bf16.msra.mxu0 0
        %2699 = vmatprep.mubr.bf16.mxu0 0
        %2700 = vmatmul.mubr.bf16.gmra.mrb[0].mxu0 %v2656
        %v2701 = vpop.f32.mrb[0].mxu0
        %v2702 = vadd.f32 0.0, %v2701
        %v2703 = vpop.f32.mrb[0].mxu0
        %v2704 = vpop.f32.mrb[0].mxu0
        %v2705 = vadd.f32 0.0, %v2704
        %v2706 = vpop.f32.mrb[0].mxu0
        %2707 = vmatprep.mubr.bf16.mxu0 0
        %2708 = vmatmul.mubr.bf16.gmra.mrb[0].mxu0 %v2659
        %v2709 = vpop.f32.mrb[0].mxu0
        %v2710 = vadd.f32 0.0, %v2709
        %v2711 = vpop.f32.mrb[0].mxu0
        %v2712 = vpop.f32.mrb[0].mxu0
        %v2713 = vadd.f32 0.0, %v2712
        %v2714 = vpop.f32.mrb[0].mxu0
        %2715 = vmatprep.mubr.bf16.mxu0 0
        %2716 = vmatmul.mubr.bf16.gmra.mrb[0].mxu0 %v2662
        %v2717 = vpop.f32.mrb[0].mxu0
        %v2718 = vadd.f32 0.0, %v2717
        %v2719 = vpop.f32.mrb[0].mxu0
        %v2720 = vpop.f32.mrb[0].mxu0
        %v2721 = vadd.f32 0.0, %v2720
        %v2722 = vpop.f32.mrb[0].mxu0
        %2723 = vmatprep.mubr.bf16.mxu0 0
        %2724 = vmatmul.mubr.bf16.gmra.mrb[0].mxu0 %v2665
        %v2725 = vpop.f32.mrb[0].mxu0
        %v2726 = vadd.f32 0.0, %v2725
        %v2727 = vpop.f32.mrb[0].mxu0
        %v2728 = vpop.f32.mrb[0].mxu0
        %v2729 = vadd.f32 0.0, %v2728
        %v2730 = vpop.f32.mrb[0].mxu0
        %2731 = vdwg.mxu0
        %2733 = vset.pattern.permute.xlu0 0
        %2734 = vperm.xlu0 %2733, %v843
        %v2735 = vpop.permute.xlu0 %2734
        %2738 = vset.pattern.permute.xlu0 0
        %2739 = vperm.xlu0 %2738, %v844
        %v2740 = vpop.permute.xlu0 %2739
        %2743 = vset.pattern.permute.xlu0 0
        %2744 = vperm.xlu0 %2743, %v845
        %v2745 = vpop.permute.xlu0 %2744
        %2748 = vset.pattern.permute.xlu0 0
        %2749 = vperm.xlu0 %2748, %v846
        %v2750 = vpop.permute.xlu0 %2749
        %2753 = vset.pattern.permute.xlu0 0
        %2754 = vperm.xlu0 %2753, %v847
        %v2755 = vpop.permute.xlu0 %2754
        %2758 = vset.pattern.permute.xlu0 0
        %2759 = vperm.xlu0 %2758, %v848
        %v2760 = vpop.permute.xlu0 %2759
        %2763 = vset.pattern.permute.xlu0 0
        %2764 = vperm.xlu0 %2763, %v849
        %v2765 = vpop.permute.xlu0 %2764
        %2768 = vset.pattern.permute.xlu0 0
        %2769 = vperm.xlu0 %2768, %v850
        %v2770 = vpop.permute.xlu0 %2769
        %2773 = vset.pattern.permute.xlu0 0
        %2774 = vperm.xlu0 %2773, %v851
        %v2775 = vpop.permute.xlu0 %2774
        %2778 = vset.pattern.permute.xlu0 0
        %2779 = vperm.xlu0 %2778, %v852
        %v2780 = vpop.permute.xlu0 %2779
        %2783 = vset.pattern.permute.xlu0 0
        %2784 = vperm.xlu0 %2783, %v853
        %v2785 = vpop.permute.xlu0 %2784
        %2788 = vset.pattern.permute.xlu0 0
        %2789 = vperm.xlu0 %2788, %v854
        %v2790 = vpop.permute.xlu0 %2789
        %2793 = vset.pattern.permute.xlu0 0
        %2794 = vperm.xlu0 %2793, %v855
        %v2795 = vpop.permute.xlu0 %2794
        %2798 = vset.pattern.permute.xlu0 0
        %2799 = vperm.xlu0 %2798, %v856
        %v2800 = vpop.permute.xlu0 %2799
        %2803 = vset.pattern.permute.xlu0 0
        %2804 = vperm.xlu0 %2803, %v857
        %v2805 = vpop.permute.xlu0 %2804
        %2808 = vset.pattern.permute.xlu0 0
        %2809 = vperm.xlu0 %2808, %v858
        %v2810 = vpop.permute.xlu0 %2809
        %2813 = vset.pattern.permute.xlu0 0
        %2814 = vperm.xlu0 %2813, %v859
        %v2815 = vpop.permute.xlu0 %2814
        %2818 = vset.pattern.permute.xlu0 0
        %2819 = vperm.xlu0 %2818, %v860
        %v2820 = vpop.permute.xlu0 %2819
        %2823 = vset.pattern.permute.xlu0 0
        %2824 = vperm.xlu0 %2823, %v861
        %v2825 = vpop.permute.xlu0 %2824
        %2828 = vset.pattern.permute.xlu0 0
        %2829 = vperm.xlu0 %2828, %v862
        %v2830 = vpop.permute.xlu0 %2829
        %2833 = vset.pattern.permute.xlu0 0
        %2834 = vperm.xlu0 %2833, %v863
        %v2835 = vpop.permute.xlu0 %2834
        %2838 = vset.pattern.permute.xlu0 0
        %2839 = vperm.xlu0 %2838, %v864
        %v2840 = vpop.permute.xlu0 %2839
        %2843 = vset.pattern.permute.xlu0 0
        %2844 = vperm.xlu0 %2843, %v865
        %v2845 = vpop.permute.xlu0 %2844
        %2848 = vset.pattern.permute.xlu0 0
        %2849 = vperm.xlu0 %2848, %v866
        %v2850 = vpop.permute.xlu0 %2849
        %2853 = vset.pattern.permute.xlu0 0
        %2854 = vperm.xlu0 %2853, %v867
        %v2855 = vpop.permute.xlu0 %2854
        %2858 = vset.pattern.permute.xlu0 0
        %2859 = vperm.xlu0 %2858, %v868
        %v2860 = vpop.permute.xlu0 %2859
        %2863 = vset.pattern.permute.xlu0 0
        %2864 = vperm.xlu0 %2863, %v869
        %v2865 = vpop.permute.xlu0 %2864
        %2868 = vset.pattern.permute.xlu0 0
        %2869 = vperm.xlu0 %2868, %v870
        %v2870 = vpop.permute.xlu0 %2869
        %2873 = vset.pattern.permute.xlu0 0
        %2874 = vperm.xlu0 %2873, %v871
        %v2875 = vpop.permute.xlu0 %2874
        %2878 = vset.pattern.permute.xlu0 0
        %2879 = vperm.xlu0 %2878, %v872
        %v2880 = vpop.permute.xlu0 %2879
        %2883 = vset.pattern.permute.xlu0 0
        %2884 = vperm.xlu0 %2883, %v873
        %v2885 = vpop.permute.xlu0 %2884
        %2888 = vset.pattern.permute.xlu0 0
        %2889 = vperm.xlu0 %2888, %v874
        %v2890 = vpop.permute.xlu0 %2889
        %2893 = vset.pattern.permute.xlu0 0
        %2894 = vperm.xlu0 %2893, %v875
        %v2895 = vpop.permute.xlu0 %2894
        %2898 = vset.pattern.permute.xlu0 0
        %2899 = vperm.xlu0 %2898, %v876
        %v2900 = vpop.permute.xlu0 %2899
        %2903 = vset.pattern.permute.xlu0 0
        %2904 = vperm.xlu0 %2903, %v877
        %v2905 = vpop.permute.xlu0 %2904
        %2908 = vset.pattern.permute.xlu0 0
        %2909 = vperm.xlu0 %2908, %v878
        %v2910 = vpop.permute.xlu0 %2909
        %2913 = vset.pattern.permute.xlu0 0
        %2914 = vperm.xlu0 %2913, %v879
        %v2915 = vpop.permute.xlu0 %2914
        %2918 = vset.pattern.permute.xlu0 0
        %2919 = vperm.xlu0 %2918, %v880
        %v2920 = vpop.permute.xlu0 %2919
        %2923 = vset.pattern.permute.xlu0 0
        %2924 = vperm.xlu0 %2923, %v881
        %v2925 = vpop.permute.xlu0 %2924
        %2928 = vset.pattern.permute.xlu0 0
        %2929 = vperm.xlu0 %2928, %v882
        %v2930 = vpop.permute.xlu0 %2929
        %2933 = vset.pattern.permute.xlu0 0
        %2934 = vperm.xlu0 %2933, %v883
        %v2935 = vpop.permute.xlu0 %2934
        %2938 = vset.pattern.permute.xlu0 0
        %2939 = vperm.xlu0 %2938, %v884
        %v2940 = vpop.permute.xlu0 %2939
        %2943 = vset.pattern.permute.xlu0 0
        %2944 = vperm.xlu0 %2943, %v885
        %v2945 = vpop.permute.xlu0 %2944
        %2948 = vset.pattern.permute.xlu0 0
        %2949 = vperm.xlu0 %2948, %v886
        %v2950 = vpop.permute.xlu0 %2949
        %2953 = vset.pattern.permute.xlu0 0
        %2954 = vperm.xlu0 %2953, %v887
        %v2955 = vpop.permute.xlu0 %2954
        %2958 = vset.pattern.permute.xlu0 0
        %2959 = vperm.xlu0 %2958, %v888
        %v2960 = vpop.permute.xlu0 %2959
        %2963 = vset.pattern.permute.xlu0 0
        %2964 = vperm.xlu0 %2963, %v889
        %v2965 = vpop.permute.xlu0 %2964
        %2968 = vset.pattern.permute.xlu0 0
        %2969 = vperm.xlu0 %2968, %v890
        %v2970 = vpop.permute.xlu0 %2969
        %2973 = vset.pattern.permute.xlu0 0
        %2974 = vperm.xlu0 %2973, %v891
        %v2975 = vpop.permute.xlu0 %2974
        %2978 = vset.pattern.permute.xlu0 0
        %2979 = vperm.xlu0 %2978, %v892
        %v2980 = vpop.permute.xlu0 %2979
        %2983 = vset.pattern.permute.xlu0 0
        %2984 = vperm.xlu0 %2983, %v893
        %v2985 = vpop.permute.xlu0 %2984
        %2988 = vset.pattern.permute.xlu0 0
        %2989 = vperm.xlu0 %2988, %v894
        %v2990 = vpop.permute.xlu0 %2989
        %2993 = vset.pattern.permute.xlu0 0
        %2994 = vperm.xlu0 %2993, %v895
        %v2995 = vpop.permute.xlu0 %2994
        %2998 = vset.pattern.permute.xlu0 0
        %2999 = vperm.xlu0 %2998, %v896
        %v3000 = vpop.permute.xlu0 %2999
        %3003 = vset.pattern.permute.xlu0 0
        %3004 = vperm.xlu0 %3003, %v897
        %v3005 = vpop.permute.xlu0 %3004
        %3008 = vset.pattern.permute.xlu0 0
        %3009 = vperm.xlu0 %3008, %v898
        %v3010 = vpop.permute.xlu0 %3009
        %3013 = vset.pattern.permute.xlu0 0
        %3014 = vperm.xlu0 %3013, %v899
        %v3015 = vpop.permute.xlu0 %3014
        %3018 = vset.pattern.permute.xlu0 0
        %3019 = vperm.xlu0 %3018, %v900
        %v3020 = vpop.permute.xlu0 %3019
        %3023 = vset.pattern.permute.xlu0 0
        %3024 = vperm.xlu0 %3023, %v901
        %v3025 = vpop.permute.xlu0 %3024
        %3028 = vset.pattern.permute.xlu0 0
        %3029 = vperm.xlu0 %3028, %v902
        %v3030 = vpop.permute.xlu0 %3029
        %3033 = vset.pattern.permute.xlu0 0
        %3034 = vperm.xlu0 %3033, %v903
        %v3035 = vpop.permute.xlu0 %3034
        %3038 = vset.pattern.permute.xlu0 0
        %3039 = vperm.xlu0 %3038, %v904
        %v3040 = vpop.permute.xlu0 %3039
        %3043 = vset.pattern.permute.xlu0 0
        %3044 = vperm.xlu0 %3043, %v905
        %v3045 = vpop.permute.xlu0 %3044
        %3048 = vset.pattern.permute.xlu0 0
        %3049 = vperm.xlu0 %3048, %v906
        %v3050 = vpop.permute.xlu0 %3049
        %3053 = vset.pattern.permute.xlu0 0
        %3054 = vperm.xlu0 %3053, %v907
        %v3055 = vpop.permute.xlu0 %3054
        %3058 = vset.pattern.permute.xlu0 0
        %3059 = vperm.xlu0 %3058, %v908
        %v3060 = vpop.permute.xlu0 %3059
        %3063 = vset.pattern.permute.xlu0 0
        %3064 = vperm.xlu0 %3063, %v909
        %v3065 = vpop.permute.xlu0 %3064
        %3068 = vset.pattern.permute.xlu0 0
        %3069 = vperm.xlu0 %3068, %v910
        %v3070 = vpop.permute.xlu0 %3069
        %3073 = vset.pattern.permute.xlu0 0
        %3074 = vperm.xlu0 %3073, %v911
        %v3075 = vpop.permute.xlu0 %3074
        %3078 = vset.pattern.permute.xlu0 0
        %3079 = vperm.xlu0 %3078, %v912
        %v3080 = vpop.permute.xlu0 %3079
        %3083 = vset.pattern.permute.xlu0 0
        %3084 = vperm.xlu0 %3083, %v913
        %v3085 = vpop.permute.xlu0 %3084
        %3088 = vset.pattern.permute.xlu0 0
        %3089 = vperm.xlu0 %3088, %v914
        %v3090 = vpop.permute.xlu0 %3089
        %3093 = vset.pattern.permute.xlu0 0
        %3094 = vperm.xlu0 %3093, %v915
        %v3095 = vpop.permute.xlu0 %3094
        %3098 = vset.pattern.permute.xlu0 0
        %3099 = vperm.xlu0 %3098, %v916
        %v3100 = vpop.permute.xlu0 %3099
        %3103 = vset.pattern.permute.xlu0 0
        %3104 = vperm.xlu0 %3103, %v917
        %v3105 = vpop.permute.xlu0 %3104
        %3108 = vset.pattern.permute.xlu0 0
        %3109 = vperm.xlu0 %3108, %v918
        %v3110 = vpop.permute.xlu0 %3109
        %3113 = vset.pattern.permute.xlu0 0
        %3114 = vperm.xlu0 %3113, %v919
        %v3115 = vpop.permute.xlu0 %3114
        %3118 = vset.pattern.permute.xlu0 0
        %3119 = vperm.xlu0 %3118, %v920
        %v3120 = vpop.permute.xlu0 %3119
        %3123 = vset.pattern.permute.xlu0 0
        %3124 = vperm.xlu0 %3123, %v921
        %v3125 = vpop.permute.xlu0 %3124
        %3128 = vset.pattern.permute.xlu0 0
        %3129 = vperm.xlu0 %3128, %v922
        %v3130 = vpop.permute.xlu0 %3129
        %3133 = vset.pattern.permute.xlu0 0
        %3134 = vperm.xlu0 %3133, %v923
        %v3135 = vpop.permute.xlu0 %3134
        %3138 = vset.pattern.permute.xlu0 0
        %3139 = vperm.xlu0 %3138, %v924
        %v3140 = vpop.permute.xlu0 %3139
        %3143 = vset.pattern.permute.xlu0 0
        %3144 = vperm.xlu0 %3143, %v925
        %v3145 = vpop.permute.xlu0 %3144
        %3148 = vset.pattern.permute.xlu0 0
        %3149 = vperm.xlu0 %3148, %v926
        %v3150 = vpop.permute.xlu0 %3149
        %3153 = vset.pattern.permute.xlu0 0
        %3154 = vperm.xlu0 %3153, %v927
        %v3155 = vpop.permute.xlu0 %3154
        %3158 = vset.pattern.permute.xlu0 0
        %3159 = vperm.xlu0 %3158, %v928
        %v3160 = vpop.permute.xlu0 %3159
        %3163 = vset.pattern.permute.xlu0 0
        %3164 = vperm.xlu0 %3163, %v929
        %v3165 = vpop.permute.xlu0 %3164
        %3168 = vset.pattern.permute.xlu0 0
        %3169 = vperm.xlu0 %3168, %v930
        %v3170 = vpop.permute.xlu0 %3169
        %3173 = vset.pattern.permute.xlu0 0
        %3174 = vperm.xlu0 %3173, %v931
        %v3175 = vpop.permute.xlu0 %3174
        %3178 = vset.pattern.permute.xlu0 0
        %3179 = vperm.xlu0 %3178, %v932
        %v3180 = vpop.permute.xlu0 %3179
        %3183 = vset.pattern.permute.xlu0 0
        %3184 = vperm.xlu0 %3183, %v933
        %v3185 = vpop.permute.xlu0 %3184
        %3188 = vset.pattern.permute.xlu0 0
        %3189 = vperm.xlu0 %3188, %v934
        %v3190 = vpop.permute.xlu0 %3189
        %3193 = vset.pattern.permute.xlu0 0
        %3194 = vperm.xlu0 %3193, %v935
        %v3195 = vpop.permute.xlu0 %3194
        %3198 = vset.pattern.permute.xlu0 0
        %3199 = vperm.xlu0 %3198, %v936
        %v3200 = vpop.permute.xlu0 %3199
        %3203 = vset.pattern.permute.xlu0 0
        %3204 = vperm.xlu0 %3203, %v937
        %v3205 = vpop.permute.xlu0 %3204
        %3208 = vset.pattern.permute.xlu0 0
        %3209 = vperm.xlu0 %3208, %v938
        %v3210 = vpop.permute.xlu0 %3209
        %3213 = vset.pattern.permute.xlu0 0
        %3214 = vperm.xlu0 %3213, %v939
        %v3215 = vpop.permute.xlu0 %3214
        %3218 = vset.pattern.permute.xlu0 0
        %3219 = vperm.xlu0 %3218, %v940
        %v3220 = vpop.permute.xlu0 %3219
        %3223 = vset.pattern.permute.xlu0 0
        %3224 = vperm.xlu0 %3223, %v941
        %v3225 = vpop.permute.xlu0 %3224
        %3228 = vset.pattern.permute.xlu0 0
        %3229 = vperm.xlu0 %3228, %v942
        %v3230 = vpop.permute.xlu0 %3229
        %3233 = vset.pattern.permute.xlu0 0
        %3234 = vperm.xlu0 %3233, %v943
        %v3235 = vpop.permute.xlu0 %3234
        %3238 = vset.pattern.permute.xlu0 0
        %3239 = vperm.xlu0 %3238, %v944
        %v3240 = vpop.permute.xlu0 %3239
        %3243 = vset.pattern.permute.xlu0 0
        %3244 = vperm.xlu0 %3243, %v945
        %v3245 = vpop.permute.xlu0 %3244
        %3248 = vset.pattern.permute.xlu0 0
        %3249 = vperm.xlu0 %3248, %v946
        %v3250 = vpop.permute.xlu0 %3249
        %3253 = vset.pattern.permute.xlu0 0
        %3254 = vperm.xlu0 %3253, %v947
        %v3255 = vpop.permute.xlu0 %3254
        %3258 = vset.pattern.permute.xlu0 0
        %3259 = vperm.xlu0 %3258, %v948
        %v3260 = vpop.permute.xlu0 %3259
        %3263 = vset.pattern.permute.xlu0 0
        %3264 = vperm.xlu0 %3263, %v949
        %v3265 = vpop.permute.xlu0 %3264
        %3268 = vset.pattern.permute.xlu0 0
        %3269 = vperm.xlu0 %3268, %v950
        %v3270 = vpop.permute.xlu0 %3269
        %3273 = vset.pattern.permute.xlu0 0
        %3274 = vperm.xlu0 %3273, %v951
        %v3275 = vpop.permute.xlu0 %3274
        %3278 = vset.pattern.permute.xlu0 0
        %3279 = vperm.xlu0 %3278, %v952
        %v3280 = vpop.permute.xlu0 %3279
        %3283 = vset.pattern.permute.xlu0 0
        %3284 = vperm.xlu0 %3283, %v953
        %v3285 = vpop.permute.xlu0 %3284
        %3288 = vset.pattern.permute.xlu0 0
        %3289 = vperm.xlu0 %3288, %v954
        %v3290 = vpop.permute.xlu0 %3289
        %3293 = vset.pattern.permute.xlu0 0
        %3294 = vperm.xlu0 %3293, %v955
        %v3295 = vpop.permute.xlu0 %3294
        %3298 = vset.pattern.permute.xlu0 0
        %3299 = vperm.xlu0 %3298, %v956
        %v3300 = vpop.permute.xlu0 %3299
        %3303 = vset.pattern.permute.xlu0 0
        %3304 = vperm.xlu0 %3303, %v957
        %v3305 = vpop.permute.xlu0 %3304
        %3308 = vset.pattern.permute.xlu0 0
        %3309 = vperm.xlu0 %3308, %v958
        %v3310 = vpop.permute.xlu0 %3309
        %3313 = vset.pattern.permute.xlu0 0
        %3314 = vperm.xlu0 %3313, %v959
        %v3315 = vpop.permute.xlu0 %3314
        %3318 = vset.pattern.permute.xlu0 0
        %3319 = vperm.xlu0 %3318, %v960
        %v3320 = vpop.permute.xlu0 %3319
        %3323 = vset.pattern.permute.xlu0 0
        %3324 = vperm.xlu0 %3323, %v961
        %v3325 = vpop.permute.xlu0 %3324
        %3328 = vset.pattern.permute.xlu0 0
        %3329 = vperm.xlu0 %3328, %v962
        %v3330 = vpop.permute.xlu0 %3329
        %3333 = vset.pattern.permute.xlu0 0
        %3334 = vperm.xlu0 %3333, %v963
        %v3335 = vpop.permute.xlu0 %3334
        %3338 = vset.pattern.permute.xlu0 0
        %3339 = vperm.xlu0 %3338, %v964
        %v3340 = vpop.permute.xlu0 %3339
        %3343 = vset.pattern.permute.xlu0 0
        %3344 = vperm.xlu0 %3343, %v965
        %v3345 = vpop.permute.xlu0 %3344
        %3348 = vset.pattern.permute.xlu0 0
        %3349 = vperm.xlu0 %3348, %v966
        %v3350 = vpop.permute.xlu0 %3349
        %3353 = vset.pattern.permute.xlu0 0
        %3354 = vperm.xlu0 %3353, %v967
        %v3355 = vpop.permute.xlu0 %3354
        %3358 = vset.pattern.permute.xlu0 0
        %3359 = vperm.xlu0 %3358, %v968
        %v3360 = vpop.permute.xlu0 %3359
        %3363 = vset.pattern.permute.xlu0 0
        %3364 = vperm.xlu0 %3363, %v969
        %v3365 = vpop.permute.xlu0 %3364
        %3368 = vset.pattern.permute.xlu0 0
        %3369 = vperm.xlu0 %3368, %v970
        %v3370 = vpop.permute.xlu0 %3369
        %v3372 = vadd.f32 %v1247, %v2735
        %v3373 = vadd.f32 %v1250, %v2740
        %v3374 = vadd.f32 %v1255, %v2745
        %v3375 = vadd.f32 %v1258, %v2750
        %v3376 = vadd.f32 %v1263, %v2755
        %v3377 = vadd.f32 %v1266, %v2760
        %v3378 = vadd.f32 %v1271, %v2765
        %v3379 = vadd.f32 %v1274, %v2770
        %v3380 = vadd.f32 %v1344, %v2775
        %v3381 = vadd.f32 %v1347, %v2780
        %v3382 = vadd.f32 %v1352, %v2785
        %v3383 = vadd.f32 %v1355, %v2790
        %v3384 = vadd.f32 %v1360, %v2795
        %v3385 = vadd.f32 %v1363, %v2800
        %v3386 = vadd.f32 %v1368, %v2805
        %v3387 = vadd.f32 %v1371, %v2810
        %v3388 = vadd.f32 %v1441, %v2815
        %v3389 = vadd.f32 %v1444, %v2820
        %v3390 = vadd.f32 %v1449, %v2825
        %v3391 = vadd.f32 %v1452, %v2830
        %v3392 = vadd.f32 %v1457, %v2835
        %v3393 = vadd.f32 %v1460, %v2840
        %v3394 = vadd.f32 %v1465, %v2845
        %v3395 = vadd.f32 %v1468, %v2850
        %v3396 = vadd.f32 %v1538, %v2855
        %v3397 = vadd.f32 %v1541, %v2860
        %v3398 = vadd.f32 %v1546, %v2865
        %v3399 = vadd.f32 %v1549, %v2870
        %v3400 = vadd.f32 %v1554, %v2875
        %v3401 = vadd.f32 %v1557, %v2880
        %v3402 = vadd.f32 %v1562, %v2885
        %v3403 = vadd.f32 %v1565, %v2890
        %v3404 = vadd.f32 %v1635, %v2895
        %v3405 = vadd.f32 %v1638, %v2900
        %v3406 = vadd.f32 %v1643, %v2905
        %v3407 = vadd.f32 %v1646, %v2910
        %v3408 = vadd.f32 %v1651, %v2915
        %v3409 = vadd.f32 %v1654, %v2920
        %v3410 = vadd.f32 %v1659, %v2925
        %v3411 = vadd.f32 %v1662, %v2930
        %v3412 = vadd.f32 %v1732, %v2935
        %v3413 = vadd.f32 %v1735, %v2940
        %v3414 = vadd.f32 %v1740, %v2945
        %v3415 = vadd.f32 %v1743, %v2950
        %v3416 = vadd.f32 %v1748, %v2955
        %v3417 = vadd.f32 %v1751, %v2960
        %v3418 = vadd.f32 %v1756, %v2965
        %v3419 = vadd.f32 %v1759, %v2970
        %v3420 = vadd.f32 %v1829, %v2975
        %v3421 = vadd.f32 %v1832, %v2980
        %v3422 = vadd.f32 %v1837, %v2985
        %v3423 = vadd.f32 %v1840, %v2990
        %v3424 = vadd.f32 %v1845, %v2995
        %v3425 = vadd.f32 %v1848, %v3000
        %v3426 = vadd.f32 %v1853, %v3005
        %v3427 = vadd.f32 %v1856, %v3010
        %v3428 = vadd.f32 %v1926, %v3015
        %v3429 = vadd.f32 %v1929, %v3020
        %v3430 = vadd.f32 %v1934, %v3025
        %v3431 = vadd.f32 %v1937, %v3030
        %v3432 = vadd.f32 %v1942, %v3035
        %v3433 = vadd.f32 %v1945, %v3040
        %v3434 = vadd.f32 %v1950, %v3045
        %v3435 = vadd.f32 %v1953, %v3050
        %v3436 = vadd.f32 %v2023, %v3055
        %v3437 = vadd.f32 %v2026, %v3060
        %v3438 = vadd.f32 %v2031, %v3065
        %v3439 = vadd.f32 %v2034, %v3070
        %v3440 = vadd.f32 %v2039, %v3075
        %v3441 = vadd.f32 %v2042, %v3080
        %v3442 = vadd.f32 %v2047, %v3085
        %v3443 = vadd.f32 %v2050, %v3090
        %v3444 = vadd.f32 %v2120, %v3095
        %v3445 = vadd.f32 %v2123, %v3100
        %v3446 = vadd.f32 %v2128, %v3105
        %v3447 = vadd.f32 %v2131, %v3110
        %v3448 = vadd.f32 %v2136, %v3115
        %v3449 = vadd.f32 %v2139, %v3120
        %v3450 = vadd.f32 %v2144, %v3125
        %v3451 = vadd.f32 %v2147, %v3130
        %v3452 = vadd.f32 %v2217, %v3135
        %v3453 = vadd.f32 %v2220, %v3140
        %v3454 = vadd.f32 %v2225, %v3145
        %v3455 = vadd.f32 %v2228, %v3150
        %v3456 = vadd.f32 %v2233, %v3155
        %v3457 = vadd.f32 %v2236, %v3160
        %v3458 = vadd.f32 %v2241, %v3165
        %v3459 = vadd.f32 %v2244, %v3170
        %v3460 = vadd.f32 %v2314, %v3175
        %v3461 = vadd.f32 %v2317, %v3180
        %v3462 = vadd.f32 %v2322, %v3185
        %v3463 = vadd.f32 %v2325, %v3190
        %v3464 = vadd.f32 %v2330, %v3195
        %v3465 = vadd.f32 %v2333, %v3200
        %v3466 = vadd.f32 %v2338, %v3205
        %v3467 = vadd.f32 %v2341, %v3210
        %v3468 = vadd.f32 %v2411, %v3215
        %v3469 = vadd.f32 %v2414, %v3220
        %v3470 = vadd.f32 %v2419, %v3225
        %v3471 = vadd.f32 %v2422, %v3230
        %v3472 = vadd.f32 %v2427, %v3235
        %v3473 = vadd.f32 %v2430, %v3240
        %v3474 = vadd.f32 %v2435, %v3245
        %v3475 = vadd.f32 %v2438, %v3250
        %v3476 = vadd.f32 %v2508, %v3255
        %v3477 = vadd.f32 %v2511, %v3260
        %v3478 = vadd.f32 %v2516, %v3265
        %v3479 = vadd.f32 %v2519, %v3270
        %v3480 = vadd.f32 %v2524, %v3275
        %v3481 = vadd.f32 %v2527, %v3280
        %v3482 = vadd.f32 %v2532, %v3285
        %v3483 = vadd.f32 %v2535, %v3290
        %v3484 = vadd.f32 %v2605, %v3295
        %v3485 = vadd.f32 %v2608, %v3300
        %v3486 = vadd.f32 %v2613, %v3305
        %v3487 = vadd.f32 %v2616, %v3310
        %v3488 = vadd.f32 %v2621, %v3315
        %v3489 = vadd.f32 %v2624, %v3320
        %v3490 = vadd.f32 %v2629, %v3325
        %v3491 = vadd.f32 %v2632, %v3330
        %v3492 = vadd.f32 %v2702, %v3335
        %v3493 = vadd.f32 %v2705, %v3340
        %v3494 = vadd.f32 %v2710, %v3345
        %v3495 = vadd.f32 %v2713, %v3350
        %v3496 = vadd.f32 %v2718, %v3355
        %v3497 = vadd.f32 %v2721, %v3360
        %v3498 = vadd.f32 %v2726, %v3365
        %v3499 = vadd.f32 %v2729, %v3370
        %v3500 = vxor.u32 %v3372, 2147483648
        %v3501 = vxor.u32 %v3373, 2147483648
        %v3502 = vxor.u32 %v3374, 2147483648
        %v3503 = vxor.u32 %v3375, 2147483648
        %v3504 = vxor.u32 %v3376, 2147483648
        %v3505 = vxor.u32 %v3377, 2147483648
        %v3506 = vxor.u32 %v3378, 2147483648
        %v3507 = vxor.u32 %v3379, 2147483648
        %v3508 = vxor.u32 %v3380, 2147483648
        %v3509 = vxor.u32 %v3381, 2147483648
        %v3510 = vxor.u32 %v3382, 2147483648
        %v3511 = vxor.u32 %v3383, 2147483648
        %v3512 = vxor.u32 %v3384, 2147483648
        %v3513 = vxor.u32 %v3385, 2147483648
        %v3514 = vxor.u32 %v3386, 2147483648
        %v3515 = vxor.u32 %v3387, 2147483648
        %v3516 = vxor.u32 %v3388, 2147483648
        %v3517 = vxor.u32 %v3389, 2147483648
        %v3518 = vxor.u32 %v3390, 2147483648
        %v3519 = vxor.u32 %v3391, 2147483648
        %v3520 = vxor.u32 %v3392, 2147483648
        %v3521 = vxor.u32 %v3393, 2147483648
        %v3522 = vxor.u32 %v3394, 2147483648
        %v3523 = vxor.u32 %v3395, 2147483648
        %v3524 = vxor.u32 %v3396, 2147483648
        %v3525 = vxor.u32 %v3397, 2147483648
        %v3526 = vxor.u32 %v3398, 2147483648
        %v3527 = vxor.u32 %v3399, 2147483648
        %v3528 = vxor.u32 %v3400, 2147483648
        %v3529 = vxor.u32 %v3401, 2147483648
        %v3530 = vxor.u32 %v3402, 2147483648
        %v3531 = vxor.u32 %v3403, 2147483648
        %v3532 = vxor.u32 %v3404, 2147483648
        %v3533 = vxor.u32 %v3405, 2147483648
        %v3534 = vxor.u32 %v3406, 2147483648
        %v3535 = vxor.u32 %v3407, 2147483648
        %v3536 = vxor.u32 %v3408, 2147483648
        %v3537 = vxor.u32 %v3409, 2147483648
        %v3538 = vxor.u32 %v3410, 2147483648
        %v3539 = vxor.u32 %v3411, 2147483648
        %v3540 = vxor.u32 %v3412, 2147483648
        %v3541 = vxor.u32 %v3413, 2147483648
        %v3542 = vxor.u32 %v3414, 2147483648
        %v3543 = vxor.u32 %v3415, 2147483648
        %v3544 = vxor.u32 %v3416, 2147483648
        %v3545 = vxor.u32 %v3417, 2147483648
        %v3546 = vxor.u32 %v3418, 2147483648
        %v3547 = vxor.u32 %v3419, 2147483648
        %v3548 = vxor.u32 %v3420, 2147483648
        %v3549 = vxor.u32 %v3421, 2147483648
        %v3550 = vxor.u32 %v3422, 2147483648
        %v3551 = vxor.u32 %v3423, 2147483648
        %v3552 = vxor.u32 %v3424, 2147483648
        %v3553 = vxor.u32 %v3425, 2147483648
        %v3554 = vxor.u32 %v3426, 2147483648
        %v3555 = vxor.u32 %v3427, 2147483648
        %v3556 = vxor.u32 %v3428, 2147483648
        %v3557 = vxor.u32 %v3429, 2147483648
        %v3558 = vxor.u32 %v3430, 2147483648
        %v3559 = vxor.u32 %v3431, 2147483648
        %v3560 = vxor.u32 %v3432, 2147483648
        %v3561 = vxor.u32 %v3433, 2147483648
        %v3562 = vxor.u32 %v3434, 2147483648
        %v3563 = vxor.u32 %v3435, 2147483648
        %v3564 = vxor.u32 %v3436, 2147483648
        %v3565 = vxor.u32 %v3437, 2147483648
        %v3566 = vxor.u32 %v3438, 2147483648
        %v3567 = vxor.u32 %v3439, 2147483648
        %v3568 = vxor.u32 %v3440, 2147483648
        %v3569 = vxor.u32 %v3441, 2147483648
        %v3570 = vxor.u32 %v3442, 2147483648
        %v3571 = vxor.u32 %v3443, 2147483648
        %v3572 = vxor.u32 %v3444, 2147483648
        %v3573 = vxor.u32 %v3445, 2147483648
        %v3574 = vxor.u32 %v3446, 2147483648
        %v3575 = vxor.u32 %v3447, 2147483648
        %v3576 = vxor.u32 %v3448, 2147483648
        %v3577 = vxor.u32 %v3449, 2147483648
        %v3578 = vxor.u32 %v3450, 2147483648
        %v3579 = vxor.u32 %v3451, 2147483648
        %v3580 = vxor.u32 %v3452, 2147483648
        %v3581 = vxor.u32 %v3453, 2147483648
        %v3582 = vxor.u32 %v3454, 2147483648
        %v3583 = vxor.u32 %v3455, 2147483648
        %v3584 = vxor.u32 %v3456, 2147483648
        %v3585 = vxor.u32 %v3457, 2147483648
        %v3586 = vxor.u32 %v3458, 2147483648
        %v3587 = vxor.u32 %v3459, 2147483648
        %v3588 = vxor.u32 %v3460, 2147483648
        %v3589 = vxor.u32 %v3461, 2147483648
        %v3590 = vxor.u32 %v3462, 2147483648
        %v3591 = vxor.u32 %v3463, 2147483648
        %v3592 = vxor.u32 %v3464, 2147483648
        %v3593 = vxor.u32 %v3465, 2147483648
        %v3594 = vxor.u32 %v3466, 2147483648
        %v3595 = vxor.u32 %v3467, 2147483648
        %v3596 = vxor.u32 %v3468, 2147483648
        %v3597 = vxor.u32 %v3469, 2147483648
        %v3598 = vxor.u32 %v3470, 2147483648
        %v3599 = vxor.u32 %v3471, 2147483648
        %v3600 = vxor.u32 %v3472, 2147483648
        %v3601 = vxor.u32 %v3473, 2147483648
        %v3602 = vxor.u32 %v3474, 2147483648
        %v3603 = vxor.u32 %v3475, 2147483648
        %v3604 = vxor.u32 %v3476, 2147483648
        %v3605 = vxor.u32 %v3477, 2147483648
        %v3606 = vxor.u32 %v3478, 2147483648
        %v3607 = vxor.u32 %v3479, 2147483648
        %v3608 = vxor.u32 %v3480, 2147483648
        %v3609 = vxor.u32 %v3481, 2147483648
        %v3610 = vxor.u32 %v3482, 2147483648
        %v3611 = vxor.u32 %v3483, 2147483648
        %v3612 = vxor.u32 %v3484, 2147483648
        %v3613 = vxor.u32 %v3485, 2147483648
        %v3614 = vxor.u32 %v3486, 2147483648
        %v3615 = vxor.u32 %v3487, 2147483648
        %v3616 = vxor.u32 %v3488, 2147483648
        %v3617 = vxor.u32 %v3489, 2147483648
        %v3618 = vxor.u32 %v3490, 2147483648
        %v3619 = vxor.u32 %v3491, 2147483648
        %v3620 = vxor.u32 %v3492, 2147483648
        %v3621 = vxor.u32 %v3493, 2147483648
        %v3622 = vxor.u32 %v3494, 2147483648
        %v3623 = vxor.u32 %v3495, 2147483648
        %v3624 = vxor.u32 %v3496, 2147483648
        %v3625 = vxor.u32 %v3497, 2147483648
        %v3626 = vxor.u32 %v3498, 2147483648
        %v3627 = vxor.u32 %v3499, 2147483648
        %v3628 = vmul.f32 %v3500, 1.442695
        %v3629 = vpow.pop %v3628
        %v3630 = vmul.f32 %v3501, 1.442695
        %v3631 = vpow.pop %v3630
        %v3632 = vmul.f32 %v3502, 1.442695
        %v3633 = vpow.pop %v3632
        %v3634 = vmul.f32 %v3503, 1.442695
        %v3635 = vpow.pop %v3634
        %v3636 = vmul.f32 %v3504, 1.442695
        %v3637 = vpow.pop %v3636
        %v3638 = vmul.f32 %v3505, 1.442695
        %v3639 = vpow.pop %v3638
        %v3640 = vmul.f32 %v3506, 1.442695
        %v3641 = vpow.pop %v3640
        %v3642 = vmul.f32 %v3507, 1.442695
        %v3643 = vpow.pop %v3642
        %v3644 = vmul.f32 %v3508, 1.442695
        %v3645 = vpow.pop %v3644
        %v3646 = vmul.f32 %v3509, 1.442695
        %v3647 = vpow.pop %v3646
        %v3648 = vmul.f32 %v3510, 1.442695
        %v3649 = vpow.pop %v3648
        %v3650 = vmul.f32 %v3511, 1.442695
        %v3651 = vpow.pop %v3650
        %v3652 = vmul.f32 %v3512, 1.442695
        %v3653 = vpow.pop %v3652
        %v3654 = vmul.f32 %v3513, 1.442695
        %v3655 = vpow.pop %v3654
        %v3656 = vmul.f32 %v3514, 1.442695
        %v3657 = vpow.pop %v3656
        %v3658 = vmul.f32 %v3515, 1.442695
        %v3659 = vpow.pop %v3658
        %v3660 = vmul.f32 %v3516, 1.442695
        %v3661 = vpow.pop %v3660
        %v3662 = vmul.f32 %v3517, 1.442695
        %v3663 = vpow.pop %v3662
        %v3664 = vmul.f32 %v3518, 1.442695
        %v3665 = vpow.pop %v3664
        %v3666 = vmul.f32 %v3519, 1.442695
        %v3667 = vpow.pop %v3666
        %v3668 = vmul.f32 %v3520, 1.442695
        %v3669 = vpow.pop %v3668
        %v3670 = vmul.f32 %v3521, 1.442695
        %v3671 = vpow.pop %v3670
        %v3672 = vmul.f32 %v3522, 1.442695
        %v3673 = vpow.pop %v3672
        %v3674 = vmul.f32 %v3523, 1.442695
        %v3675 = vpow.pop %v3674
        %v3676 = vmul.f32 %v3524, 1.442695
        %v3677 = vpow.pop %v3676
        %v3678 = vmul.f32 %v3525, 1.442695
        %v3679 = vpow.pop %v3678
        %v3680 = vmul.f32 %v3526, 1.442695
        %v3681 = vpow.pop %v3680
        %v3682 = vmul.f32 %v3527, 1.442695
        %v3683 = vpow.pop %v3682
        %v3684 = vmul.f32 %v3528, 1.442695
        %v3685 = vpow.pop %v3684
        %v3686 = vmul.f32 %v3529, 1.442695
        %v3687 = vpow.pop %v3686
        %v3688 = vmul.f32 %v3530, 1.442695
        %v3689 = vpow.pop %v3688
        %v3690 = vmul.f32 %v3531, 1.442695
        %v3691 = vpow.pop %v3690
        %v3692 = vmul.f32 %v3532, 1.442695
        %v3693 = vpow.pop %v3692
        %v3694 = vmul.f32 %v3533, 1.442695
        %v3695 = vpow.pop %v3694
        %v3696 = vmul.f32 %v3534, 1.442695
        %v3697 = vpow.pop %v3696
        %v3698 = vmul.f32 %v3535, 1.442695
        %v3699 = vpow.pop %v3698
        %v3700 = vmul.f32 %v3536, 1.442695
        %v3701 = vpow.pop %v3700
        %v3702 = vmul.f32 %v3537, 1.442695
        %v3703 = vpow.pop %v3702
        %v3704 = vmul.f32 %v3538, 1.442695
        %v3705 = vpow.pop %v3704
        %v3706 = vmul.f32 %v3539, 1.442695
        %v3707 = vpow.pop %v3706
        %v3708 = vmul.f32 %v3540, 1.442695
        %v3709 = vpow.pop %v3708
        %v3710 = vmul.f32 %v3541, 1.442695
        %v3711 = vpow.pop %v3710
        %v3712 = vmul.f32 %v3542, 1.442695
        %v3713 = vpow.pop %v3712
        %v3714 = vmul.f32 %v3543, 1.442695
        %v3715 = vpow.pop %v3714
        %v3716 = vmul.f32 %v3544, 1.442695
        %v3717 = vpow.pop %v3716
        %v3718 = vmul.f32 %v3545, 1.442695
        %v3719 = vpow.pop %v3718
        %v3720 = vmul.f32 %v3546, 1.442695
        %v3721 = vpow.pop %v3720
        %v3722 = vmul.f32 %v3547, 1.442695
        %v3723 = vpow.pop %v3722
        %v3724 = vmul.f32 %v3548, 1.442695
        %v3725 = vpow.pop %v3724
        %v3726 = vmul.f32 %v3549, 1.442695
        %v3727 = vpow.pop %v3726
        %v3728 = vmul.f32 %v3550, 1.442695
        %v3729 = vpow.pop %v3728
        %v3730 = vmul.f32 %v3551, 1.442695
        %v3731 = vpow.pop %v3730
        %v3732 = vmul.f32 %v3552, 1.442695
        %v3733 = vpow.pop %v3732
        %v3734 = vmul.f32 %v3553, 1.442695
        %v3735 = vpow.pop %v3734
        %v3736 = vmul.f32 %v3554, 1.442695
        %v3737 = vpow.pop %v3736
        %v3738 = vmul.f32 %v3555, 1.442695
        %v3739 = vpow.pop %v3738
        %v3740 = vmul.f32 %v3556, 1.442695
        %v3741 = vpow.pop %v3740
        %v3742 = vmul.f32 %v3557, 1.442695
        %v3743 = vpow.pop %v3742
        %v3744 = vmul.f32 %v3558, 1.442695
        %v3745 = vpow.pop %v3744
        %v3746 = vmul.f32 %v3559, 1.442695
        %v3747 = vpow.pop %v3746
        %v3748 = vmul.f32 %v3560, 1.442695
        %v3749 = vpow.pop %v3748
        %v3750 = vmul.f32 %v3561, 1.442695
        %v3751 = vpow.pop %v3750
        %v3752 = vmul.f32 %v3562, 1.442695
        %v3753 = vpow.pop %v3752
        %v3754 = vmul.f32 %v3563, 1.442695
        %v3755 = vpow.pop %v3754
        %v3756 = vmul.f32 %v3564, 1.442695
        %v3757 = vpow.pop %v3756
        %v3758 = vmul.f32 %v3565, 1.442695
        %v3759 = vpow.pop %v3758
        %v3760 = vmul.f32 %v3566, 1.442695
        %v3761 = vpow.pop %v3760
        %v3762 = vmul.f32 %v3567, 1.442695
        %v3763 = vpow.pop %v3762
        %v3764 = vmul.f32 %v3568, 1.442695
        %v3765 = vpow.pop %v3764
        %v3766 = vmul.f32 %v3569, 1.442695
        %v3767 = vpow.pop %v3766
        %v3768 = vmul.f32 %v3570, 1.442695
        %v3769 = vpow.pop %v3768
        %v3770 = vmul.f32 %v3571, 1.442695
        %v3771 = vpow.pop %v3770
        %v3772 = vmul.f32 %v3572, 1.442695
        %v3773 = vpow.pop %v3772
        %v3774 = vmul.f32 %v3573, 1.442695
        %v3775 = vpow.pop %v3774
        %v3776 = vmul.f32 %v3574, 1.442695
        %v3777 = vpow.pop %v3776
        %v3778 = vmul.f32 %v3575, 1.442695
        %v3779 = vpow.pop %v3778
        %v3780 = vmul.f32 %v3576, 1.442695
        %v3781 = vpow.pop %v3780
        %v3782 = vmul.f32 %v3577, 1.442695
        %v3783 = vpow.pop %v3782
        %v3784 = vmul.f32 %v3578, 1.442695
        %v3785 = vpow.pop %v3784
        %v3786 = vmul.f32 %v3579, 1.442695
        %v3787 = vpow.pop %v3786
        %v3788 = vmul.f32 %v3580, 1.442695
        %v3789 = vpow.pop %v3788
        %v3790 = vmul.f32 %v3581, 1.442695
        %v3791 = vpow.pop %v3790
        %v3792 = vmul.f32 %v3582, 1.442695
        %v3793 = vpow.pop %v3792
        %v3794 = vmul.f32 %v3583, 1.442695
        %v3795 = vpow.pop %v3794
        %v3796 = vmul.f32 %v3584, 1.442695
        %v3797 = vpow.pop %v3796
        %v3798 = vmul.f32 %v3585, 1.442695
        %v3799 = vpow.pop %v3798
        %v3800 = vmul.f32 %v3586, 1.442695
        %v3801 = vpow.pop %v3800
        %v3802 = vmul.f32 %v3587, 1.442695
        %v3803 = vpow.pop %v3802
        %v3804 = vmul.f32 %v3588, 1.442695
        %v3805 = vpow.pop %v3804
        %v3806 = vmul.f32 %v3589, 1.442695
        %v3807 = vpow.pop %v3806
        %v3808 = vmul.f32 %v3590, 1.442695
        %v3809 = vpow.pop %v3808
        %v3810 = vmul.f32 %v3591, 1.442695
        %v3811 = vpow.pop %v3810
        %v3812 = vmul.f32 %v3592, 1.442695
        %v3813 = vpow.pop %v3812
        %v3814 = vmul.f32 %v3593, 1.442695
        %v3815 = vpow.pop %v3814
        %v3816 = vmul.f32 %v3594, 1.442695
        %v3817 = vpow.pop %v3816
        %v3818 = vmul.f32 %v3595, 1.442695
        %v3819 = vpow.pop %v3818
        %v3820 = vmul.f32 %v3596, 1.442695
        %v3821 = vpow.pop %v3820
        %v3822 = vmul.f32 %v3597, 1.442695
        %v3823 = vpow.pop %v3822
        %v3824 = vmul.f32 %v3598, 1.442695
        %v3825 = vpow.pop %v3824
        %v3826 = vmul.f32 %v3599, 1.442695
        %v3827 = vpow.pop %v3826
        %v3828 = vmul.f32 %v3600, 1.442695
        %v3829 = vpow.pop %v3828
        %v3830 = vmul.f32 %v3601, 1.442695
        %v3831 = vpow.pop %v3830
        %v3832 = vmul.f32 %v3602, 1.442695
        %v3833 = vpow.pop %v3832
        %v3834 = vmul.f32 %v3603, 1.442695
        %v3835 = vpow.pop %v3834
        %v3836 = vmul.f32 %v3604, 1.442695
        %v3837 = vpow.pop %v3836
        %v3838 = vmul.f32 %v3605, 1.442695
        %v3839 = vpow.pop %v3838
        %v3840 = vmul.f32 %v3606, 1.442695
        %v3841 = vpow.pop %v3840
        %v3842 = vmul.f32 %v3607, 1.442695
        %v3843 = vpow.pop %v3842
        %v3844 = vmul.f32 %v3608, 1.442695
        %v3845 = vpow.pop %v3844
        %v3846 = vmul.f32 %v3609, 1.442695
        %v3847 = vpow.pop %v3846
        %v3848 = vmul.f32 %v3610, 1.442695
        %v3849 = vpow.pop %v3848
        %v3850 = vmul.f32 %v3611, 1.442695
        %v3851 = vpow.pop %v3850
        %v3852 = vmul.f32 %v3612, 1.442695
        %v3853 = vpow.pop %v3852
        %v3854 = vmul.f32 %v3613, 1.442695
        %v3855 = vpow.pop %v3854
        %v3856 = vmul.f32 %v3614, 1.442695
        %v3857 = vpow.pop %v3856
        %v3858 = vmul.f32 %v3615, 1.442695
        %v3859 = vpow.pop %v3858
        %v3860 = vmul.f32 %v3616, 1.442695
        %v3861 = vpow.pop %v3860
        %v3862 = vmul.f32 %v3617, 1.442695
        %v3863 = vpow.pop %v3862
        %v3864 = vmul.f32 %v3618, 1.442695
        %v3865 = vpow.pop %v3864
        %v3866 = vmul.f32 %v3619, 1.442695
        %v3867 = vpow.pop %v3866
        %v3868 = vmul.f32 %v3620, 1.442695
        %v3869 = vpow.pop %v3868
        %v3870 = vmul.f32 %v3621, 1.442695
        %v3871 = vpow.pop %v3870
        %v3872 = vmul.f32 %v3622, 1.442695
        %v3873 = vpow.pop %v3872
        %v3874 = vmul.f32 %v3623, 1.442695
        %v3875 = vpow.pop %v3874
        %v3876 = vmul.f32 %v3624, 1.442695
        %v3877 = vpow.pop %v3876
        %v3878 = vmul.f32 %v3625, 1.442695
        %v3879 = vpow.pop %v3878
        %v3880 = vmul.f32 %v3626, 1.442695
        %v3881 = vpow.pop %v3880
        %v3882 = vmul.f32 %v3627, 1.442695
        %v3883 = vpow.pop %v3882
        %v3884 = vadd.f32 %v3629, 1.0
        %v3885 = vadd.f32 %v3631, 1.0
        %v3886 = vadd.f32 %v3633, 1.0
        %v3887 = vadd.f32 %v3635, 1.0
        %v3888 = vadd.f32 %v3637, 1.0
        %v3889 = vadd.f32 %v3639, 1.0
        %v3890 = vadd.f32 %v3641, 1.0
        %v3891 = vadd.f32 %v3643, 1.0
        %v3892 = vadd.f32 %v3645, 1.0
        %v3893 = vadd.f32 %v3647, 1.0
        %v3894 = vadd.f32 %v3649, 1.0
        %v3895 = vadd.f32 %v3651, 1.0
        %v3896 = vadd.f32 %v3653, 1.0
        %v3897 = vadd.f32 %v3655, 1.0
        %v3898 = vadd.f32 %v3657, 1.0
        %v3899 = vadd.f32 %v3659, 1.0
        %v3900 = vadd.f32 %v3661, 1.0
        %v3901 = vadd.f32 %v3663, 1.0
        %v3902 = vadd.f32 %v3665, 1.0
        %v3903 = vadd.f32 %v3667, 1.0
        %v3904 = vadd.f32 %v3669, 1.0
        %v3905 = vadd.f32 %v3671, 1.0
        %v3906 = vadd.f32 %v3673, 1.0
        %v3907 = vadd.f32 %v3675, 1.0
        %v3908 = vadd.f32 %v3677, 1.0
        %v3909 = vadd.f32 %v3679, 1.0
        %v3910 = vadd.f32 %v3681, 1.0
        %v3911 = vadd.f32 %v3683, 1.0
        %v3912 = vadd.f32 %v3685, 1.0
        %v3913 = vadd.f32 %v3687, 1.0
        %v3914 = vadd.f32 %v3689, 1.0
        %v3915 = vadd.f32 %v3691, 1.0
        %v3916 = vadd.f32 %v3693, 1.0
        %v3917 = vadd.f32 %v3695, 1.0
        %v3918 = vadd.f32 %v3697, 1.0
        %v3919 = vadd.f32 %v3699, 1.0
        %v3920 = vadd.f32 %v3701, 1.0
        %v3921 = vadd.f32 %v3703, 1.0
        %v3922 = vadd.f32 %v3705, 1.0
        %v3923 = vadd.f32 %v3707, 1.0
        %v3924 = vadd.f32 %v3709, 1.0
        %v3925 = vadd.f32 %v3711, 1.0
        %v3926 = vadd.f32 %v3713, 1.0
        %v3927 = vadd.f32 %v3715, 1.0
        %v3928 = vadd.f32 %v3717, 1.0
        %v3929 = vadd.f32 %v3719, 1.0
        %v3930 = vadd.f32 %v3721, 1.0
        %v3931 = vadd.f32 %v3723, 1.0
        %v3932 = vadd.f32 %v3725, 1.0
        %v3933 = vadd.f32 %v3727, 1.0
        %v3934 = vadd.f32 %v3729, 1.0
        %v3935 = vadd.f32 %v3731, 1.0
        %v3936 = vadd.f32 %v3733, 1.0
        %v3937 = vadd.f32 %v3735, 1.0
        %v3938 = vadd.f32 %v3737, 1.0
        %v3939 = vadd.f32 %v3739, 1.0
        %v3940 = vadd.f32 %v3741, 1.0
        %v3941 = vadd.f32 %v3743, 1.0
        %v3942 = vadd.f32 %v3745, 1.0
        %v3943 = vadd.f32 %v3747, 1.0
        %v3944 = vadd.f32 %v3749, 1.0
        %v3945 = vadd.f32 %v3751, 1.0
        %v3946 = vadd.f32 %v3753, 1.0
        %v3947 = vadd.f32 %v3755, 1.0
        %v3948 = vadd.f32 %v3757, 1.0
        %v3949 = vadd.f32 %v3759, 1.0
        %v3950 = vadd.f32 %v3761, 1.0
        %v3951 = vadd.f32 %v3763, 1.0
        %v3952 = vadd.f32 %v3765, 1.0
        %v3953 = vadd.f32 %v3767, 1.0
        %v3954 = vadd.f32 %v3769, 1.0
        %v3955 = vadd.f32 %v3771, 1.0
        %v3956 = vadd.f32 %v3773, 1.0
        %v3957 = vadd.f32 %v3775, 1.0
        %v3958 = vadd.f32 %v3777, 1.0
        %v3959 = vadd.f32 %v3779, 1.0
        %v3960 = vadd.f32 %v3781, 1.0
        %v3961 = vadd.f32 %v3783, 1.0
        %v3962 = vadd.f32 %v3785, 1.0
        %v3963 = vadd.f32 %v3787, 1.0
        %v3964 = vadd.f32 %v3789, 1.0
        %v3965 = vadd.f32 %v3791, 1.0
        %v3966 = vadd.f32 %v3793, 1.0
        %v3967 = vadd.f32 %v3795, 1.0
        %v3968 = vadd.f32 %v3797, 1.0
        %v3969 = vadd.f32 %v3799, 1.0
        %v3970 = vadd.f32 %v3801, 1.0
        %v3971 = vadd.f32 %v3803, 1.0
        %v3972 = vadd.f32 %v3805, 1.0
        %v3973 = vadd.f32 %v3807, 1.0
        %v3974 = vadd.f32 %v3809, 1.0
        %v3975 = vadd.f32 %v3811, 1.0
        %v3976 = vadd.f32 %v3813, 1.0
        %v3977 = vadd.f32 %v3815, 1.0
        %v3978 = vadd.f32 %v3817, 1.0
        %v3979 = vadd.f32 %v3819, 1.0
        %v3980 = vadd.f32 %v3821, 1.0
        %v3981 = vadd.f32 %v3823, 1.0
        %v3982 = vadd.f32 %v3825, 1.0
        %v3983 = vadd.f32 %v3827, 1.0
        %v3984 = vadd.f32 %v3829, 1.0
        %v3985 = vadd.f32 %v3831, 1.0
        %v3986 = vadd.f32 %v3833, 1.0
        %v3987 = vadd.f32 %v3835, 1.0
        %v3988 = vadd.f32 %v3837, 1.0
        %v3989 = vadd.f32 %v3839, 1.0
        %v3990 = vadd.f32 %v3841, 1.0
        %v3991 = vadd.f32 %v3843, 1.0
        %v3992 = vadd.f32 %v3845, 1.0
        %v3993 = vadd.f32 %v3847, 1.0
        %v3994 = vadd.f32 %v3849, 1.0
        %v3995 = vadd.f32 %v3851, 1.0
        %v3996 = vadd.f32 %v3853, 1.0
        %v3997 = vadd.f32 %v3855, 1.0
        %v3998 = vadd.f32 %v3857, 1.0
        %v3999 = vadd.f32 %v3859, 1.0
        %v4000 = vadd.f32 %v3861, 1.0
        %v4001 = vadd.f32 %v3863, 1.0
        %v4002 = vadd.f32 %v3865, 1.0
        %v4003 = vadd.f32 %v3867, 1.0
        %v4004 = vadd.f32 %v3869, 1.0
        %v4005 = vadd.f32 %v3871, 1.0
        %v4006 = vadd.f32 %v3873, 1.0
        %v4007 = vadd.f32 %v3875, 1.0
        %v4008 = vadd.f32 %v3877, 1.0
        %v4009 = vadd.f32 %v3879, 1.0
        %v4010 = vadd.f32 %v3881, 1.0
        %v4011 = vadd.f32 %v3883, 1.0
        %v4012 = vrcp.pop %v3884
        %v4013 = vmul.f32 1.0, %v4012
        %v4014 = vrcp.pop %v3885
        %v4015 = vmul.f32 1.0, %v4014
        %v4016 = vrcp.pop %v3886
        %v4017 = vmul.f32 1.0, %v4016
        %v4018 = vrcp.pop %v3887
        %v4019 = vmul.f32 1.0, %v4018
        %v4020 = vrcp.pop %v3888
        %v4021 = vmul.f32 1.0, %v4020
        %v4022 = vrcp.pop %v3889
        %v4023 = vmul.f32 1.0, %v4022
        %v4024 = vrcp.pop %v3890
        %v4025 = vmul.f32 1.0, %v4024
        %v4026 = vrcp.pop %v3891
        %v4027 = vmul.f32 1.0, %v4026
        %v4028 = vrcp.pop %v3892
        %v4029 = vmul.f32 1.0, %v4028
        %v4030 = vrcp.pop %v3893
        %v4031 = vmul.f32 1.0, %v4030
        %v4032 = vrcp.pop %v3894
        %v4033 = vmul.f32 1.0, %v4032
        %v4034 = vrcp.pop %v3895
        %v4035 = vmul.f32 1.0, %v4034
        %v4036 = vrcp.pop %v3896
        %v4037 = vmul.f32 1.0, %v4036
        %v4038 = vrcp.pop %v3897
        %v4039 = vmul.f32 1.0, %v4038
        %v4040 = vrcp.pop %v3898
        %v4041 = vmul.f32 1.0, %v4040
        %v4042 = vrcp.pop %v3899
        %v4043 = vmul.f32 1.0, %v4042
        %v4044 = vrcp.pop %v3900
        %v4045 = vmul.f32 1.0, %v4044
        %v4046 = vrcp.pop %v3901
        %v4047 = vmul.f32 1.0, %v4046
        %v4048 = vrcp.pop %v3902
        %v4049 = vmul.f32 1.0, %v4048
        %v4050 = vrcp.pop %v3903
        %v4051 = vmul.f32 1.0, %v4050
        %v4052 = vrcp.pop %v3904
        %v4053 = vmul.f32 1.0, %v4052
        %v4054 = vrcp.pop %v3905
        %v4055 = vmul.f32 1.0, %v4054
        %v4056 = vrcp.pop %v3906
        %v4057 = vmul.f32 1.0, %v4056
        %v4058 = vrcp.pop %v3907
        %v4059 = vmul.f32 1.0, %v4058
        %v4060 = vrcp.pop %v3908
        %v4061 = vmul.f32 1.0, %v4060
        %v4062 = vrcp.pop %v3909
        %v4063 = vmul.f32 1.0, %v4062
        %v4064 = vrcp.pop %v3910
        %v4065 = vmul.f32 1.0, %v4064
        %v4066 = vrcp.pop %v3911
        %v4067 = vmul.f32 1.0, %v4066
        %v4068 = vrcp.pop %v3912
        %v4069 = vmul.f32 1.0, %v4068
        %v4070 = vrcp.pop %v3913
        %v4071 = vmul.f32 1.0, %v4070
        %v4072 = vrcp.pop %v3914
        %v4073 = vmul.f32 1.0, %v4072
        %v4074 = vrcp.pop %v3915
        %v4075 = vmul.f32 1.0, %v4074
        %v4076 = vrcp.pop %v3916
        %v4077 = vmul.f32 1.0, %v4076
        %v4078 = vrcp.pop %v3917
        %v4079 = vmul.f32 1.0, %v4078
        %v4080 = vrcp.pop %v3918
        %v4081 = vmul.f32 1.0, %v4080
        %v4082 = vrcp.pop %v3919
        %v4083 = vmul.f32 1.0, %v4082
        %v4084 = vrcp.pop %v3920
        %v4085 = vmul.f32 1.0, %v4084
        %v4086 = vrcp.pop %v3921
        %v4087 = vmul.f32 1.0, %v4086
        %v4088 = vrcp.pop %v3922
        %v4089 = vmul.f32 1.0, %v4088
        %v4090 = vrcp.pop %v3923
        %v4091 = vmul.f32 1.0, %v4090
        %v4092 = vrcp.pop %v3924
        %v4093 = vmul.f32 1.0, %v4092
        %v4094 = vrcp.pop %v3925
        %v4095 = vmul.f32 1.0, %v4094
        %v4096 = vrcp.pop %v3926
        %v4097 = vmul.f32 1.0, %v4096
        %v4098 = vrcp.pop %v3927
        %v4099 = vmul.f32 1.0, %v4098
        %v4100 = vrcp.pop %v3928
        %v4101 = vmul.f32 1.0, %v4100
        %v4102 = vrcp.pop %v3929
        %v4103 = vmul.f32 1.0, %v4102
        %v4104 = vrcp.pop %v3930
        %v4105 = vmul.f32 1.0, %v4104
        %v4106 = vrcp.pop %v3931
        %v4107 = vmul.f32 1.0, %v4106
        %v4108 = vrcp.pop %v3932
        %v4109 = vmul.f32 1.0, %v4108
        %v4110 = vrcp.pop %v3933
        %v4111 = vmul.f32 1.0, %v4110
        %v4112 = vrcp.pop %v3934
        %v4113 = vmul.f32 1.0, %v4112
        %v4114 = vrcp.pop %v3935
        %v4115 = vmul.f32 1.0, %v4114
        %v4116 = vrcp.pop %v3936
        %v4117 = vmul.f32 1.0, %v4116
        %v4118 = vrcp.pop %v3937
        %v4119 = vmul.f32 1.0, %v4118
        %v4120 = vrcp.pop %v3938
        %v4121 = vmul.f32 1.0, %v4120
        %v4122 = vrcp.pop %v3939
        %v4123 = vmul.f32 1.0, %v4122
        %v4124 = vrcp.pop %v3940
        %v4125 = vmul.f32 1.0, %v4124
        %v4126 = vrcp.pop %v3941
        %v4127 = vmul.f32 1.0, %v4126
        %v4128 = vrcp.pop %v3942
        %v4129 = vmul.f32 1.0, %v4128
        %v4130 = vrcp.pop %v3943
        %v4131 = vmul.f32 1.0, %v4130
        %v4132 = vrcp.pop %v3944
        %v4133 = vmul.f32 1.0, %v4132
        %v4134 = vrcp.pop %v3945
        %v4135 = vmul.f32 1.0, %v4134
        %v4136 = vrcp.pop %v3946
        %v4137 = vmul.f32 1.0, %v4136
        %v4138 = vrcp.pop %v3947
        %v4139 = vmul.f32 1.0, %v4138
        %v4140 = vrcp.pop %v3948
        %v4141 = vmul.f32 1.0, %v4140
        %v4142 = vrcp.pop %v3949
        %v4143 = vmul.f32 1.0, %v4142
        %v4144 = vrcp.pop %v3950
        %v4145 = vmul.f32 1.0, %v4144
        %v4146 = vrcp.pop %v3951
        %v4147 = vmul.f32 1.0, %v4146
        %v4148 = vrcp.pop %v3952
        %v4149 = vmul.f32 1.0, %v4148
        %v4150 = vrcp.pop %v3953
        %v4151 = vmul.f32 1.0, %v4150
        %v4152 = vrcp.pop %v3954
        %v4153 = vmul.f32 1.0, %v4152
        %v4154 = vrcp.pop %v3955
        %v4155 = vmul.f32 1.0, %v4154
        %v4156 = vrcp.pop %v3956
        %v4157 = vmul.f32 1.0, %v4156
        %v4158 = vrcp.pop %v3957
        %v4159 = vmul.f32 1.0, %v4158
        %v4160 = vrcp.pop %v3958
        %v4161 = vmul.f32 1.0, %v4160
        %v4162 = vrcp.pop %v3959
        %v4163 = vmul.f32 1.0, %v4162
        %v4164 = vrcp.pop %v3960
        %v4165 = vmul.f32 1.0, %v4164
        %v4166 = vrcp.pop %v3961
        %v4167 = vmul.f32 1.0, %v4166
        %v4168 = vrcp.pop %v3962
        %v4169 = vmul.f32 1.0, %v4168
        %v4170 = vrcp.pop %v3963
        %v4171 = vmul.f32 1.0, %v4170
        %v4172 = vrcp.pop %v3964
        %v4173 = vmul.f32 1.0, %v4172
        %v4174 = vrcp.pop %v3965
        %v4175 = vmul.f32 1.0, %v4174
        %v4176 = vrcp.pop %v3966
        %v4177 = vmul.f32 1.0, %v4176
        %v4178 = vrcp.pop %v3967
        %v4179 = vmul.f32 1.0, %v4178
        %v4180 = vrcp.pop %v3968
        %v4181 = vmul.f32 1.0, %v4180
        %v4182 = vrcp.pop %v3969
        %v4183 = vmul.f32 1.0, %v4182
        %v4184 = vrcp.pop %v3970
        %v4185 = vmul.f32 1.0, %v4184
        %v4186 = vrcp.pop %v3971
        %v4187 = vmul.f32 1.0, %v4186
        %v4188 = vrcp.pop %v3972
        %v4189 = vmul.f32 1.0, %v4188
        %v4190 = vrcp.pop %v3973
        %v4191 = vmul.f32 1.0, %v4190
        %v4192 = vrcp.pop %v3974
        %v4193 = vmul.f32 1.0, %v4192
        %v4194 = vrcp.pop %v3975
        %v4195 = vmul.f32 1.0, %v4194
        %v4196 = vrcp.pop %v3976
        %v4197 = vmul.f32 1.0, %v4196
        %v4198 = vrcp.pop %v3977
        %v4199 = vmul.f32 1.0, %v4198
        %v4200 = vrcp.pop %v3978
        %v4201 = vmul.f32 1.0, %v4200
        %v4202 = vrcp.pop %v3979
        %v4203 = vmul.f32 1.0, %v4202
        %v4204 = vrcp.pop %v3980
        %v4205 = vmul.f32 1.0, %v4204
        %v4206 = vrcp.pop %v3981
        %v4207 = vmul.f32 1.0, %v4206
        %v4208 = vrcp.pop %v3982
        %v4209 = vmul.f32 1.0, %v4208
        %v4210 = vrcp.pop %v3983
        %v4211 = vmul.f32 1.0, %v4210
        %v4212 = vrcp.pop %v3984
        %v4213 = vmul.f32 1.0, %v4212
        %v4214 = vrcp.pop %v3985
        %v4215 = vmul.f32 1.0, %v4214
        %v4216 = vrcp.pop %v3986
        %v4217 = vmul.f32 1.0, %v4216
        %v4218 = vrcp.pop %v3987
        %v4219 = vmul.f32 1.0, %v4218
        %v4220 = vrcp.pop %v3988
        %v4221 = vmul.f32 1.0, %v4220
        %v4222 = vrcp.pop %v3989
        %v4223 = vmul.f32 1.0, %v4222
        %v4224 = vrcp.pop %v3990
        %v4225 = vmul.f32 1.0, %v4224
        %v4226 = vrcp.pop %v3991
        %v4227 = vmul.f32 1.0, %v4226
        %v4228 = vrcp.pop %v3992
        %v4229 = vmul.f32 1.0, %v4228
        %v4230 = vrcp.pop %v3993
        %v4231 = vmul.f32 1.0, %v4230
        %v4232 = vrcp.pop %v3994
        %v4233 = vmul.f32 1.0, %v4232
        %v4234 = vrcp.pop %v3995
        %v4235 = vmul.f32 1.0, %v4234
        %v4236 = vrcp.pop %v3996
        %v4237 = vmul.f32 1.0, %v4236
        %v4238 = vrcp.pop %v3997
        %v4239 = vmul.f32 1.0, %v4238
        %v4240 = vrcp.pop %v3998
        %v4241 = vmul.f32 1.0, %v4240
        %v4242 = vrcp.pop %v3999
        %v4243 = vmul.f32 1.0, %v4242
        %v4244 = vrcp.pop %v4000
        %v4245 = vmul.f32 1.0, %v4244
        %v4246 = vrcp.pop %v4001
        %v4247 = vmul.f32 1.0, %v4246
        %v4248 = vrcp.pop %v4002
        %v4249 = vmul.f32 1.0, %v4248
        %v4250 = vrcp.pop %v4003
        %v4251 = vmul.f32 1.0, %v4250
        %v4252 = vrcp.pop %v4004
        %v4253 = vmul.f32 1.0, %v4252
        %v4254 = vrcp.pop %v4005
        %v4255 = vmul.f32 1.0, %v4254
        %v4256 = vrcp.pop %v4006
        %v4257 = vmul.f32 1.0, %v4256
        %v4258 = vrcp.pop %v4007
        %v4259 = vmul.f32 1.0, %v4258
        %v4260 = vrcp.pop %v4008
        %v4261 = vmul.f32 1.0, %v4260
        %v4262 = vrcp.pop %v4009
        %v4263 = vmul.f32 1.0, %v4262
        %v4264 = vrcp.pop %v4010
        %v4265 = vmul.f32 1.0, %v4264
        %v4266 = vrcp.pop %v4011
        %v4267 = vmul.f32 1.0, %v4266
        %v4268 = vpack.c.bf16 %v4015, %v4013
        %v4269 = vpack.c.bf16 %v4019, %v4017
        %v4270 = vpack.c.bf16 %v4023, %v4021
        %v4271 = vpack.c.bf16 %v4027, %v4025
        %v4272 = vpack.c.bf16 %v4031, %v4029
        %v4273 = vpack.c.bf16 %v4035, %v4033
        %v4274 = vpack.c.bf16 %v4039, %v4037
        %v4275 = vpack.c.bf16 %v4043, %v4041
        %v4276 = vpack.c.bf16 %v4047, %v4045
        %v4277 = vpack.c.bf16 %v4051, %v4049
        %v4278 = vpack.c.bf16 %v4055, %v4053
        %v4279 = vpack.c.bf16 %v4059, %v4057
        %v4280 = vpack.c.bf16 %v4063, %v4061
        %v4281 = vpack.c.bf16 %v4067, %v4065
        %v4282 = vpack.c.bf16 %v4071, %v4069
        %v4283 = vpack.c.bf16 %v4075, %v4073
        %v4284 = vpack.c.bf16 %v4079, %v4077
        %v4285 = vpack.c.bf16 %v4083, %v4081
        %v4286 = vpack.c.bf16 %v4087, %v4085
        %v4287 = vpack.c.bf16 %v4091, %v4089
        %v4288 = vpack.c.bf16 %v4095, %v4093
        %v4289 = vpack.c.bf16 %v4099, %v4097
        %v4290 = vpack.c.bf16 %v4103, %v4101
        %v4291 = vpack.c.bf16 %v4107, %v4105
        %v4292 = vpack.c.bf16 %v4111, %v4109
        %v4293 = vpack.c.bf16 %v4115, %v4113
        %v4294 = vpack.c.bf16 %v4119, %v4117
        %v4295 = vpack.c.bf16 %v4123, %v4121
        %v4296 = vpack.c.bf16 %v4127, %v4125
        %v4297 = vpack.c.bf16 %v4131, %v4129
        %v4298 = vpack.c.bf16 %v4135, %v4133
        %v4299 = vpack.c.bf16 %v4139, %v4137
        %v4300 = vpack.c.bf16 %v4143, %v4141
        %v4301 = vpack.c.bf16 %v4147, %v4145
        %v4302 = vpack.c.bf16 %v4151, %v4149
        %v4303 = vpack.c.bf16 %v4155, %v4153
        %v4304 = vpack.c.bf16 %v4159, %v4157
        %v4305 = vpack.c.bf16 %v4163, %v4161
        %v4306 = vpack.c.bf16 %v4167, %v4165
        %v4307 = vpack.c.bf16 %v4171, %v4169
        %v4308 = vpack.c.bf16 %v4175, %v4173
        %v4309 = vpack.c.bf16 %v4179, %v4177
        %v4310 = vpack.c.bf16 %v4183, %v4181
        %v4311 = vpack.c.bf16 %v4187, %v4185
        %v4312 = vpack.c.bf16 %v4191, %v4189
        %v4313 = vpack.c.bf16 %v4195, %v4193
        %v4314 = vpack.c.bf16 %v4199, %v4197
        %v4315 = vpack.c.bf16 %v4203, %v4201
        %v4316 = vpack.c.bf16 %v4207, %v4205
        %v4317 = vpack.c.bf16 %v4211, %v4209
        %v4318 = vpack.c.bf16 %v4215, %v4213
        %v4319 = vpack.c.bf16 %v4219, %v4217
        %v4320 = vpack.c.bf16 %v4223, %v4221
        %v4321 = vpack.c.bf16 %v4227, %v4225
        %v4322 = vpack.c.bf16 %v4231, %v4229
        %v4323 = vpack.c.bf16 %v4235, %v4233
        %v4324 = vpack.c.bf16 %v4239, %v4237
        %v4325 = vpack.c.bf16 %v4243, %v4241
        %v4326 = vpack.c.bf16 %v4247, %v4245
        %v4327 = vpack.c.bf16 %v4251, %v4249
        %v4328 = vpack.c.bf16 %v4255, %v4253
        %v4329 = vpack.c.bf16 %v4259, %v4257
        %v4330 = vpack.c.bf16 %v4263, %v4261
        %v4331 = vpack.c.bf16 %v4267, %v4265
        %v4332 = vld [vmem:[%s366] sm:$0x1]
        %v4333 = vld [vmem:[%s366 + $0x1] sm:$0x1]
        %v4334 = vld [vmem:[%s366 + $0x2] sm:$0x1]
        %v4335 = vld [vmem:[%s366 + $0x3] sm:$0x1]
        %v4336 = vld [vmem:[%s366 + $0x4] sm:$0x1]
        %v4337 = vld [vmem:[%s366 + $0x5] sm:$0x1]
        %v4338 = vld [vmem:[%s366 + $0x6] sm:$0x1]
        %v4339 = vld [vmem:[%s366 + $0x7] sm:$0x1]
        %v4340 = vld [vmem:[%s366 + $0x8] sm:$0x1]
        %v4341 = vld [vmem:[%s366 + $0x9] sm:$0x1]
        %v4342 = vld [vmem:[%s366 + $0xa] sm:$0x1]
        %v4343 = vld [vmem:[%s366 + $0xb] sm:$0x1]
        %v4344 = vld [vmem:[%s366 + $0xc] sm:$0x1]
        %v4345 = vld [vmem:[%s366 + $0xd] sm:$0x1]
        %v4346 = vld [vmem:[%s366 + $0xe] sm:$0x1]
        %v4347 = vld [vmem:[%s366 + $0xf] sm:$0x1]
        %v4348 = vld [vmem:[%s371] sm:$0x1]
        %v4349 = vld [vmem:[%s371 + $0x1] sm:$0x1]
        %v4350 = vld [vmem:[%s371 + $0x2] sm:$0x1]
        %v4351 = vld [vmem:[%s371 + $0x3] sm:$0x1]
        %v4352 = vld [vmem:[%s371 + $0x4] sm:$0x1]
        %v4353 = vld [vmem:[%s371 + $0x5] sm:$0x1]
        %v4354 = vld [vmem:[%s371 + $0x6] sm:$0x1]
        %v4355 = vld [vmem:[%s371 + $0x7] sm:$0x1]
        %v4356 = vld [vmem:[%s371 + $0x8] sm:$0x1]
        %v4357 = vld [vmem:[%s371 + $0x9] sm:$0x1]
        %v4358 = vld [vmem:[%s371 + $0xa] sm:$0x1]
        %v4359 = vld [vmem:[%s371 + $0xb] sm:$0x1]
        %v4360 = vld [vmem:[%s371 + $0xc] sm:$0x1]
        %v4361 = vld [vmem:[%s371 + $0xd] sm:$0x1]
        %v4362 = vld [vmem:[%s371 + $0xe] sm:$0x1]
        %v4363 = vld [vmem:[%s371 + $0xf] sm:$0x1]
        %4365 = vset.pattern.permute.xlu0 0
        %4366 = vperm.xlu0 %4365, %v4348
        %v4367 = vpop.permute.xlu0 %4366
        %v4369 = vlaneseq
        %v4370 = vshrl.u32 %v4369, 7
        %v4371 = vsub.s32 0, %v4370
        %v4372 = vrot.slane %v4367, %v4371
        %4374 = vset.pattern.permute.xlu0 0
        %4375 = vperm.xlu0 %4374, %v4349
        %v4376 = vpop.permute.xlu0 %4375
        %v4378 = vlaneseq
        %v4379 = vshrl.u32 %v4378, 7
        %v4380 = vsub.s32 0, %v4379
        %v4381 = vrot.slane %v4376, %v4380
        %4383 = vset.pattern.permute.xlu0 0
        %4384 = vperm.xlu0 %4383, %v4350
        %v4385 = vpop.permute.xlu0 %4384
        %v4387 = vlaneseq
        %v4388 = vshrl.u32 %v4387, 7
        %v4389 = vsub.s32 0, %v4388
        %v4390 = vrot.slane %v4385, %v4389
        %4392 = vset.pattern.permute.xlu0 0
        %4393 = vperm.xlu0 %4392, %v4351
        %v4394 = vpop.permute.xlu0 %4393
        %v4396 = vlaneseq
        %v4397 = vshrl.u32 %v4396, 7
        %v4398 = vsub.s32 0, %v4397
        %v4399 = vrot.slane %v4394, %v4398
        %4401 = vset.pattern.permute.xlu0 0
        %4402 = vperm.xlu0 %4401, %v4352
        %v4403 = vpop.permute.xlu0 %4402
        %v4405 = vlaneseq
        %v4406 = vshrl.u32 %v4405, 7
        %v4407 = vsub.s32 0, %v4406
        %v4408 = vrot.slane %v4403, %v4407
        %4410 = vset.pattern.permute.xlu0 0
        %4411 = vperm.xlu0 %4410, %v4353
        %v4412 = vpop.permute.xlu0 %4411
        %v4414 = vlaneseq
        %v4415 = vshrl.u32 %v4414, 7
        %v4416 = vsub.s32 0, %v4415
        %v4417 = vrot.slane %v4412, %v4416
        %4419 = vset.pattern.permute.xlu0 0
        %4420 = vperm.xlu0 %4419, %v4354
        %v4421 = vpop.permute.xlu0 %4420
        %v4423 = vlaneseq
        %v4424 = vshrl.u32 %v4423, 7
        %v4425 = vsub.s32 0, %v4424
        %v4426 = vrot.slane %v4421, %v4425
        %4428 = vset.pattern.permute.xlu0 0
        %4429 = vperm.xlu0 %4428, %v4355
        %v4430 = vpop.permute.xlu0 %4429
        %v4432 = vlaneseq
        %v4433 = vshrl.u32 %v4432, 7
        %v4434 = vsub.s32 0, %v4433
        %v4435 = vrot.slane %v4430, %v4434
        %4437 = vset.pattern.permute.xlu0 0
        %4438 = vperm.xlu0 %4437, %v4356
        %v4439 = vpop.permute.xlu0 %4438
        %v4441 = vlaneseq
        %v4442 = vshrl.u32 %v4441, 7
        %v4443 = vsub.s32 0, %v4442
        %v4444 = vrot.slane %v4439, %v4443
        %4446 = vset.pattern.permute.xlu0 0
        %4447 = vperm.xlu0 %4446, %v4357
        %v4448 = vpop.permute.xlu0 %4447
        %v4450 = vlaneseq
        %v4451 = vshrl.u32 %v4450, 7
        %v4452 = vsub.s32 0, %v4451
        %v4453 = vrot.slane %v4448, %v4452
        %4455 = vset.pattern.permute.xlu0 0
        %4456 = vperm.xlu0 %4455, %v4358
        %v4457 = vpop.permute.xlu0 %4456
        %v4459 = vlaneseq
        %v4460 = vshrl.u32 %v4459, 7
        %v4461 = vsub.s32 0, %v4460
        %v4462 = vrot.slane %v4457, %v4461
        %4464 = vset.pattern.permute.xlu0 0
        %4465 = vperm.xlu0 %4464, %v4359
        %v4466 = vpop.permute.xlu0 %4465
        %v4468 = vlaneseq
        %v4469 = vshrl.u32 %v4468, 7
        %v4470 = vsub.s32 0, %v4469
        %v4471 = vrot.slane %v4466, %v4470
        %4473 = vset.pattern.permute.xlu0 0
        %4474 = vperm.xlu0 %4473, %v4360
        %v4475 = vpop.permute.xlu0 %4474
        %v4477 = vlaneseq
        %v4478 = vshrl.u32 %v4477, 7
        %v4479 = vsub.s32 0, %v4478
        %v4480 = vrot.slane %v4475, %v4479
        %4482 = vset.pattern.permute.xlu0 0
        %4483 = vperm.xlu0 %4482, %v4361
        %v4484 = vpop.permute.xlu0 %4483
        %v4486 = vlaneseq
        %v4487 = vshrl.u32 %v4486, 7
        %v4488 = vsub.s32 0, %v4487
        %v4489 = vrot.slane %v4484, %v4488
        %4491 = vset.pattern.permute.xlu0 0
        %4492 = vperm.xlu0 %4491, %v4362
        %v4493 = vpop.permute.xlu0 %4492
        %v4495 = vlaneseq
        %v4496 = vshrl.u32 %v4495, 7
        %v4497 = vsub.s32 0, %v4496
        %v4498 = vrot.slane %v4493, %v4497
        %4500 = vset.pattern.permute.xlu0 0
        %4501 = vperm.xlu0 %4500, %v4363
        %v4502 = vpop.permute.xlu0 %4501
        %v4504 = vlaneseq
        %v4505 = vshrl.u32 %v4504, 7
        %v4506 = vsub.s32 0, %v4505
        %v4507 = vrot.slane %v4502, %v4506
        %vm4508 = vcmask 523264
        %v4510 = vsel %vm4508, %v4332, 0
        %4512 = vmatprep.subr.bf16.mxu0 0
        %4513 = vmatpush1.bf16.msra.mxu0 %v4268
        %4514 = vmatprep.subr.bf16.mxu0 0
        %4515 = vmatpush1.bf16.msra.mxu0 %v4269
        %4516 = vmatprep.subr.bf16.mxu0 0
        %4517 = vmatpush1.bf16.msra.mxu0 %v4270
        %4518 = vmatprep.subr.bf16.mxu0 0
        %4519 = vmatpush1.bf16.msra.mxu0 %v4271
        %4520 = vmatprep.subr.bf16.mxu0 0
        %4521 = vmatpush1.bf16.msra.mxu0 0
        %4522 = vmatprep.subr.bf16.mxu0 0
        %4523 = vmatpush1.bf16.msra.mxu0 0
        %4524 = vmatprep.subr.bf16.mxu0 0
        %4525 = vmatpush1.bf16.msra.mxu0 0
        %4526 = vmatprep.subr.bf16.mxu0 0
        %4527 = vmatpush1.bf16.msra.mxu0 0
        %4528 = vmatprep.subr.bf16.mxu0 0
        %4529 = vmatpush1.bf16.msra.mxu0 0
        %4530 = vmatprep.subr.bf16.mxu0 0
        %4531 = vmatpush1.bf16.msra.mxu0 0
        %4532 = vmatprep.subr.bf16.mxu0 0
        %4533 = vmatpush1.bf16.msra.mxu0 0
        %4534 = vmatprep.subr.bf16.mxu0 0
        %4535 = vmatpush1.bf16.msra.mxu0 0
        %4536 = vmatprep.subr.bf16.mxu0 0
        %4537 = vmatpush1.bf16.msra.mxu0 0
        %4538 = vmatprep.subr.bf16.mxu0 0
        %4539 = vmatpush1.bf16.msra.mxu0 0
        %4540 = vmatprep.subr.bf16.mxu0 0
        %4541 = vmatpush1.bf16.msra.mxu0 0
        %4542 = vmatprep.subr.bf16.mxu0 0
        %4543 = vmatpush1.bf16.msra.mxu0 0
        %4544 = vmatprep.mubr.bf16.mxu0 0
        %4545 = vmatmul.mubr.bf16.gmra.mrb[0].mxu0 %v4510
        %v4546 = vpop.f32.mrb[0].mxu0
        %v4547 = vadd.f32 %v4372, %v4546
        %v4548 = vpop.f32.mrb[0].mxu0
        %v4549 = vpop.f32.mrb[0].mxu0
        %v4550 = vpop.f32.mrb[0].mxu0
        %4551 = vdwg.mxu0
        %v4553 = vsel %vm4508, %v4333, 0
        %4555 = vmatprep.subr.bf16.mxu0 0
        %4556 = vmatpush1.bf16.msra.mxu0 %v4272
        %4557 = vmatprep.subr.bf16.mxu0 0
        %4558 = vmatpush1.bf16.msra.mxu0 %v4273
        %4559 = vmatprep.subr.bf16.mxu0 0
        %4560 = vmatpush1.bf16.msra.mxu0 %v4274
        %4561 = vmatprep.subr.bf16.mxu0 0
        %4562 = vmatpush1.bf16.msra.mxu0 %v4275
        %4563 = vmatprep.subr.bf16.mxu0 0
        %4564 = vmatpush1.bf16.msra.mxu0 0
        %4565 = vmatprep.subr.bf16.mxu0 0
        %4566 = vmatpush1.bf16.msra.mxu0 0
        %4567 = vmatprep.subr.bf16.mxu0 0
        %4568 = vmatpush1.bf16.msra.mxu0 0
        %4569 = vmatprep.subr.bf16.mxu0 0
        %4570 = vmatpush1.bf16.msra.mxu0 0
        %4571 = vmatprep.subr.bf16.mxu0 0
        %4572 = vmatpush1.bf16.msra.mxu0 0
        %4573 = vmatprep.subr.bf16.mxu0 0
        %4574 = vmatpush1.bf16.msra.mxu0 0
        %4575 = vmatprep.subr.bf16.mxu0 0
        %4576 = vmatpush1.bf16.msra.mxu0 0
        %4577 = vmatprep.subr.bf16.mxu0 0
        %4578 = vmatpush1.bf16.msra.mxu0 0
        %4579 = vmatprep.subr.bf16.mxu0 0
        %4580 = vmatpush1.bf16.msra.mxu0 0
        %4581 = vmatprep.subr.bf16.mxu0 0
        %4582 = vmatpush1.bf16.msra.mxu0 0
        %4583 = vmatprep.subr.bf16.mxu0 0
        %4584 = vmatpush1.bf16.msra.mxu0 0
        %4585 = vmatprep.subr.bf16.mxu0 0
        %4586 = vmatpush1.bf16.msra.mxu0 0
        %4587 = vmatprep.mubr.bf16.mxu0 0
        %4588 = vmatmul.mubr.bf16.gmra.mrb[0].mxu0 %v4553
        %v4589 = vpop.f32.mrb[0].mxu0
        %v4590 = vadd.f32 %v4381, %v4589
        %v4591 = vpop.f32.mrb[0].mxu0
        %v4592 = vpop.f32.mrb[0].mxu0
        %v4593 = vpop.f32.mrb[0].mxu0
        %4594 = vdwg.mxu0
        %v4596 = vsel %vm4508, %v4334, 0
        %4598 = vmatprep.subr.bf16.mxu0 0
        %4599 = vmatpush1.bf16.msra.mxu0 %v4276
        %4600 = vmatprep.subr.bf16.mxu0 0
        %4601 = vmatpush1.bf16.msra.mxu0 %v4277
        %4602 = vmatprep.subr.bf16.mxu0 0
        %4603 = vmatpush1.bf16.msra.mxu0 %v4278
        %4604 = vmatprep.subr.bf16.mxu0 0
        %4605 = vmatpush1.bf16.msra.mxu0 %v4279
        %4606 = vmatprep.subr.bf16.mxu0 0
        %4607 = vmatpush1.bf16.msra.mxu0 0
        %4608 = vmatprep.subr.bf16.mxu0 0
        %4609 = vmatpush1.bf16.msra.mxu0 0
        %4610 = vmatprep.subr.bf16.mxu0 0
        %4611 = vmatpush1.bf16.msra.mxu0 0
        %4612 = vmatprep.subr.bf16.mxu0 0
        %4613 = vmatpush1.bf16.msra.mxu0 0
        %4614 = vmatprep.subr.bf16.mxu0 0
        %4615 = vmatpush1.bf16.msra.mxu0 0
        %4616 = vmatprep.subr.bf16.mxu0 0
        %4617 = vmatpush1.bf16.msra.mxu0 0
        %4618 = vmatprep.subr.bf16.mxu0 0
        %4619 = vmatpush1.bf16.msra.mxu0 0
        %4620 = vmatprep.subr.bf16.mxu0 0
        %4621 = vmatpush1.bf16.msra.mxu0 0
        %4622 = vmatprep.subr.bf16.mxu0 0
        %4623 = vmatpush1.bf16.msra.mxu0 0
        %4624 = vmatprep.subr.bf16.mxu0 0
        %4625 = vmatpush1.bf16.msra.mxu0 0
        %4626 = vmatprep.subr.bf16.mxu0 0
        %4627 = vmatpush1.bf16.msra.mxu0 0
        %4628 = vmatprep.subr.bf16.mxu0 0
        %4629 = vmatpush1.bf16.msra.mxu0 0
        %4630 = vmatprep.mubr.bf16.mxu0 0
        %4631 = vmatmul.mubr.bf16.gmra.mrb[0].mxu0 %v4596
        %v4632 = vpop.f32.mrb[0].mxu0
        %v4633 = vadd.f32 %v4390, %v4632
        %v4634 = vpop.f32.mrb[0].mxu0
        %v4635 = vpop.f32.mrb[0].mxu0
        %v4636 = vpop.f32.mrb[0].mxu0
        %4637 = vdwg.mxu0
        %v4639 = vsel %vm4508, %v4335, 0
        %4641 = vmatprep.subr.bf16.mxu0 0
        %4642 = vmatpush1.bf16.msra.mxu0 %v4280
        %4643 = vmatprep.subr.bf16.mxu0 0
        %4644 = vmatpush1.bf16.msra.mxu0 %v4281
        %4645 = vmatprep.subr.bf16.mxu0 0
        %4646 = vmatpush1.bf16.msra.mxu0 %v4282
        %4647 = vmatprep.subr.bf16.mxu0 0
        %4648 = vmatpush1.bf16.msra.mxu0 %v4283
        %4649 = vmatprep.subr.bf16.mxu0 0
        %4650 = vmatpush1.bf16.msra.mxu0 0
        %4651 = vmatprep.subr.bf16.mxu0 0
        %4652 = vmatpush1.bf16.msra.mxu0 0
        %4653 = vmatprep.subr.bf16.mxu0 0
        %4654 = vmatpush1.bf16.msra.mxu0 0
        %4655 = vmatprep.subr.bf16.mxu0 0
        %4656 = vmatpush1.bf16.msra.mxu0 0
        %4657 = vmatprep.subr.bf16.mxu0 0
        %4658 = vmatpush1.bf16.msra.mxu0 0
        %4659 = vmatprep.subr.bf16.mxu0 0
        %4660 = vmatpush1.bf16.msra.mxu0 0
        %4661 = vmatprep.subr.bf16.mxu0 0
        %4662 = vmatpush1.bf16.msra.mxu0 0
        %4663 = vmatprep.subr.bf16.mxu0 0
        %4664 = vmatpush1.bf16.msra.mxu0 0
        %4665 = vmatprep.subr.bf16.mxu0 0
        %4666 = vmatpush1.bf16.msra.mxu0 0
        %4667 = vmatprep.subr.bf16.mxu0 0
        %4668 = vmatpush1.bf16.msra.mxu0 0
        %4669 = vmatprep.subr.bf16.mxu0 0
        %4670 = vmatpush1.bf16.msra.mxu0 0
        %4671 = vmatprep.subr.bf16.mxu0 0
        %4672 = vmatpush1.bf16.msra.mxu0 0
        %4673 = vmatprep.mubr.bf16.mxu0 0
        %4674 = vmatmul.mubr.bf16.gmra.mrb[0].mxu0 %v4639
        %v4675 = vpop.f32.mrb[0].mxu0
        %v4676 = vadd.f32 %v4399, %v4675
        %v4677 = vpop.f32.mrb[0].mxu0
        %v4678 = vpop.f32.mrb[0].mxu0
        %v4679 = vpop.f32.mrb[0].mxu0
        %4680 = vdwg.mxu0
        %v4682 = vsel %vm4508, %v4336, 0
        %4684 = vmatprep.subr.bf16.mxu0 0
        %4685 = vmatpush1.bf16.msra.mxu0 %v4284
        %4686 = vmatprep.subr.bf16.mxu0 0
        %4687 = vmatpush1.bf16.msra.mxu0 %v4285
        %4688 = vmatprep.subr.bf16.mxu0 0
        %4689 = vmatpush1.bf16.msra.mxu0 %v4286
        %4690 = vmatprep.subr.bf16.mxu0 0
        %4691 = vmatpush1.bf16.msra.mxu0 %v4287
        %4692 = vmatprep.subr.bf16.mxu0 0
        %4693 = vmatpush1.bf16.msra.mxu0 0
        %4694 = vmatprep.subr.bf16.mxu0 0
        %4695 = vmatpush1.bf16.msra.mxu0 0
        %4696 = vmatprep.subr.bf16.mxu0 0
        %4697 = vmatpush1.bf16.msra.mxu0 0
        %4698 = vmatprep.subr.bf16.mxu0 0
        %4699 = vmatpush1.bf16.msra.mxu0 0
        %4700 = vmatprep.subr.bf16.mxu0 0
        %4701 = vmatpush1.bf16.msra.mxu0 0
        %4702 = vmatprep.subr.bf16.mxu0 0
        %4703 = vmatpush1.bf16.msra.mxu0 0
        %4704 = vmatprep.subr.bf16.mxu0 0
        %4705 = vmatpush1.bf16.msra.mxu0 0
        %4706 = vmatprep.subr.bf16.mxu0 0
        %4707 = vmatpush1.bf16.msra.mxu0 0
        %4708 = vmatprep.subr.bf16.mxu0 0
        %4709 = vmatpush1.bf16.msra.mxu0 0
        %4710 = vmatprep.subr.bf16.mxu0 0
        %4711 = vmatpush1.bf16.msra.mxu0 0
        %4712 = vmatprep.subr.bf16.mxu0 0
        %4713 = vmatpush1.bf16.msra.mxu0 0
        %4714 = vmatprep.subr.bf16.mxu0 0
        %4715 = vmatpush1.bf16.msra.mxu0 0
        %4716 = vmatprep.mubr.bf16.mxu0 0
        %4717 = vmatmul.mubr.bf16.gmra.mrb[0].mxu0 %v4682
        %v4718 = vpop.f32.mrb[0].mxu0
        %v4719 = vadd.f32 %v4408, %v4718
        %v4720 = vpop.f32.mrb[0].mxu0
        %v4721 = vpop.f32.mrb[0].mxu0
        %v4722 = vpop.f32.mrb[0].mxu0
        %4723 = vdwg.mxu0
        %v4725 = vsel %vm4508, %v4337, 0
        %4727 = vmatprep.subr.bf16.mxu0 0
        %4728 = vmatpush1.bf16.msra.mxu0 %v4288
        %4729 = vmatprep.subr.bf16.mxu0 0
        %4730 = vmatpush1.bf16.msra.mxu0 %v4289
        %4731 = vmatprep.subr.bf16.mxu0 0
        %4732 = vmatpush1.bf16.msra.mxu0 %v4290
        %4733 = vmatprep.subr.bf16.mxu0 0
        %4734 = vmatpush1.bf16.msra.mxu0 %v4291
        %4735 = vmatprep.subr.bf16.mxu0 0
        %4736 = vmatpush1.bf16.msra.mxu0 0
        %4737 = vmatprep.subr.bf16.mxu0 0
        %4738 = vmatpush1.bf16.msra.mxu0 0
        %4739 = vmatprep.subr.bf16.mxu0 0
        %4740 = vmatpush1.bf16.msra.mxu0 0
        %4741 = vmatprep.subr.bf16.mxu0 0
        %4742 = vmatpush1.bf16.msra.mxu0 0
        %4743 = vmatprep.subr.bf16.mxu0 0
        %4744 = vmatpush1.bf16.msra.mxu0 0
        %4745 = vmatprep.subr.bf16.mxu0 0
        %4746 = vmatpush1.bf16.msra.mxu0 0
        %4747 = vmatprep.subr.bf16.mxu0 0
        %4748 = vmatpush1.bf16.msra.mxu0 0
        %4749 = vmatprep.subr.bf16.mxu0 0
        %4750 = vmatpush1.bf16.msra.mxu0 0
        %4751 = vmatprep.subr.bf16.mxu0 0
        %4752 = vmatpush1.bf16.msra.mxu0 0
        %4753 = vmatprep.subr.bf16.mxu0 0
        %4754 = vmatpush1.bf16.msra.mxu0 0
        %4755 = vmatprep.subr.bf16.mxu0 0
        %4756 = vmatpush1.bf16.msra.mxu0 0
        %4757 = vmatprep.subr.bf16.mxu0 0
        %4758 = vmatpush1.bf16.msra.mxu0 0
        %4759 = vmatprep.mubr.bf16.mxu0 0
        %4760 = vmatmul.mubr.bf16.gmra.mrb[0].mxu0 %v4725
        %v4761 = vpop.f32.mrb[0].mxu0
        %v4762 = vadd.f32 %v4417, %v4761
        %v4763 = vpop.f32.mrb[0].mxu0
        %v4764 = vpop.f32.mrb[0].mxu0
        %v4765 = vpop.f32.mrb[0].mxu0
        %4766 = vdwg.mxu0
        %v4768 = vsel %vm4508, %v4338, 0
        %4770 = vmatprep.subr.bf16.mxu0 0
        %4771 = vmatpush1.bf16.msra.mxu0 %v4292
        %4772 = vmatprep.subr.bf16.mxu0 0
        %4773 = vmatpush1.bf16.msra.mxu0 %v4293
        %4774 = vmatprep.subr.bf16.mxu0 0
        %4775 = vmatpush1.bf16.msra.mxu0 %v4294
        %4776 = vmatprep.subr.bf16.mxu0 0
        %4777 = vmatpush1.bf16.msra.mxu0 %v4295
        %4778 = vmatprep.subr.bf16.mxu0 0
        %4779 = vmatpush1.bf16.msra.mxu0 0
        %4780 = vmatprep.subr.bf16.mxu0 0
        %4781 = vmatpush1.bf16.msra.mxu0 0
        %4782 = vmatprep.subr.bf16.mxu0 0
        %4783 = vmatpush1.bf16.msra.mxu0 0
        %4784 = vmatprep.subr.bf16.mxu0 0
        %4785 = vmatpush1.bf16.msra.mxu0 0
        %4786 = vmatprep.subr.bf16.mxu0 0
        %4787 = vmatpush1.bf16.msra.mxu0 0
        %4788 = vmatprep.subr.bf16.mxu0 0
        %4789 = vmatpush1.bf16.msra.mxu0 0
        %4790 = vmatprep.subr.bf16.mxu0 0
        %4791 = vmatpush1.bf16.msra.mxu0 0
        %4792 = vmatprep.subr.bf16.mxu0 0
        %4793 = vmatpush1.bf16.msra.mxu0 0
        %4794 = vmatprep.subr.bf16.mxu0 0
        %4795 = vmatpush1.bf16.msra.mxu0 0
        %4796 = vmatprep.subr.bf16.mxu0 0
        %4797 = vmatpush1.bf16.msra.mxu0 0
        %4798 = vmatprep.subr.bf16.mxu0 0
        %4799 = vmatpush1.bf16.msra.mxu0 0
        %4800 = vmatprep.subr.bf16.mxu0 0
        %4801 = vmatpush1.bf16.msra.mxu0 0
        %4802 = vmatprep.mubr.bf16.mxu0 0
        %4803 = vmatmul.mubr.bf16.gmra.mrb[0].mxu0 %v4768
        %v4804 = vpop.f32.mrb[0].mxu0
        %v4805 = vadd.f32 %v4426, %v4804
        %v4806 = vpop.f32.mrb[0].mxu0
        %v4807 = vpop.f32.mrb[0].mxu0
        %v4808 = vpop.f32.mrb[0].mxu0
        %4809 = vdwg.mxu0
        %v4811 = vsel %vm4508, %v4339, 0
        %4813 = vmatprep.subr.bf16.mxu0 0
        %4814 = vmatpush1.bf16.msra.mxu0 %v4296
        %4815 = vmatprep.subr.bf16.mxu0 0
        %4816 = vmatpush1.bf16.msra.mxu0 %v4297
        %4817 = vmatprep.subr.bf16.mxu0 0
        %4818 = vmatpush1.bf16.msra.mxu0 %v4298
        %4819 = vmatprep.subr.bf16.mxu0 0
        %4820 = vmatpush1.bf16.msra.mxu0 %v4299
        %4821 = vmatprep.subr.bf16.mxu0 0
        %4822 = vmatpush1.bf16.msra.mxu0 0
        %4823 = vmatprep.subr.bf16.mxu0 0
        %4824 = vmatpush1.bf16.msra.mxu0 0
        %4825 = vmatprep.subr.bf16.mxu0 0
        %4826 = vmatpush1.bf16.msra.mxu0 0
        %4827 = vmatprep.subr.bf16.mxu0 0
        %4828 = vmatpush1.bf16.msra.mxu0 0
        %4829 = vmatprep.subr.bf16.mxu0 0
        %4830 = vmatpush1.bf16.msra.mxu0 0
        %4831 = vmatprep.subr.bf16.mxu0 0
        %4832 = vmatpush1.bf16.msra.mxu0 0
        %4833 = vmatprep.subr.bf16.mxu0 0
        %4834 = vmatpush1.bf16.msra.mxu0 0
        %4835 = vmatprep.subr.bf16.mxu0 0
        %4836 = vmatpush1.bf16.msra.mxu0 0
        %4837 = vmatprep.subr.bf16.mxu0 0
        %4838 = vmatpush1.bf16.msra.mxu0 0
        %4839 = vmatprep.subr.bf16.mxu0 0
        %4840 = vmatpush1.bf16.msra.mxu0 0
        %4841 = vmatprep.subr.bf16.mxu0 0
        %4842 = vmatpush1.bf16.msra.mxu0 0
        %4843 = vmatprep.subr.bf16.mxu0 0
        %4844 = vmatpush1.bf16.msra.mxu0 0
        %4845 = vmatprep.mubr.bf16.mxu0 0
        %4846 = vmatmul.mubr.bf16.gmra.mrb[0].mxu0 %v4811
        %v4847 = vpop.f32.mrb[0].mxu0
        %v4848 = vadd.f32 %v4435, %v4847
        %v4849 = vpop.f32.mrb[0].mxu0
        %v4850 = vpop.f32.mrb[0].mxu0
        %v4851 = vpop.f32.mrb[0].mxu0
        %4852 = vdwg.mxu0
        %v4854 = vsel %vm4508, %v4340, 0
        %4856 = vmatprep.subr.bf16.mxu0 0
        %4857 = vmatpush1.bf16.msra.mxu0 %v4300
        %4858 = vmatprep.subr.bf16.mxu0 0
        %4859 = vmatpush1.bf16.msra.mxu0 %v4301
        %4860 = vmatprep.subr.bf16.mxu0 0
        %4861 = vmatpush1.bf16.msra.mxu0 %v4302
        %4862 = vmatprep.subr.bf16.mxu0 0
        %4863 = vmatpush1.bf16.msra.mxu0 %v4303
        %4864 = vmatprep.subr.bf16.mxu0 0
        %4865 = vmatpush1.bf16.msra.mxu0 0
        %4866 = vmatprep.subr.bf16.mxu0 0
        %4867 = vmatpush1.bf16.msra.mxu0 0
        %4868 = vmatprep.subr.bf16.mxu0 0
        %4869 = vmatpush1.bf16.msra.mxu0 0
        %4870 = vmatprep.subr.bf16.mxu0 0
        %4871 = vmatpush1.bf16.msra.mxu0 0
        %4872 = vmatprep.subr.bf16.mxu0 0
        %4873 = vmatpush1.bf16.msra.mxu0 0
        %4874 = vmatprep.subr.bf16.mxu0 0
        %4875 = vmatpush1.bf16.msra.mxu0 0
        %4876 = vmatprep.subr.bf16.mxu0 0
        %4877 = vmatpush1.bf16.msra.mxu0 0
        %4878 = vmatprep.subr.bf16.mxu0 0
        %4879 = vmatpush1.bf16.msra.mxu0 0
        %4880 = vmatprep.subr.bf16.mxu0 0
        %4881 = vmatpush1.bf16.msra.mxu0 0
        %4882 = vmatprep.subr.bf16.mxu0 0
        %4883 = vmatpush1.bf16.msra.mxu0 0
        %4884 = vmatprep.subr.bf16.mxu0 0
        %4885 = vmatpush1.bf16.msra.mxu0 0
        %4886 = vmatprep.subr.bf16.mxu0 0
        %4887 = vmatpush1.bf16.msra.mxu0 0
        %4888 = vmatprep.mubr.bf16.mxu0 0
        %4889 = vmatmul.mubr.bf16.gmra.mrb[0].mxu0 %v4854
        %v4890 = vpop.f32.mrb[0].mxu0
        %v4891 = vadd.f32 %v4444, %v4890
        %v4892 = vpop.f32.mrb[0].mxu0
        %v4893 = vpop.f32.mrb[0].mxu0
        %v4894 = vpop.f32.mrb[0].mxu0
        %4895 = vdwg.mxu0
        %v4897 = vsel %vm4508, %v4341, 0
        %4899 = vmatprep.subr.bf16.mxu0 0
        %4900 = vmatpush1.bf16.msra.mxu0 %v4304
        %4901 = vmatprep.subr.bf16.mxu0 0
        %4902 = vmatpush1.bf16.msra.mxu0 %v4305
        %4903 = vmatprep.subr.bf16.mxu0 0
        %4904 = vmatpush1.bf16.msra.mxu0 %v4306
        %4905 = vmatprep.subr.bf16.mxu0 0
        %4906 = vmatpush1.bf16.msra.mxu0 %v4307
        %4907 = vmatprep.subr.bf16.mxu0 0
        %4908 = vmatpush1.bf16.msra.mxu0 0
        %4909 = vmatprep.subr.bf16.mxu0 0
        %4910 = vmatpush1.bf16.msra.mxu0 0
        %4911 = vmatprep.subr.bf16.mxu0 0
        %4912 = vmatpush1.bf16.msra.mxu0 0
        %4913 = vmatprep.subr.bf16.mxu0 0
        %4914 = vmatpush1.bf16.msra.mxu0 0
        %4915 = vmatprep.subr.bf16.mxu0 0
        %4916 = vmatpush1.bf16.msra.mxu0 0
        %4917 = vmatprep.subr.bf16.mxu0 0
        %4918 = vmatpush1.bf16.msra.mxu0 0
        %4919 = vmatprep.subr.bf16.mxu0 0
        %4920 = vmatpush1.bf16.msra.mxu0 0
        %4921 = vmatprep.subr.bf16.mxu0 0
        %4922 = vmatpush1.bf16.msra.mxu0 0
        %4923 = vmatprep.subr.bf16.mxu0 0
        %4924 = vmatpush1.bf16.msra.mxu0 0
        %4925 = vmatprep.subr.bf16.mxu0 0
        %4926 = vmatpush1.bf16.msra.mxu0 0
        %4927 = vmatprep.subr.bf16.mxu0 0
        %4928 = vmatpush1.bf16.msra.mxu0 0
        %4929 = vmatprep.subr.bf16.mxu0 0
        %4930 = vmatpush1.bf16.msra.mxu0 0
        %4931 = vmatprep.mubr.bf16.mxu0 0
        %4932 = vmatmul.mubr.bf16.gmra.mrb[0].mxu0 %v4897
        %v4933 = vpop.f32.mrb[0].mxu0
        %v4934 = vadd.f32 %v4453, %v4933
        %v4935 = vpop.f32.mrb[0].mxu0
        %v4936 = vpop.f32.mrb[0].mxu0
        %v4937 = vpop.f32.mrb[0].mxu0
        %4938 = vdwg.mxu0
        %v4940 = vsel %vm4508, %v4342, 0
        %4942 = vmatprep.subr.bf16.mxu0 0
        %4943 = vmatpush1.bf16.msra.mxu0 %v4308
        %4944 = vmatprep.subr.bf16.mxu0 0
        %4945 = vmatpush1.bf16.msra.mxu0 %v4309
        %4946 = vmatprep.subr.bf16.mxu0 0
        %4947 = vmatpush1.bf16.msra.mxu0 %v4310
        %4948 = vmatprep.subr.bf16.mxu0 0
        %4949 = vmatpush1.bf16.msra.mxu0 %v4311
        %4950 = vmatprep.subr.bf16.mxu0 0
        %4951 = vmatpush1.bf16.msra.mxu0 0
        %4952 = vmatprep.subr.bf16.mxu0 0
        %4953 = vmatpush1.bf16.msra.mxu0 0
        %4954 = vmatprep.subr.bf16.mxu0 0
        %4955 = vmatpush1.bf16.msra.mxu0 0
        %4956 = vmatprep.subr.bf16.mxu0 0
        %4957 = vmatpush1.bf16.msra.mxu0 0
        %4958 = vmatprep.subr.bf16.mxu0 0
        %4959 = vmatpush1.bf16.msra.mxu0 0
        %4960 = vmatprep.subr.bf16.mxu0 0
        %4961 = vmatpush1.bf16.msra.mxu0 0
        %4962 = vmatprep.subr.bf16.mxu0 0
        %4963 = vmatpush1.bf16.msra.mxu0 0
        %4964 = vmatprep.subr.bf16.mxu0 0
        %4965 = vmatpush1.bf16.msra.mxu0 0
        %4966 = vmatprep.subr.bf16.mxu0 0
        %4967 = vmatpush1.bf16.msra.mxu0 0
        %4968 = vmatprep.subr.bf16.mxu0 0
        %4969 = vmatpush1.bf16.msra.mxu0 0
        %4970 = vmatprep.subr.bf16.mxu0 0
        %4971 = vmatpush1.bf16.msra.mxu0 0
        %4972 = vmatprep.subr.bf16.mxu0 0
        %4973 = vmatpush1.bf16.msra.mxu0 0
        %4974 = vmatprep.mubr.bf16.mxu0 0
        %4975 = vmatmul.mubr.bf16.gmra.mrb[0].mxu0 %v4940
        %v4976 = vpop.f32.mrb[0].mxu0
        %v4977 = vadd.f32 %v4462, %v4976
        %v4978 = vpop.f32.mrb[0].mxu0
        %v4979 = vpop.f32.mrb[0].mxu0
        %v4980 = vpop.f32.mrb[0].mxu0
        %4981 = vdwg.mxu0
        %v4983 = vsel %vm4508, %v4343, 0
        %4985 = vmatprep.subr.bf16.mxu0 0
        %4986 = vmatpush1.bf16.msra.mxu0 %v4312
        %4987 = vmatprep.subr.bf16.mxu0 0
        %4988 = vmatpush1.bf16.msra.mxu0 %v4313
        %4989 = vmatprep.subr.bf16.mxu0 0
        %4990 = vmatpush1.bf16.msra.mxu0 %v4314
        %4991 = vmatprep.subr.bf16.mxu0 0
        %4992 = vmatpush1.bf16.msra.mxu0 %v4315
        %4993 = vmatprep.subr.bf16.mxu0 0
        %4994 = vmatpush1.bf16.msra.mxu0 0
        %4995 = vmatprep.subr.bf16.mxu0 0
        %4996 = vmatpush1.bf16.msra.mxu0 0
        %4997 = vmatprep.subr.bf16.mxu0 0
        %4998 = vmatpush1.bf16.msra.mxu0 0
        %4999 = vmatprep.subr.bf16.mxu0 0
        %5000 = vmatpush1.bf16.msra.mxu0 0
        %5001 = vmatprep.subr.bf16.mxu0 0
        %5002 = vmatpush1.bf16.msra.mxu0 0
        %5003 = vmatprep.subr.bf16.mxu0 0
        %5004 = vmatpush1.bf16.msra.mxu0 0
        %5005 = vmatprep.subr.bf16.mxu0 0
        %5006 = vmatpush1.bf16.msra.mxu0 0
        %5007 = vmatprep.subr.bf16.mxu0 0
        %5008 = vmatpush1.bf16.msra.mxu0 0
        %5009 = vmatprep.subr.bf16.mxu0 0
        %5010 = vmatpush1.bf16.msra.mxu0 0
        %5011 = vmatprep.subr.bf16.mxu0 0
        %5012 = vmatpush1.bf16.msra.mxu0 0
        %5013 = vmatprep.subr.bf16.mxu0 0
        %5014 = vmatpush1.bf16.msra.mxu0 0
        %5015 = vmatprep.subr.bf16.mxu0 0
        %5016 = vmatpush1.bf16.msra.mxu0 0
        %5017 = vmatprep.mubr.bf16.mxu0 0
        %5018 = vmatmul.mubr.bf16.gmra.mrb[0].mxu0 %v4983
        %v5019 = vpop.f32.mrb[0].mxu0
        %v5020 = vadd.f32 %v4471, %v5019
        %v5021 = vpop.f32.mrb[0].mxu0
        %v5022 = vpop.f32.mrb[0].mxu0
        %v5023 = vpop.f32.mrb[0].mxu0
        %5024 = vdwg.mxu0
        %v5026 = vsel %vm4508, %v4344, 0
        %5028 = vmatprep.subr.bf16.mxu0 0
        %5029 = vmatpush1.bf16.msra.mxu0 %v4316
        %5030 = vmatprep.subr.bf16.mxu0 0
        %5031 = vmatpush1.bf16.msra.mxu0 %v4317
        %5032 = vmatprep.subr.bf16.mxu0 0
        %5033 = vmatpush1.bf16.msra.mxu0 %v4318
        %5034 = vmatprep.subr.bf16.mxu0 0
        %5035 = vmatpush1.bf16.msra.mxu0 %v4319
        %5036 = vmatprep.subr.bf16.mxu0 0
        %5037 = vmatpush1.bf16.msra.mxu0 0
        %5038 = vmatprep.subr.bf16.mxu0 0
        %5039 = vmatpush1.bf16.msra.mxu0 0
        %5040 = vmatprep.subr.bf16.mxu0 0
        %5041 = vmatpush1.bf16.msra.mxu0 0
        %5042 = vmatprep.subr.bf16.mxu0 0
        %5043 = vmatpush1.bf16.msra.mxu0 0
        %5044 = vmatprep.subr.bf16.mxu0 0
        %5045 = vmatpush1.bf16.msra.mxu0 0
        %5046 = vmatprep.subr.bf16.mxu0 0
        %5047 = vmatpush1.bf16.msra.mxu0 0
        %5048 = vmatprep.subr.bf16.mxu0 0
        %5049 = vmatpush1.bf16.msra.mxu0 0
        %5050 = vmatprep.subr.bf16.mxu0 0
        %5051 = vmatpush1.bf16.msra.mxu0 0
        %5052 = vmatprep.subr.bf16.mxu0 0
        %5053 = vmatpush1.bf16.msra.mxu0 0
        %5054 = vmatprep.subr.bf16.mxu0 0
        %5055 = vmatpush1.bf16.msra.mxu0 0
        %5056 = vmatprep.subr.bf16.mxu0 0
        %5057 = vmatpush1.bf16.msra.mxu0 0
        %5058 = vmatprep.subr.bf16.mxu0 0
        %5059 = vmatpush1.bf16.msra.mxu0 0
        %5060 = vmatprep.mubr.bf16.mxu0 0
        %5061 = vmatmul.mubr.bf16.gmra.mrb[0].mxu0 %v5026
        %v5062 = vpop.f32.mrb[0].mxu0
        %v5063 = vadd.f32 %v4480, %v5062
        %v5064 = vpop.f32.mrb[0].mxu0
        %v5065 = vpop.f32.mrb[0].mxu0
        %v5066 = vpop.f32.mrb[0].mxu0
        %5067 = vdwg.mxu0
        %v5069 = vsel %vm4508, %v4345, 0
        %5071 = vmatprep.subr.bf16.mxu0 0
        %5072 = vmatpush1.bf16.msra.mxu0 %v4320
        %5073 = vmatprep.subr.bf16.mxu0 0
        %5074 = vmatpush1.bf16.msra.mxu0 %v4321
        %5075 = vmatprep.subr.bf16.mxu0 0
        %5076 = vmatpush1.bf16.msra.mxu0 %v4322
        %5077 = vmatprep.subr.bf16.mxu0 0
        %5078 = vmatpush1.bf16.msra.mxu0 %v4323
        %5079 = vmatprep.subr.bf16.mxu0 0
        %5080 = vmatpush1.bf16.msra.mxu0 0
        %5081 = vmatprep.subr.bf16.mxu0 0
        %5082 = vmatpush1.bf16.msra.mxu0 0
        %5083 = vmatprep.subr.bf16.mxu0 0
        %5084 = vmatpush1.bf16.msra.mxu0 0
        %5085 = vmatprep.subr.bf16.mxu0 0
        %5086 = vmatpush1.bf16.msra.mxu0 0
        %5087 = vmatprep.subr.bf16.mxu0 0
        %5088 = vmatpush1.bf16.msra.mxu0 0
        %5089 = vmatprep.subr.bf16.mxu0 0
        %5090 = vmatpush1.bf16.msra.mxu0 0
        %5091 = vmatprep.subr.bf16.mxu0 0
        %5092 = vmatpush1.bf16.msra.mxu0 0
        %5093 = vmatprep.subr.bf16.mxu0 0
        %5094 = vmatpush1.bf16.msra.mxu0 0
        %5095 = vmatprep.subr.bf16.mxu0 0
        %5096 = vmatpush1.bf16.msra.mxu0 0
        %5097 = vmatprep.subr.bf16.mxu0 0
        %5098 = vmatpush1.bf16.msra.mxu0 0
        %5099 = vmatprep.subr.bf16.mxu0 0
        %5100 = vmatpush1.bf16.msra.mxu0 0
        %5101 = vmatprep.subr.bf16.mxu0 0
        %5102 = vmatpush1.bf16.msra.mxu0 0
        %5103 = vmatprep.mubr.bf16.mxu0 0
        %5104 = vmatmul.mubr.bf16.gmra.mrb[0].mxu0 %v5069
        %v5105 = vpop.f32.mrb[0].mxu0
        %v5106 = vadd.f32 %v4489, %v5105
        %v5107 = vpop.f32.mrb[0].mxu0
        %v5108 = vpop.f32.mrb[0].mxu0
        %v5109 = vpop.f32.mrb[0].mxu0
        %5110 = vdwg.mxu0
        %v5112 = vsel %vm4508, %v4346, 0
        %5114 = vmatprep.subr.bf16.mxu0 0
        %5115 = vmatpush1.bf16.msra.mxu0 %v4324
        %5116 = vmatprep.subr.bf16.mxu0 0
        %5117 = vmatpush1.bf16.msra.mxu0 %v4325
        %5118 = vmatprep.subr.bf16.mxu0 0
        %5119 = vmatpush1.bf16.msra.mxu0 %v4326
        %5120 = vmatprep.subr.bf16.mxu0 0
        %5121 = vmatpush1.bf16.msra.mxu0 %v4327
        %5122 = vmatprep.subr.bf16.mxu0 0
        %5123 = vmatpush1.bf16.msra.mxu0 0
        %5124 = vmatprep.subr.bf16.mxu0 0
        %5125 = vmatpush1.bf16.msra.mxu0 0
        %5126 = vmatprep.subr.bf16.mxu0 0
        %5127 = vmatpush1.bf16.msra.mxu0 0
        %5128 = vmatprep.subr.bf16.mxu0 0
        %5129 = vmatpush1.bf16.msra.mxu0 0
        %5130 = vmatprep.subr.bf16.mxu0 0
        %5131 = vmatpush1.bf16.msra.mxu0 0
        %5132 = vmatprep.subr.bf16.mxu0 0
        %5133 = vmatpush1.bf16.msra.mxu0 0
        %5134 = vmatprep.subr.bf16.mxu0 0
        %5135 = vmatpush1.bf16.msra.mxu0 0
        %5136 = vmatprep.subr.bf16.mxu0 0
        %5137 = vmatpush1.bf16.msra.mxu0 0
        %5138 = vmatprep.subr.bf16.mxu0 0
        %5139 = vmatpush1.bf16.msra.mxu0 0
        %5140 = vmatprep.subr.bf16.mxu0 0
        %5141 = vmatpush1.bf16.msra.mxu0 0
        %5142 = vmatprep.subr.bf16.mxu0 0
        %5143 = vmatpush1.bf16.msra.mxu0 0
        %5144 = vmatprep.subr.bf16.mxu0 0
        %5145 = vmatpush1.bf16.msra.mxu0 0
        %5146 = vmatprep.mubr.bf16.mxu0 0
        %5147 = vmatmul.mubr.bf16.gmra.mrb[0].mxu0 %v5112
        %v5148 = vpop.f32.mrb[0].mxu0
        %v5149 = vadd.f32 %v4498, %v5148
        %v5150 = vpop.f32.mrb[0].mxu0
        %v5151 = vpop.f32.mrb[0].mxu0
        %v5152 = vpop.f32.mrb[0].mxu0
        %5153 = vdwg.mxu0
        %v5155 = vsel %vm4508, %v4347, 0
        %5157 = vmatprep.subr.bf16.mxu0 0
        %5158 = vmatpush1.bf16.msra.mxu0 %v4328
        %5159 = vmatprep.subr.bf16.mxu0 0
        %5160 = vmatpush1.bf16.msra.mxu0 %v4329
        %5161 = vmatprep.subr.bf16.mxu0 0
        %5162 = vmatpush1.bf16.msra.mxu0 %v4330
        %5163 = vmatprep.subr.bf16.mxu0 0
        %5164 = vmatpush1.bf16.msra.mxu0 %v4331
        %5165 = vmatprep.subr.bf16.mxu0 0
        %5166 = vmatpush1.bf16.msra.mxu0 0
        %5167 = vmatprep.subr.bf16.mxu0 0
        %5168 = vmatpush1.bf16.msra.mxu0 0
        %5169 = vmatprep.subr.bf16.mxu0 0
        %5170 = vmatpush1.bf16.msra.mxu0 0
        %5171 = vmatprep.subr.bf16.mxu0 0
        %5172 = vmatpush1.bf16.msra.mxu0 0
        %5173 = vmatprep.subr.bf16.mxu0 0
        %5174 = vmatpush1.bf16.msra.mxu0 0
        %5175 = vmatprep.subr.bf16.mxu0 0
        %5176 = vmatpush1.bf16.msra.mxu0 0
        %5177 = vmatprep.subr.bf16.mxu0 0
        %5178 = vmatpush1.bf16.msra.mxu0 0
        %5179 = vmatprep.subr.bf16.mxu0 0
        %5180 = vmatpush1.bf16.msra.mxu0 0
        %5181 = vmatprep.subr.bf16.mxu0 0
        %5182 = vmatpush1.bf16.msra.mxu0 0
        %5183 = vmatprep.subr.bf16.mxu0 0
        %5184 = vmatpush1.bf16.msra.mxu0 0
        %5185 = vmatprep.subr.bf16.mxu0 0
        %5186 = vmatpush1.bf16.msra.mxu0 0
        %5187 = vmatprep.subr.bf16.mxu0 0
        %5188 = vmatpush1.bf16.msra.mxu0 0
        %5189 = vmatprep.mubr.bf16.mxu0 0
        %5190 = vmatmul.mubr.bf16.gmra.mrb[0].mxu0 %v5155
        %v5191 = vpop.f32.mrb[0].mxu0
        %v5192 = vadd.f32 %v4507, %v5191
        %v5193 = vpop.f32.mrb[0].mxu0
        %v5194 = vpop.f32.mrb[0].mxu0
        %v5195 = vpop.f32.mrb[0].mxu0
        %5196 = vdwg.mxu0
        %5197 = vst [vmem:[%s356] sm:$0x1] %v4547
        %5198 = vst [vmem:[%s356 + $0x1] sm:$0x1] %v4590
        %5199 = vst [vmem:[%s356 + $0x2] sm:$0x1] %v4633
        %5200 = vst [vmem:[%s356 + $0x3] sm:$0x1] %v4676
        %5201 = vst [vmem:[%s356 + $0x4] sm:$0x1] %v4719
        %5202 = vst [vmem:[%s356 + $0x5] sm:$0x1] %v4762
        %5203 = vst [vmem:[%s356 + $0x6] sm:$0x1] %v4805
        %5204 = vst [vmem:[%s356 + $0x7] sm:$0x1] %v4848
        %5205 = vst [vmem:[%s356 + $0x8] sm:$0x1] %v4891
        %5206 = vst [vmem:[%s356 + $0x9] sm:$0x1] %v4934
        %5207 = vst [vmem:[%s356 + $0xa] sm:$0x1] %v4977
        %5208 = vst [vmem:[%s356 + $0xb] sm:$0x1] %v5020
        %5209 = vst [vmem:[%s356 + $0xc] sm:$0x1] %v5063
        %5210 = vst [vmem:[%s356 + $0xd] sm:$0x1] %v5106
        %5211 = vst [vmem:[%s356 + $0xe] sm:$0x1] %v5149
        %5212 = vst [vmem:[%s356 + $0xf] sm:$0x1] %v5192
        %s5213 = sand.u32 %s188, 1
        %s5214 = scalar_lea.sflag [#allocation4], %s5213
        %s5215 = sand.u32 %s188, 1
        %s5216 = smul.addr %s5215, 16
        %s5217 = scalar_lea.vmem [#allocation3], %s5216
        // Predicated region
        $region86: #{tpu_custom_call.1} parent=80 // pred_check
          %p5218 = pneg %p198
        $region87: #{tpu_custom_call.1} parent=80 // pred_check_branch
          %5220 = sbr.rel (%p5218) target = $region89
        $region88: #{tpu_custom_call.1} parent=80 // pred_region
          %s5221 = smul.u32 16, %s24
          %s5223 = ssub.s32 256, 256
          %5224 = vsyncadd %s5214, %s5223
          %s5225 = smul.addr %s5221, 2
          %s5226 = sadd.s32 %s25, %s5225
          %s5227 = smul.addr %s5226, 16
          %s5228 = scalar_lea.hbm %s6, %s5227
          %s5229 = sshll.u32 %s5217, 4
          %s5230 = int_to_ptr.vmem [resolvable:$true] %s5229
          %5235 = dma.vmem_to_hbm [thread:$0]  %s5230, 256, %s5228, %s5214, 16, 32, 1
        $region89: #{tpu_custom_call.1} parent=80 // pred_fallthru
          _
      $region81: #{tpu_custom_call.1} parent=5 // pred_fallthru
        _
      %p5236 = scmp.le.s32.totalorder 2, %s15
      // Predicated region
      $region90: #{tpu_custom_call.1} parent=5 // pred_check
        %p5237 = pneg %p5236
      $region91: #{tpu_custom_call.1} parent=5 // pred_check_branch
        %5239 = sbr.rel (%p5237) target = $region93
      $region92: #{tpu_custom_call.1} parent=5 // pred_region
        %s5240 = ssub.s32 %s15, 2
        // Predicated region
        $region94: #{tpu_custom_call.1} parent=92 // pred_check
          %p5241 = pneg %p204
        $region95: #{tpu_custom_call.1} parent=92 // pred_check_branch
          %5243 = sbr.rel (%p5241) target = $region97
        $region96: #{tpu_custom_call.1} parent=92 // pred_region
          %s5244 = sand.u32 %s189, 1
          %s5245 = scalar_lea.sflag [#allocation4], %s5244
          %s5246 = sand.u32 %s189, 1
          %s5247 = smul.addr %s5246, 16
          %s5248 = scalar_lea.vmem [#allocation3], %s5247
          %5249 = dma.done %s5245, 256
        $region97: #{tpu_custom_call.1} parent=92 // pred_fallthru
          _
      $region93: #{tpu_custom_call.1} parent=5 // pred_fallthru
        _
    $region6: #{tpu_custom_call.1} parent=1 // loop_footer
      %s19 = sadd.s32 1, %s15
    $region7: #{tpu_custom_call.1} parent=1 // loop_footer_branch
      %14 = sbr.rel target = $region3
    $region8: #{tpu_custom_call.1} parent=1 // loop_exit
      _
    %5250 = vsyncpa [#allocation4], 1
    %s5251 = scalar_lea.sflag [#allocation4], 1
    %5252 = vsyncpa %s5251, 1

</llo_original>
